<compile_context>
chip_gen: v6e
topology: v6e:2x2x1
jax: 0.10.0
libtpu: 0.0.40
codegen_flags: <defaults>
</compile_context>

<pallas_src>
import functools
import math

import jax
import jax.numpy as jnp
from jax import lax
from jax.experimental import pallas as pl
from jax.experimental.pallas import tpu as pltpu


# ------------------------- model hyperparameters ------------------------- #
ENC_IN = 4
DEC_IN = 4
C_OUT = 1
SEQ_LEN = 8          # encoder sequence length (small demo shape)
LABEL_LEN = 4
PRED_LEN = 1
D_MODEL = 32         # hidden size -> 4H = 128 = exactly one lane width
NUM_LAYERS = 2
T_DEC = LABEL_LEN + PRED_LEN

_SUBLANE = 8


def _round_up(x, m):
    return (x + m - 1) // m * m


# ------------------------------ fused kernel ------------------------------ #

def _lstm_model_kernel(x_enc_ref, x_dec_ref, *refs,
                       t_enc, t_dec, b_pad, hidden, num_layers, pred_len):
    """Entire LSTMModel forward in one Pallas invocation.

    Sequences are passed flattened as (T * B_pad, feat) so each per-step slice
    is a sublane-aligned (B_pad, feat) tile and the hoisted input projections
    are plain 2-D matmuls.

    refs layout: [enc layer0 (wih, whh, b), enc layer1 (...),
                  dec layer0 (...), dec layer1 (...),
                  fc_w, fc_b, out]
    """
    n_w = 3 * num_layers
    enc_w = [refs[3 * l: 3 * l + 3] for l in range(num_layers)]
    dec_w = [refs[n_w + 3 * l: n_w + 3 * l + 3] for l in range(num_layers)]
    fc_w_ref = refs[2 * n_w]
    fc_b_ref = refs[2 * n_w + 1]
    out_ref = refs[2 * n_w + 2]

    H = hidden
    B = b_pad

    # Lane mask selecting the "g" (cell-candidate) gate: tanh there, sigmoid
    # elsewhere.  Built once, reused by every unrolled step (full-vreg select).
    lane = lax.broadcasted_iota(jnp.int32, (B, 4 * H), 1)
    g_lane = (lane >= 2 * H) & (lane < 3 * H)

    def run_layer(x_flat, h0, c0, wih_ref, whh_ref, b_ref, T):
        wih = wih_ref[...]                                   # (I, 4H) bf16
        whh = whh_ref[...]                                   # (H, 4H) bf16
        b = b_ref[...]                                       # (1, 4H) f32
        # Hoisted input projection + bias for the whole sequence (off the
        # serial critical path): one (T*B, I) x (I, 4H) matmul.
        gx = jnp.dot(x_flat.astype(jnp.bfloat16), wih,
                     preferred_element_type=jnp.float32) + b  # (T*B, 4H) f32
        h, c = h0, c0
        ys = []
        for t in range(T):                                   # fully unrolled
            gates = gx[t * B:(t + 1) * B, :] + jnp.dot(
                h.astype(jnp.bfloat16), whh,
                preferred_element_type=jnp.float32)           # (B, 4H)
            # Full 128-lane activations, per-gate select via lane mask.
            act = jnp.where(g_lane, jnp.tanh(gates), jax.nn.sigmoid(gates))
            i_g = act[:, 0 * H:1 * H]
            f_g = act[:, 1 * H:2 * H]
            g_g = act[:, 2 * H:3 * H]
            o_g = act[:, 3 * H:4 * H]
            c = f_g * c + i_g * g_g
            h = o_g * jnp.tanh(c)
            ys.append(h)
        return ys, h, c

    zeros = jnp.zeros((B, H), jnp.float32)

    # ---- encoder: zero initial state; keep final (h, c) per layer ----------
    x = x_enc_ref[...]                                        # (T_enc*B, ENC_IN)
    enc_states = []
    for l in range(num_layers):
        ys, hT, cT = run_layer(x, zeros, zeros, *enc_w[l], t_enc)
        enc_states.append((hT, cT))
        x = jnp.concatenate(ys, axis=0)                       # (T_enc*B, H)
    # TODO(synk): nn.LSTM inter-layer dropout (p=0.2) omitted — eval-mode forward.

    # ---- decoder: initial state = encoder final state per layer ------------
    x = x_dec_ref[...]                                        # (T_dec*B, DEC_IN)
    last_h = None
    for l in range(num_layers):
        h0, c0 = enc_states[l]
        ys, _, _ = run_layer(x, h0, c0, *dec_w[l], t_dec)
        if l == num_layers - 1:
            last_h = ys[t_dec - pred_len:]                    # only what FC needs
        else:
            x = jnp.concatenate(ys, axis=0)

    # ---- FC only on the last pred_len steps ---------------------------------
    h_tail = last_h[0] if pred_len == 1 else jnp.concatenate(last_h, axis=0)
    out = jnp.dot(h_tail.astype(jnp.bfloat16), fc_w_ref[...],
                  preferred_element_type=jnp.float32) + fc_b_ref[...]
    out_ref[...] = out                                        # (pred_len*B, C)


# ------------------------------ wrapper ----------------------------------- #

_VMEM = pl.BlockSpec(memory_space=pltpu.MemorySpace.VMEM)


def _flatten_time_major(x_btf, b_pad):
    """(B, T, F) batch-first -> (T * B_pad, F), batch padded to a full sublane."""
    B, T, F = x_btf.shape
    x_tm = jnp.transpose(x_btf, (1, 0, 2))                    # (T, B, F)
    if b_pad > B:
        x_tm = jnp.pad(x_tm, ((0, 0), (0, b_pad - B), (0, 0)))
    return x_tm.reshape(T * b_pad, F)


@jax.jit
def lstm_model_forward(x_enc, x_mark_enc, x_dec, x_mark_dec, params):
    """Forward pass equivalent to LSTMModel.forward (eval mode).

    x_enc: (B, T_enc, enc_in), x_dec: (B, T_dec, dec_in) — batch-first, f32.
    x_mark_* are unused by the reference module (kept for API parity).
    Returns (B, PRED_LEN, C_OUT).
    """
    del x_mark_enc, x_mark_dec
    B, t_enc, _ = x_enc.shape
    t_dec = x_dec.shape[1]
    b_pad = _round_up(max(B, _SUBLANE), _SUBLANE)

    x_enc_f = _flatten_time_major(x_enc.astype(jnp.float32), b_pad)
    x_dec_f = _flatten_time_major(x_dec.astype(jnp.float32), b_pad)

    flat_w = []
    for name in ("enc", "dec"):
        for l in range(NUM_LAYERS):
            flat_w.extend(params[name][l])
    flat_w.append(params["fc_w"])
    flat_w.append(params["fc_b"])

    kernel = functools.partial(
        _lstm_model_kernel,
        t_enc=t_enc, t_dec=t_dec, b_pad=b_pad,
        hidden=D_MODEL, num_layers=NUM_LAYERS, pred_len=PRED_LEN)

    out_flat = pl.pallas_call(
        kernel,
        out_shape=jax.ShapeDtypeStruct((PRED_LEN * b_pad, C_OUT), jnp.float32),
        in_specs=[_VMEM] * (2 + len(flat_w)),
        out_specs=_VMEM,
    )(x_enc_f, x_dec_f, *flat_w)

    out = out_flat.reshape(PRED_LEN, b_pad, C_OUT)
    out = jnp.transpose(out, (1, 0, 2))                       # (b_pad, PRED_LEN, C)
    return out[:B]


# ------------------------------ params init -------------------------------- #

def init_params(key):
    """Deterministic init mimicking PyTorch's U(-1/sqrt(H), 1/sqrt(H)).

    Matmul weights are stored pre-transposed and in bf16 (MXU operands); the
    combined bias and FC bias stay f32 (elementwise path).
    """
    k = 1.0 / math.sqrt(D_MODEL)
    params = {"enc": [], "dec": []}

    def uni(key, shape):
        return jax.random.uniform(key, shape, jnp.float32, minval=-k, maxval=k)

    for name, in_size in (("enc", ENC_IN), ("dec", DEC_IN)):
        for l in range(NUM_LAYERS):
            layer_in = in_size if l == 0 else D_MODEL
            key, k1, k2, k3, k4 = jax.random.split(key, 5)
            w_ih = uni(k1, (4 * D_MODEL, layer_in))           # PyTorch layout
            w_hh = uni(k2, (4 * D_MODEL, D_MODEL))
            b_ih = uni(k3, (4 * D_MODEL,))
            b_hh = uni(k4, (4 * D_MODEL,))
            params[name].append((
                jnp.transpose(w_ih).astype(jnp.bfloat16),     # (I, 4H)
                jnp.transpose(w_hh).astype(jnp.bfloat16),     # (H, 4H)
                (b_ih + b_hh).reshape(1, 4 * D_MODEL),        # (1, 4H) f32
            ))
    key, k1, k2 = jax.random.split(key, 3)
    params["fc_w"] = jnp.transpose(uni(k1, (C_OUT, D_MODEL))).astype(jnp.bfloat16)
    params["fc_b"] = uni(k2, (C_OUT,)).reshape(1, C_OUT)
    return params


# --------------------------------- main ------------------------------------ #

if __name__ == "__main__":
    key = jax.random.PRNGKey(0)
    key, kp, k1, k2, k3, k4 = jax.random.split(key, 6)

    params = init_params(kp)

    B = 2
    x_enc = jax.random.normal(k1, (B, SEQ_LEN, ENC_IN), jnp.float32)
    x_mark_enc = jax.random.normal(k2, (B, SEQ_LEN, 4), jnp.float32)
    x_dec = jax.random.normal(k3, (B, T_DEC, DEC_IN), jnp.float32)
    x_mark_dec = jax.random.normal(k4, (B, T_DEC, 4), jnp.float32)

    out = lstm_model_forward(x_enc, x_mark_enc, x_dec, x_mark_dec, params)
    out = jax.block_until_ready(out)
    assert out.shape == (B, PRED_LEN, C_OUT), out.shape
    print("KERNEL_OK")
</pallas_src>

<mosaic_0001>
module attributes {stable_mosaic.version = 11 : i64} {
  func.func @_lstm_model_kernel(%arg0: memref<64x4xf32, #tpu.memory_space<vmem>>, %arg1: memref<40x4xf32, #tpu.memory_space<vmem>>, %arg2: memref<4x128xbf16, #tpu.memory_space<vmem>>, %arg3: memref<32x128xbf16, #tpu.memory_space<vmem>>, %arg4: memref<1x128xf32, #tpu.memory_space<vmem>>, %arg5: memref<32x128xbf16, #tpu.memory_space<vmem>>, %arg6: memref<32x128xbf16, #tpu.memory_space<vmem>>, %arg7: memref<1x128xf32, #tpu.memory_space<vmem>>, %arg8: memref<4x128xbf16, #tpu.memory_space<vmem>>, %arg9: memref<32x128xbf16, #tpu.memory_space<vmem>>, %arg10: memref<1x128xf32, #tpu.memory_space<vmem>>, %arg11: memref<32x128xbf16, #tpu.memory_space<vmem>>, %arg12: memref<32x128xbf16, #tpu.memory_space<vmem>>, %arg13: memref<1x128xf32, #tpu.memory_space<vmem>>, %arg14: memref<32x1xbf16, #tpu.memory_space<vmem>>, %arg15: memref<1x1xf32, #tpu.memory_space<vmem>>, %arg16: memref<8x1xf32, #tpu.memory_space<vmem>>) attributes {dimension_semantics = [], scalar_prefetch = 0 : i64, scratch_operands = 0 : i64, tpu.core_type = #tpu.core_type<tc>} {
    %0 = tpu.iota {dimensions = array<i32: 1>} : vector<8x128xi32>
    %c64_i32 = arith.constant 64 : i32
    %1 = vector.broadcast %c64_i32 : i32 to vector<8x128xi32>
    %2 = arith.cmpi sge, %0, %1 : vector<8x128xi32>
    %c96_i32 = arith.constant 96 : i32
    %3 = vector.broadcast %c96_i32 : i32 to vector<8x128xi32>
    %4 = arith.cmpi slt, %0, %3 : vector<8x128xi32>
    %5 = arith.andi %2, %4 : vector<8x128xi1>
    %cst = arith.constant 0.000000e+00 : f32
    %6 = vector.broadcast %cst : f32 to vector<8x32xf32>
    %c0 = arith.constant 0 : index
    %c0_0 = arith.constant 0 : index
    %7 = vector.load %arg0[%c0, %c0_0] : memref<64x4xf32, #tpu.memory_space<vmem>>, vector<64x4xf32>
    %c0_1 = arith.constant 0 : index
    %c0_2 = arith.constant 0 : index
    %8 = vector.load %arg2[%c0_1, %c0_2] : memref<4x128xbf16, #tpu.memory_space<vmem>>, vector<4x128xbf16>
    %c0_3 = arith.constant 0 : index
    %c0_4 = arith.constant 0 : index
    %9 = vector.load %arg3[%c0_3, %c0_4] : memref<32x128xbf16, #tpu.memory_space<vmem>>, vector<32x128xbf16>
    %c0_5 = arith.constant 0 : index
    %c0_6 = arith.constant 0 : index
    %10 = vector.load %arg4[%c0_5, %c0_6] : memref<1x128xf32, #tpu.memory_space<vmem>>, vector<1x128xf32>
    %11 = arith.truncf %7 : vector<64x4xf32> to vector<64x4xbf16>
    %cst_7 = arith.constant dense<0.000000e+00> : vector<64x128xf32>
    %12 = tpu.matmul %11, %8, %cst_7 {dimension_numbers = #tpu.dot_dimension_numbers<[1], [0], [0], [1], [0, 0, 1, 1], [], []>} : vector<64x4xbf16>, vector<4x128xbf16>, vector<64x128xf32> -> vector<64x128xf32>
    %13 = vector.broadcast %10 : vector<1x128xf32> to vector<64x128xf32>
    %14 = arith.addf %12, %13 : vector<64x128xf32>
    %15 = vector.extract_strided_slice %14 {offsets = [0, 0], sizes = [8, 128], strides = [1, 1]} : vector<64x128xf32> to vector<8x128xf32>
    %16 = arith.truncf %6 : vector<8x32xf32> to vector<8x32xbf16>
    %cst_8 = arith.constant dense<0.000000e+00> : vector<8x128xf32>
    %17 = tpu.matmul %16, %9, %cst_8 {dimension_numbers = #tpu.dot_dimension_numbers<[1], [0], [0], [1], [0, 0, 1, 1], [], []>} : vector<8x32xbf16>, vector<32x128xbf16>, vector<8x128xf32> -> vector<8x128xf32>
    %18 = arith.addf %15, %17 : vector<8x128xf32>
    %19 = math.tanh %18 : vector<8x128xf32>
    %20 = arith.negf %18 : vector<8x128xf32>
    %21 = math.exp %20 : vector<8x128xf32>
    %cst_9 = arith.constant 1.000000e+00 : f32
    %22 = vector.broadcast %cst_9 : f32 to vector<8x128xf32>
    %23 = arith.addf %22, %21 : vector<8x128xf32>
    %24 = arith.divf %22, %23 : vector<8x128xf32>
    %25 = arith.select %5, %19, %24 : vector<8x128xi1>, vector<8x128xf32>
    %26 = vector.extract_strided_slice %25 {offsets = [0, 0], sizes = [8, 32], strides = [1, 1]} : vector<8x128xf32> to vector<8x32xf32>
    %27 = vector.extract_strided_slice %25 {offsets = [0, 32], sizes = [8, 32], strides = [1, 1]} : vector<8x128xf32> to vector<8x32xf32>
    %28 = vector.extract_strided_slice %25 {offsets = [0, 64], sizes = [8, 32], strides = [1, 1]} : vector<8x128xf32> to vector<8x32xf32>
    %29 = vector.extract_strided_slice %25 {offsets = [0, 96], sizes = [8, 32], strides = [1, 1]} : vector<8x128xf32> to vector<8x32xf32>
    %30 = arith.mulf %27, %6 : vector<8x32xf32>
    %31 = arith.mulf %26, %28 : vector<8x32xf32>
    %32 = arith.addf %30, %31 : vector<8x32xf32>
    %33 = math.tanh %32 : vector<8x32xf32>
    %34 = arith.mulf %29, %33 : vector<8x32xf32>
    %35 = vector.extract_strided_slice %14 {offsets = [8, 0], sizes = [8, 128], strides = [1, 1]} : vector<64x128xf32> to vector<8x128xf32>
    %36 = arith.truncf %34 : vector<8x32xf32> to vector<8x32xbf16>
    %cst_10 = arith.constant dense<0.000000e+00> : vector<8x128xf32>
    %37 = tpu.matmul %36, %9, %cst_10 {dimension_numbers = #tpu.dot_dimension_numbers<[1], [0], [0], [1], [0, 0, 1, 1], [], []>} : vector<8x32xbf16>, vector<32x128xbf16>, vector<8x128xf32> -> vector<8x128xf32>
    %38 = arith.addf %35, %37 : vector<8x128xf32>
    %39 = math.tanh %38 : vector<8x128xf32>
    %40 = arith.negf %38 : vector<8x128xf32>
    %41 = math.exp %40 : vector<8x128xf32>
    %cst_11 = arith.constant 1.000000e+00 : f32
    %42 = vector.broadcast %cst_11 : f32 to vector<8x128xf32>
    %43 = arith.addf %42, %41 : vector<8x128xf32>
    %44 = arith.divf %42, %43 : vector<8x128xf32>
    %45 = arith.select %5, %39, %44 : vector<8x128xi1>, vector<8x128xf32>
    %46 = vector.extract_strided_slice %45 {offsets = [0, 0], sizes = [8, 32], strides = [1, 1]} : vector<8x128xf32> to vector<8x32xf32>
    %47 = vector.extract_strided_slice %45 {offsets = [0, 32], sizes = [8, 32], strides = [1, 1]} : vector<8x128xf32> to vector<8x32xf32>
    %48 = vector.extract_strided_slice %45 {offsets = [0, 64], sizes = [8, 32], strides = [1, 1]} : vector<8x128xf32> to vector<8x32xf32>
    %49 = vector.extract_strided_slice %45 {offsets = [0, 96], sizes = [8, 32], strides = [1, 1]} : vector<8x128xf32> to vector<8x32xf32>
    %50 = arith.mulf %47, %32 : vector<8x32xf32>
    %51 = arith.mulf %46, %48 : vector<8x32xf32>
    %52 = arith.addf %50, %51 : vector<8x32xf32>
    %53 = math.tanh %52 : vector<8x32xf32>
    %54 = arith.mulf %49, %53 : vector<8x32xf32>
    %55 = vector.extract_strided_slice %14 {offsets = [16, 0], sizes = [8, 128], strides = [1, 1]} : vector<64x128xf32> to vector<8x128xf32>
    %56 = arith.truncf %54 : vector<8x32xf32> to vector<8x32xbf16>
    %cst_12 = arith.constant dense<0.000000e+00> : vector<8x128xf32>
    %57 = tpu.matmul %56, %9, %cst_12 {dimension_numbers = #tpu.dot_dimension_numbers<[1], [0], [0], [1], [0, 0, 1, 1], [], []>} : vector<8x32xbf16>, vector<32x128xbf16>, vector<8x128xf32> -> vector<8x128xf32>
    %58 = arith.addf %55, %57 : vector<8x128xf32>
    %59 = math.tanh %58 : vector<8x128xf32>
    %60 = arith.negf %58 : vector<8x128xf32>
    %61 = math.exp %60 : vector<8x128xf32>
    %cst_13 = arith.constant 1.000000e+00 : f32
    %62 = vector.broadcast %cst_13 : f32 to vector<8x128xf32>
    %63 = arith.addf %62, %61 : vector<8x128xf32>
    %64 = arith.divf %62, %63 : vector<8x128xf32>
    %65 = arith.select %5, %59, %64 : vector<8x128xi1>, vector<8x128xf32>
    %66 = vector.extract_strided_slice %65 {offsets = [0, 0], sizes = [8, 32], strides = [1, 1]} : vector<8x128xf32> to vector<8x32xf32>
    %67 = vector.extract_strided_slice %65 {offsets = [0, 32], sizes = [8, 32], strides = [1, 1]} : vector<8x128xf32> to vector<8x32xf32>
    %68 = vector.extract_strided_slice %65 {offsets = [0, 64], sizes = [8, 32], strides = [1, 1]} : vector<8x128xf32> to vector<8x32xf32>
    %69 = vector.extract_strided_slice %65 {offsets = [0, 96], sizes = [8, 32], strides = [1, 1]} : vector<8x128xf32> to vector<8x32xf32>
    %70 = arith.mulf %67, %52 : vector<8x32xf32>
    %71 = arith.mulf %66, %68 : vector<8x32xf32>
    %72 = arith.addf %70, %71 : vector<8x32xf32>
    %73 = math.tanh %72 : vector<8x32xf32>
    %74 = arith.mulf %69, %73 : vector<8x32xf32>
    %75 = vector.extract_strided_slice %14 {offsets = [24, 0], sizes = [8, 128], strides = [1, 1]} : vector<64x128xf32> to vector<8x128xf32>
    %76 = arith.truncf %74 : vector<8x32xf32> to vector<8x32xbf16>
    %cst_14 = arith.constant dense<0.000000e+00> : vector<8x128xf32>
    %77 = tpu.matmul %76, %9, %cst_14 {dimension_numbers = #tpu.dot_dimension_numbers<[1], [0], [0], [1], [0, 0, 1, 1], [], []>} : vector<8x32xbf16>, vector<32x128xbf16>, vector<8x128xf32> -> vector<8x128xf32>
    %78 = arith.addf %75, %77 : vector<8x128xf32>
    %79 = math.tanh %78 : vector<8x128xf32>
    %80 = arith.negf %78 : vector<8x128xf32>
    %81 = math.exp %80 : vector<8x128xf32>
    %cst_15 = arith.constant 1.000000e+00 : f32
    %82 = vector.broadcast %cst_15 : f32 to vector<8x128xf32>
    %83 = arith.addf %82, %81 : vector<8x128xf32>
    %84 = arith.divf %82, %83 : vector<8x128xf32>
    %85 = arith.select %5, %79, %84 : vector<8x128xi1>, vector<8x128xf32>
    %86 = vector.extract_strided_slice %85 {offsets = [0, 0], sizes = [8, 32], strides = [1, 1]} : vector<8x128xf32> to vector<8x32xf32>
    %87 = vector.extract_strided_slice %85 {offsets = [0, 32], sizes = [8, 32], strides = [1, 1]} : vector<8x128xf32> to vector<8x32xf32>
    %88 = vector.extract_strided_slice %85 {offsets = [0, 64], sizes = [8, 32], strides = [1, 1]} : vector<8x128xf32> to vector<8x32xf32>
    %89 = vector.extract_strided_slice %85 {offsets = [0, 96], sizes = [8, 32], strides = [1, 1]} : vector<8x128xf32> to vector<8x32xf32>
    %90 = arith.mulf %87, %72 : vector<8x32xf32>
    %91 = arith.mulf %86, %88 : vector<8x32xf32>
    %92 = arith.addf %90, %91 : vector<8x32xf32>
    %93 = math.tanh %92 : vector<8x32xf32>
    %94 = arith.mulf %89, %93 : vector<8x32xf32>
    %95 = vector.extract_strided_slice %14 {offsets = [32, 0], sizes = [8, 128], strides = [1, 1]} : vector<64x128xf32> to vector<8x128xf32>
    %96 = arith.truncf %94 : vector<8x32xf32> to vector<8x32xbf16>
    %cst_16 = arith.constant dense<0.000000e+00> : vector<8x128xf32>
    %97 = tpu.matmul %96, %9, %cst_16 {dimension_numbers = #tpu.dot_dimension_numbers<[1], [0], [0], [1], [0, 0, 1, 1], [], []>} : vector<8x32xbf16>, vector<32x128xbf16>, vector<8x128xf32> -> vector<8x128xf32>
    %98 = arith.addf %95, %97 : vector<8x128xf32>
    %99 = math.tanh %98 : vector<8x128xf32>
    %100 = arith.negf %98 : vector<8x128xf32>
    %101 = math.exp %100 : vector<8x128xf32>
    %cst_17 = arith.constant 1.000000e+00 : f32
    %102 = vector.broadcast %cst_17 : f32 to vector<8x128xf32>
    %103 = arith.addf %102, %101 : vector<8x128xf32>
    %104 = arith.divf %102, %103 : vector<8x128xf32>
    %105 = arith.select %5, %99, %104 : vector<8x128xi1>, vector<8x128xf32>
    %106 = vector.extract_strided_slice %105 {offsets = [0, 0], sizes = [8, 32], strides = [1, 1]} : vector<8x128xf32> to vector<8x32xf32>
    %107 = vector.extract_strided_slice %105 {offsets = [0, 32], sizes = [8, 32], strides = [1, 1]} : vector<8x128xf32> to vector<8x32xf32>
    %108 = vector.extract_strided_slice %105 {offsets = [0, 64], sizes = [8, 32], strides = [1, 1]} : vector<8x128xf32> to vector<8x32xf32>
    %109 = vector.extract_strided_slice %105 {offsets = [0, 96], sizes = [8, 32], strides = [1, 1]} : vector<8x128xf32> to vector<8x32xf32>
    %110 = arith.mulf %107, %92 : vector<8x32xf32>
    %111 = arith.mulf %106, %108 : vector<8x32xf32>
    %112 = arith.addf %110, %111 : vector<8x32xf32>
    %113 = math.tanh %112 : vector<8x32xf32>
    %114 = arith.mulf %109, %113 : vector<8x32xf32>
    %115 = vector.extract_strided_slice %14 {offsets = [40, 0], sizes = [8, 128], strides = [1, 1]} : vector<64x128xf32> to vector<8x128xf32>
    %116 = arith.truncf %114 : vector<8x32xf32> to vector<8x32xbf16>
    %cst_18 = arith.constant dense<0.000000e+00> : vector<8x128xf32>
    %117 = tpu.matmul %116, %9, %cst_18 {dimension_numbers = #tpu.dot_dimension_numbers<[1], [0], [0], [1], [0, 0, 1, 1], [], []>} : vector<8x32xbf16>, vector<32x128xbf16>, vector<8x128xf32> -> vector<8x128xf32>
    %118 = arith.addf %115, %117 : vector<8x128xf32>
    %119 = math.tanh %118 : vector<8x128xf32>
    %120 = arith.negf %118 : vector<8x128xf32>
    %121 = math.exp %120 : vector<8x128xf32>
    %cst_19 = arith.constant 1.000000e+00 : f32
    %122 = vector.broadcast %cst_19 : f32 to vector<8x128xf32>
    %123 = arith.addf %122, %121 : vector<8x128xf32>
    %124 = arith.divf %122, %123 : vector<8x128xf32>
    %125 = arith.select %5, %119, %124 : vector<8x128xi1>, vector<8x128xf32>
    %126 = vector.extract_strided_slice %125 {offsets = [0, 0], sizes = [8, 32], strides = [1, 1]} : vector<8x128xf32> to vector<8x32xf32>
    %127 = vector.extract_strided_slice %125 {offsets = [0, 32], sizes = [8, 32], strides = [1, 1]} : vector<8x128xf32> to vector<8x32xf32>
    %128 = vector.extract_strided_slice %125 {offsets = [0, 64], sizes = [8, 32], strides = [1, 1]} : vector<8x128xf32> to vector<8x32xf32>
    %129 = vector.extract_strided_slice %125 {offsets = [0, 96], sizes = [8, 32], strides = [1, 1]} : vector<8x128xf32> to vector<8x32xf32>
    %130 = arith.mulf %127, %112 : vector<8x32xf32>
    %131 = arith.mulf %126, %128 : vector<8x32xf32>
    %132 = arith.addf %130, %131 : vector<8x32xf32>
    %133 = math.tanh %132 : vector<8x32xf32>
    %134 = arith.mulf %129, %133 : vector<8x32xf32>
    %135 = vector.extract_strided_slice %14 {offsets = [48, 0], sizes = [8, 128], strides = [1, 1]} : vector<64x128xf32> to vector<8x128xf32>
    %136 = arith.truncf %134 : vector<8x32xf32> to vector<8x32xbf16>
    %cst_20 = arith.constant dense<0.000000e+00> : vector<8x128xf32>
    %137 = tpu.matmul %136, %9, %cst_20 {dimension_numbers = #tpu.dot_dimension_numbers<[1], [0], [0], [1], [0, 0, 1, 1], [], []>} : vector<8x32xbf16>, vector<32x128xbf16>, vector<8x128xf32> -> vector<8x128xf32>
    %138 = arith.addf %135, %137 : vector<8x128xf32>
    %139 = math.tanh %138 : vector<8x128xf32>
    %140 = arith.negf %138 : vector<8x128xf32>
    %141 = math.exp %140 : vector<8x128xf32>
    %cst_21 = arith.constant 1.000000e+00 : f32
    %142 = vector.broadcast %cst_21 : f32 to vector<8x128xf32>
    %143 = arith.addf %142, %141 : vector<8x128xf32>
    %144 = arith.divf %142, %143 : vector<8x128xf32>
    %145 = arith.select %5, %139, %144 : vector<8x128xi1>, vector<8x128xf32>
    %146 = vector.extract_strided_slice %145 {offsets = [0, 0], sizes = [8, 32], strides = [1, 1]} : vector<8x128xf32> to vector<8x32xf32>
    %147 = vector.extract_strided_slice %145 {offsets = [0, 32], sizes = [8, 32], strides = [1, 1]} : vector<8x128xf32> to vector<8x32xf32>
    %148 = vector.extract_strided_slice %145 {offsets = [0, 64], sizes = [8, 32], strides = [1, 1]} : vector<8x128xf32> to vector<8x32xf32>
    %149 = vector.extract_strided_slice %145 {offsets = [0, 96], sizes = [8, 32], strides = [1, 1]} : vector<8x128xf32> to vector<8x32xf32>
    %150 = arith.mulf %147, %132 : vector<8x32xf32>
    %151 = arith.mulf %146, %148 : vector<8x32xf32>
    %152 = arith.addf %150, %151 : vector<8x32xf32>
    %153 = math.tanh %152 : vector<8x32xf32>
    %154 = arith.mulf %149, %153 : vector<8x32xf32>
    %155 = vector.extract_strided_slice %14 {offsets = [56, 0], sizes = [8, 128], strides = [1, 1]} : vector<64x128xf32> to vector<8x128xf32>
    %156 = arith.truncf %154 : vector<8x32xf32> to vector<8x32xbf16>
    %cst_22 = arith.constant dense<0.000000e+00> : vector<8x128xf32>
    %157 = tpu.matmul %156, %9, %cst_22 {dimension_numbers = #tpu.dot_dimension_numbers<[1], [0], [0], [1], [0, 0, 1, 1], [], []>} : vector<8x32xbf16>, vector<32x128xbf16>, vector<8x128xf32> -> vector<8x128xf32>
    %158 = arith.addf %155, %157 : vector<8x128xf32>
    %159 = math.tanh %158 : vector<8x128xf32>
    %160 = arith.negf %158 : vector<8x128xf32>
    %161 = math.exp %160 : vector<8x128xf32>
    %cst_23 = arith.constant 1.000000e+00 : f32
    %162 = vector.broadcast %cst_23 : f32 to vector<8x128xf32>
    %163 = arith.addf %162, %161 : vector<8x128xf32>
    %164 = arith.divf %162, %163 : vector<8x128xf32>
    %165 = arith.select %5, %159, %164 : vector<8x128xi1>, vector<8x128xf32>
    %166 = vector.extract_strided_slice %165 {offsets = [0, 0], sizes = [8, 32], strides = [1, 1]} : vector<8x128xf32> to vector<8x32xf32>
    %167 = vector.extract_strided_slice %165 {offsets = [0, 32], sizes = [8, 32], strides = [1, 1]} : vector<8x128xf32> to vector<8x32xf32>
    %168 = vector.extract_strided_slice %165 {offsets = [0, 64], sizes = [8, 32], strides = [1, 1]} : vector<8x128xf32> to vector<8x32xf32>
    %169 = vector.extract_strided_slice %165 {offsets = [0, 96], sizes = [8, 32], strides = [1, 1]} : vector<8x128xf32> to vector<8x32xf32>
    %170 = arith.mulf %167, %152 : vector<8x32xf32>
    %171 = arith.mulf %166, %168 : vector<8x32xf32>
    %172 = arith.addf %170, %171 : vector<8x32xf32>
    %173 = math.tanh %172 : vector<8x32xf32>
    %174 = arith.mulf %169, %173 : vector<8x32xf32>
    %175 = tpu.concatenate %34, %54, %74, %94, %114, %134, %154, %174 in 0 : vector<8x32xf32>, vector<8x32xf32>, vector<8x32xf32>, vector<8x32xf32>, vector<8x32xf32>, vector<8x32xf32>, vector<8x32xf32>, vector<8x32xf32> -> vector<64x32xf32>
    %c0_24 = arith.constant 0 : index
    %c0_25 = arith.constant 0 : index
    %176 = vector.load %arg5[%c0_24, %c0_25] : memref<32x128xbf16, #tpu.memory_space<vmem>>, vector<32x128xbf16>
    %c0_26 = arith.constant 0 : index
    %c0_27 = arith.constant 0 : index
    %177 = vector.load %arg6[%c0_26, %c0_27] : memref<32x128xbf16, #tpu.memory_space<vmem>>, vector<32x128xbf16>
    %c0_28 = arith.constant 0 : index
    %c0_29 = arith.constant 0 : index
    %178 = vector.load %arg7[%c0_28, %c0_29] : memref<1x128xf32, #tpu.memory_space<vmem>>, vector<1x128xf32>
    %179 = arith.truncf %175 : vector<64x32xf32> to vector<64x32xbf16>
    %cst_30 = arith.constant dense<0.000000e+00> : vector<64x128xf32>
    %180 = tpu.matmul %179, %176, %cst_30 {dimension_numbers = #tpu.dot_dimension_numbers<[1], [0], [0], [1], [0, 0, 1, 1], [], []>} : vector<64x32xbf16>, vector<32x128xbf16>, vector<64x128xf32> -> vector<64x128xf32>
    %181 = vector.broadcast %178 : vector<1x128xf32> to vector<64x128xf32>
    %182 = arith.addf %180, %181 : vector<64x128xf32>
    %183 = vector.extract_strided_slice %182 {offsets = [0, 0], sizes = [8, 128], strides = [1, 1]} : vector<64x128xf32> to vector<8x128xf32>
    %184 = arith.truncf %6 : vector<8x32xf32> to vector<8x32xbf16>
    %cst_31 = arith.constant dense<0.000000e+00> : vector<8x128xf32>
    %185 = tpu.matmul %184, %177, %cst_31 {dimension_numbers = #tpu.dot_dimension_numbers<[1], [0], [0], [1], [0, 0, 1, 1], [], []>} : vector<8x32xbf16>, vector<32x128xbf16>, vector<8x128xf32> -> vector<8x128xf32>
    %186 = arith.addf %183, %185 : vector<8x128xf32>
    %187 = math.tanh %186 : vector<8x128xf32>
    %188 = arith.negf %186 : vector<8x128xf32>
    %189 = math.exp %188 : vector<8x128xf32>
    %cst_32 = arith.constant 1.000000e+00 : f32
    %190 = vector.broadcast %cst_32 : f32 to vector<8x128xf32>
    %191 = arith.addf %190, %189 : vector<8x128xf32>
    %192 = arith.divf %190, %191 : vector<8x128xf32>
    %193 = arith.select %5, %187, %192 : vector<8x128xi1>, vector<8x128xf32>
    %194 = vector.extract_strided_slice %193 {offsets = [0, 0], sizes = [8, 32], strides = [1, 1]} : vector<8x128xf32> to vector<8x32xf32>
    %195 = vector.extract_strided_slice %193 {offsets = [0, 32], sizes = [8, 32], strides = [1, 1]} : vector<8x128xf32> to vector<8x32xf32>
    %196 = vector.extract_strided_slice %193 {offsets = [0, 64], sizes = [8, 32], strides = [1, 1]} : vector<8x128xf32> to vector<8x32xf32>
    %197 = vector.extract_strided_slice %193 {offsets = [0, 96], sizes = [8, 32], strides = [1, 1]} : vector<8x128xf32> to vector<8x32xf32>
    %198 = arith.mulf %195, %6 : vector<8x32xf32>
    %199 = arith.mulf %194, %196 : vector<8x32xf32>
    %200 = arith.addf %198, %199 : vector<8x32xf32>
    %201 = math.tanh %200 : vector<8x32xf32>
    %202 = arith.mulf %197, %201 : vector<8x32xf32>
    %203 = vector.extract_strided_slice %182 {offsets = [8, 0], sizes = [8, 128], strides = [1, 1]} : vector<64x128xf32> to vector<8x128xf32>
    %204 = arith.truncf %202 : vector<8x32xf32> to vector<8x32xbf16>
    %cst_33 = arith.constant dense<0.000000e+00> : vector<8x128xf32>
    %205 = tpu.matmul %204, %177, %cst_33 {dimension_numbers = #tpu.dot_dimension_numbers<[1], [0], [0], [1], [0, 0, 1, 1], [], []>} : vector<8x32xbf16>, vector<32x128xbf16>, vector<8x128xf32> -> vector<8x128xf32>
    %206 = arith.addf %203, %205 : vector<8x128xf32>
    %207 = math.tanh %206 : vector<8x128xf32>
    %208 = arith.negf %206 : vector<8x128xf32>
    %209 = math.exp %208 : vector<8x128xf32>
    %cst_34 = arith.constant 1.000000e+00 : f32
    %210 = vector.broadcast %cst_34 : f32 to vector<8x128xf32>
    %211 = arith.addf %210, %209 : vector<8x128xf32>
    %212 = arith.divf %210, %211 : vector<8x128xf32>
    %213 = arith.select %5, %207, %212 : vector<8x128xi1>, vector<8x128xf32>
    %214 = vector.extract_strided_slice %213 {offsets = [0, 0], sizes = [8, 32], strides = [1, 1]} : vector<8x128xf32> to vector<8x32xf32>
    %215 = vector.extract_strided_slice %213 {offsets = [0, 32], sizes = [8, 32], strides = [1, 1]} : vector<8x128xf32> to vector<8x32xf32>
    %216 = vector.extract_strided_slice %213 {offsets = [0, 64], sizes = [8, 32], strides = [1, 1]} : vector<8x128xf32> to vector<8x32xf32>
    %217 = vector.extract_strided_slice %213 {offsets = [0, 96], sizes = [8, 32], strides = [1, 1]} : vector<8x128xf32> to vector<8x32xf32>
    %218 = arith.mulf %215, %200 : vector<8x32xf32>
    %219 = arith.mulf %214, %216 : vector<8x32xf32>
    %220 = arith.addf %218, %219 : vector<8x32xf32>
    %221 = math.tanh %220 : vector<8x32xf32>
    %222 = arith.mulf %217, %221 : vector<8x32xf32>
    %223 = vector.extract_strided_slice %182 {offsets = [16, 0], sizes = [8, 128], strides = [1, 1]} : vector<64x128xf32> to vector<8x128xf32>
    %224 = arith.truncf %222 : vector<8x32xf32> to vector<8x32xbf16>
    %cst_35 = arith.constant dense<0.000000e+00> : vector<8x128xf32>
    %225 = tpu.matmul %224, %177, %cst_35 {dimension_numbers = #tpu.dot_dimension_numbers<[1], [0], [0], [1], [0, 0, 1, 1], [], []>} : vector<8x32xbf16>, vector<32x128xbf16>, vector<8x128xf32> -> vector<8x128xf32>
    %226 = arith.addf %223, %225 : vector<8x128xf32>
    %227 = math.tanh %226 : vector<8x128xf32>
    %228 = arith.negf %226 : vector<8x128xf32>
    %229 = math.exp %228 : vector<8x128xf32>
    %cst_36 = arith.constant 1.000000e+00 : f32
    %230 = vector.broadcast %cst_36 : f32 to vector<8x128xf32>
    %231 = arith.addf %230, %229 : vector<8x128xf32>
    %232 = arith.divf %230, %231 : vector<8x128xf32>
    %233 = arith.select %5, %227, %232 : vector<8x128xi1>, vector<8x128xf32>
    %234 = vector.extract_strided_slice %233 {offsets = [0, 0], sizes = [8, 32], strides = [1, 1]} : vector<8x128xf32> to vector<8x32xf32>
    %235 = vector.extract_strided_slice %233 {offsets = [0, 32], sizes = [8, 32], strides = [1, 1]} : vector<8x128xf32> to vector<8x32xf32>
    %236 = vector.extract_strided_slice %233 {offsets = [0, 64], sizes = [8, 32], strides = [1, 1]} : vector<8x128xf32> to vector<8x32xf32>
    %237 = vector.extract_strided_slice %233 {offsets = [0, 96], sizes = [8, 32], strides = [1, 1]} : vector<8x128xf32> to vector<8x32xf32>
    %238 = arith.mulf %235, %220 : vector<8x32xf32>
    %239 = arith.mulf %234, %236 : vector<8x32xf32>
    %240 = arith.addf %238, %239 : vector<8x32xf32>
    %241 = math.tanh %240 : vector<8x32xf32>
    %242 = arith.mulf %237, %241 : vector<8x32xf32>
    %243 = vector.extract_strided_slice %182 {offsets = [24, 0], sizes = [8, 128], strides = [1, 1]} : vector<64x128xf32> to vector<8x128xf32>
    %244 = arith.truncf %242 : vector<8x32xf32> to vector<8x32xbf16>
    %cst_37 = arith.constant dense<0.000000e+00> : vector<8x128xf32>
    %245 = tpu.matmul %244, %177, %cst_37 {dimension_numbers = #tpu.dot_dimension_numbers<[1], [0], [0], [1], [0, 0, 1, 1], [], []>} : vector<8x32xbf16>, vector<32x128xbf16>, vector<8x128xf32> -> vector<8x128xf32>
    %246 = arith.addf %243, %245 : vector<8x128xf32>
    %247 = math.tanh %246 : vector<8x128xf32>
    %248 = arith.negf %246 : vector<8x128xf32>
    %249 = math.exp %248 : vector<8x128xf32>
    %cst_38 = arith.constant 1.000000e+00 : f32
    %250 = vector.broadcast %cst_38 : f32 to vector<8x128xf32>
    %251 = arith.addf %250, %249 : vector<8x128xf32>
    %252 = arith.divf %250, %251 : vector<8x128xf32>
    %253 = arith.select %5, %247, %252 : vector<8x128xi1>, vector<8x128xf32>
    %254 = vector.extract_strided_slice %253 {offsets = [0, 0], sizes = [8, 32], strides = [1, 1]} : vector<8x128xf32> to vector<8x32xf32>
    %255 = vector.extract_strided_slice %253 {offsets = [0, 32], sizes = [8, 32], strides = [1, 1]} : vector<8x128xf32> to vector<8x32xf32>
    %256 = vector.extract_strided_slice %253 {offsets = [0, 64], sizes = [8, 32], strides = [1, 1]} : vector<8x128xf32> to vector<8x32xf32>
    %257 = vector.extract_strided_slice %253 {offsets = [0, 96], sizes = [8, 32], strides = [1, 1]} : vector<8x128xf32> to vector<8x32xf32>
    %258 = arith.mulf %255, %240 : vector<8x32xf32>
    %259 = arith.mulf %254, %256 : vector<8x32xf32>
    %260 = arith.addf %258, %259 : vector<8x32xf32>
    %261 = math.tanh %260 : vector<8x32xf32>
    %262 = arith.mulf %257, %261 : vector<8x32xf32>
    %263 = vector.extract_strided_slice %182 {offsets = [32, 0], sizes = [8, 128], strides = [1, 1]} : vector<64x128xf32> to vector<8x128xf32>
    %264 = arith.truncf %262 : vector<8x32xf32> to vector<8x32xbf16>
    %cst_39 = arith.constant dense<0.000000e+00> : vector<8x128xf32>
    %265 = tpu.matmul %264, %177, %cst_39 {dimension_numbers = #tpu.dot_dimension_numbers<[1], [0], [0], [1], [0, 0, 1, 1], [], []>} : vector<8x32xbf16>, vector<32x128xbf16>, vector<8x128xf32> -> vector<8x128xf32>
    %266 = arith.addf %263, %265 : vector<8x128xf32>
    %267 = math.tanh %266 : vector<8x128xf32>
    %268 = arith.negf %266 : vector<8x128xf32>
    %269 = math.exp %268 : vector<8x128xf32>
    %cst_40 = arith.constant 1.000000e+00 : f32
    %270 = vector.broadcast %cst_40 : f32 to vector<8x128xf32>
    %271 = arith.addf %270, %269 : vector<8x128xf32>
    %272 = arith.divf %270, %271 : vector<8x128xf32>
    %273 = arith.select %5, %267, %272 : vector<8x128xi1>, vector<8x128xf32>
    %274 = vector.extract_strided_slice %273 {offsets = [0, 0], sizes = [8, 32], strides = [1, 1]} : vector<8x128xf32> to vector<8x32xf32>
    %275 = vector.extract_strided_slice %273 {offsets = [0, 32], sizes = [8, 32], strides = [1, 1]} : vector<8x128xf32> to vector<8x32xf32>
    %276 = vector.extract_strided_slice %273 {offsets = [0, 64], sizes = [8, 32], strides = [1, 1]} : vector<8x128xf32> to vector<8x32xf32>
    %277 = vector.extract_strided_slice %273 {offsets = [0, 96], sizes = [8, 32], strides = [1, 1]} : vector<8x128xf32> to vector<8x32xf32>
    %278 = arith.mulf %275, %260 : vector<8x32xf32>
    %279 = arith.mulf %274, %276 : vector<8x32xf32>
    %280 = arith.addf %278, %279 : vector<8x32xf32>
    %281 = math.tanh %280 : vector<8x32xf32>
    %282 = arith.mulf %277, %281 : vector<8x32xf32>
    %283 = vector.extract_strided_slice %182 {offsets = [40, 0], sizes = [8, 128], strides = [1, 1]} : vector<64x128xf32> to vector<8x128xf32>
    %284 = arith.truncf %282 : vector<8x32xf32> to vector<8x32xbf16>
    %cst_41 = arith.constant dense<0.000000e+00> : vector<8x128xf32>
    %285 = tpu.matmul %284, %177, %cst_41 {dimension_numbers = #tpu.dot_dimension_numbers<[1], [0], [0], [1], [0, 0, 1, 1], [], []>} : vector<8x32xbf16>, vector<32x128xbf16>, vector<8x128xf32> -> vector<8x128xf32>
    %286 = arith.addf %283, %285 : vector<8x128xf32>
    %287 = math.tanh %286 : vector<8x128xf32>
    %288 = arith.negf %286 : vector<8x128xf32>
    %289 = math.exp %288 : vector<8x128xf32>
    %cst_42 = arith.constant 1.000000e+00 : f32
    %290 = vector.broadcast %cst_42 : f32 to vector<8x128xf32>
    %291 = arith.addf %290, %289 : vector<8x128xf32>
    %292 = arith.divf %290, %291 : vector<8x128xf32>
    %293 = arith.select %5, %287, %292 : vector<8x128xi1>, vector<8x128xf32>
    %294 = vector.extract_strided_slice %293 {offsets = [0, 0], sizes = [8, 32], strides = [1, 1]} : vector<8x128xf32> to vector<8x32xf32>
    %295 = vector.extract_strided_slice %293 {offsets = [0, 32], sizes = [8, 32], strides = [1, 1]} : vector<8x128xf32> to vector<8x32xf32>
    %296 = vector.extract_strided_slice %293 {offsets = [0, 64], sizes = [8, 32], strides = [1, 1]} : vector<8x128xf32> to vector<8x32xf32>
    %297 = vector.extract_strided_slice %293 {offsets = [0, 96], sizes = [8, 32], strides = [1, 1]} : vector<8x128xf32> to vector<8x32xf32>
    %298 = arith.mulf %295, %280 : vector<8x32xf32>
    %299 = arith.mulf %294, %296 : vector<8x32xf32>
    %300 = arith.addf %298, %299 : vector<8x32xf32>
    %301 = math.tanh %300 : vector<8x32xf32>
    %302 = arith.mulf %297, %301 : vector<8x32xf32>
    %303 = vector.extract_strided_slice %182 {offsets = [48, 0], sizes = [8, 128], strides = [1, 1]} : vector<64x128xf32> to vector<8x128xf32>
    %304 = arith.truncf %302 : vector<8x32xf32> to vector<8x32xbf16>
    %cst_43 = arith.constant dense<0.000000e+00> : vector<8x128xf32>
    %305 = tpu.matmul %304, %177, %cst_43 {dimension_numbers = #tpu.dot_dimension_numbers<[1], [0], [0], [1], [0, 0, 1, 1], [], []>} : vector<8x32xbf16>, vector<32x128xbf16>, vector<8x128xf32> -> vector<8x128xf32>
    %306 = arith.addf %303, %305 : vector<8x128xf32>
    %307 = math.tanh %306 : vector<8x128xf32>
    %308 = arith.negf %306 : vector<8x128xf32>
    %309 = math.exp %308 : vector<8x128xf32>
    %cst_44 = arith.constant 1.000000e+00 : f32
    %310 = vector.broadcast %cst_44 : f32 to vector<8x128xf32>
    %311 = arith.addf %310, %309 : vector<8x128xf32>
    %312 = arith.divf %310, %311 : vector<8x128xf32>
    %313 = arith.select %5, %307, %312 : vector<8x128xi1>, vector<8x128xf32>
    %314 = vector.extract_strided_slice %313 {offsets = [0, 0], sizes = [8, 32], strides = [1, 1]} : vector<8x128xf32> to vector<8x32xf32>
    %315 = vector.extract_strided_slice %313 {offsets = [0, 32], sizes = [8, 32], strides = [1, 1]} : vector<8x128xf32> to vector<8x32xf32>
    %316 = vector.extract_strided_slice %313 {offsets = [0, 64], sizes = [8, 32], strides = [1, 1]} : vector<8x128xf32> to vector<8x32xf32>
    %317 = vector.extract_strided_slice %313 {offsets = [0, 96], sizes = [8, 32], strides = [1, 1]} : vector<8x128xf32> to vector<8x32xf32>
    %318 = arith.mulf %315, %300 : vector<8x32xf32>
    %319 = arith.mulf %314, %316 : vector<8x32xf32>
    %320 = arith.addf %318, %319 : vector<8x32xf32>
    %321 = math.tanh %320 : vector<8x32xf32>
    %322 = arith.mulf %317, %321 : vector<8x32xf32>
    %323 = vector.extract_strided_slice %182 {offsets = [56, 0], sizes = [8, 128], strides = [1, 1]} : vector<64x128xf32> to vector<8x128xf32>
    %324 = arith.truncf %322 : vector<8x32xf32> to vector<8x32xbf16>
    %cst_45 = arith.constant dense<0.000000e+00> : vector<8x128xf32>
    %325 = tpu.matmul %324, %177, %cst_45 {dimension_numbers = #tpu.dot_dimension_numbers<[1], [0], [0], [1], [0, 0, 1, 1], [], []>} : vector<8x32xbf16>, vector<32x128xbf16>, vector<8x128xf32> -> vector<8x128xf32>
    %326 = arith.addf %323, %325 : vector<8x128xf32>
    %327 = math.tanh %326 : vector<8x128xf32>
    %328 = arith.negf %326 : vector<8x128xf32>
    %329 = math.exp %328 : vector<8x128xf32>
    %cst_46 = arith.constant 1.000000e+00 : f32
    %330 = vector.broadcast %cst_46 : f32 to vector<8x128xf32>
    %331 = arith.addf %330, %329 : vector<8x128xf32>
    %332 = arith.divf %330, %331 : vector<8x128xf32>
    %333 = arith.select %5, %327, %332 : vector<8x128xi1>, vector<8x128xf32>
    %334 = vector.extract_strided_slice %333 {offsets = [0, 0], sizes = [8, 32], strides = [1, 1]} : vector<8x128xf32> to vector<8x32xf32>
    %335 = vector.extract_strided_slice %333 {offsets = [0, 32], sizes = [8, 32], strides = [1, 1]} : vector<8x128xf32> to vector<8x32xf32>
    %336 = vector.extract_strided_slice %333 {offsets = [0, 64], sizes = [8, 32], strides = [1, 1]} : vector<8x128xf32> to vector<8x32xf32>
    %337 = vector.extract_strided_slice %333 {offsets = [0, 96], sizes = [8, 32], strides = [1, 1]} : vector<8x128xf32> to vector<8x32xf32>
    %338 = arith.mulf %335, %320 : vector<8x32xf32>
    %339 = arith.mulf %334, %336 : vector<8x32xf32>
    %340 = arith.addf %338, %339 : vector<8x32xf32>
    %341 = math.tanh %340 : vector<8x32xf32>
    %342 = arith.mulf %337, %341 : vector<8x32xf32>
    %c0_47 = arith.constant 0 : index
    %c0_48 = arith.constant 0 : index
    %343 = vector.load %arg1[%c0_47, %c0_48] : memref<40x4xf32, #tpu.memory_space<vmem>>, vector<40x4xf32>
    %c0_49 = arith.constant 0 : index
    %c0_50 = arith.constant 0 : index
    %344 = vector.load %arg8[%c0_49, %c0_50] : memref<4x128xbf16, #tpu.memory_space<vmem>>, vector<4x128xbf16>
    %c0_51 = arith.constant 0 : index
    %c0_52 = arith.constant 0 : index
    %345 = vector.load %arg9[%c0_51, %c0_52] : memref<32x128xbf16, #tpu.memory_space<vmem>>, vector<32x128xbf16>
    %c0_53 = arith.constant 0 : index
    %c0_54 = arith.constant 0 : index
    %346 = vector.load %arg10[%c0_53, %c0_54] : memref<1x128xf32, #tpu.memory_space<vmem>>, vector<1x128xf32>
    %347 = arith.truncf %343 : vector<40x4xf32> to vector<40x4xbf16>
    %cst_55 = arith.constant dense<0.000000e+00> : vector<40x128xf32>
    %348 = tpu.matmul %347, %344, %cst_55 {dimension_numbers = #tpu.dot_dimension_numbers<[1], [0], [0], [1], [0, 0, 1, 1], [], []>} : vector<40x4xbf16>, vector<4x128xbf16>, vector<40x128xf32> -> vector<40x128xf32>
    %349 = vector.broadcast %346 : vector<1x128xf32> to vector<40x128xf32>
    %350 = arith.addf %348, %349 : vector<40x128xf32>
    %351 = vector.extract_strided_slice %350 {offsets = [0, 0], sizes = [8, 128], strides = [1, 1]} : vector<40x128xf32> to vector<8x128xf32>
    %352 = arith.truncf %174 : vector<8x32xf32> to vector<8x32xbf16>
    %cst_56 = arith.constant dense<0.000000e+00> : vector<8x128xf32>
    %353 = tpu.matmul %352, %345, %cst_56 {dimension_numbers = #tpu.dot_dimension_numbers<[1], [0], [0], [1], [0, 0, 1, 1], [], []>} : vector<8x32xbf16>, vector<32x128xbf16>, vector<8x128xf32> -> vector<8x128xf32>
    %354 = arith.addf %351, %353 : vector<8x128xf32>
    %355 = math.tanh %354 : vector<8x128xf32>
    %356 = arith.negf %354 : vector<8x128xf32>
    %357 = math.exp %356 : vector<8x128xf32>
    %cst_57 = arith.constant 1.000000e+00 : f32
    %358 = vector.broadcast %cst_57 : f32 to vector<8x128xf32>
    %359 = arith.addf %358, %357 : vector<8x128xf32>
    %360 = arith.divf %358, %359 : vector<8x128xf32>
    %361 = arith.select %5, %355, %360 : vector<8x128xi1>, vector<8x128xf32>
    %362 = vector.extract_strided_slice %361 {offsets = [0, 0], sizes = [8, 32], strides = [1, 1]} : vector<8x128xf32> to vector<8x32xf32>
    %363 = vector.extract_strided_slice %361 {offsets = [0, 32], sizes = [8, 32], strides = [1, 1]} : vector<8x128xf32> to vector<8x32xf32>
    %364 = vector.extract_strided_slice %361 {offsets = [0, 64], sizes = [8, 32], strides = [1, 1]} : vector<8x128xf32> to vector<8x32xf32>
    %365 = vector.extract_strided_slice %361 {offsets = [0, 96], sizes = [8, 32], strides = [1, 1]} : vector<8x128xf32> to vector<8x32xf32>
    %366 = arith.mulf %363, %172 : vector<8x32xf32>
    %367 = arith.mulf %362, %364 : vector<8x32xf32>
    %368 = arith.addf %366, %367 : vector<8x32xf32>
    %369 = math.tanh %368 : vector<8x32xf32>
    %370 = arith.mulf %365, %369 : vector<8x32xf32>
    %371 = vector.extract_strided_slice %350 {offsets = [8, 0], sizes = [8, 128], strides = [1, 1]} : vector<40x128xf32> to vector<8x128xf32>
    %372 = arith.truncf %370 : vector<8x32xf32> to vector<8x32xbf16>
    %cst_58 = arith.constant dense<0.000000e+00> : vector<8x128xf32>
    %373 = tpu.matmul %372, %345, %cst_58 {dimension_numbers = #tpu.dot_dimension_numbers<[1], [0], [0], [1], [0, 0, 1, 1], [], []>} : vector<8x32xbf16>, vector<32x128xbf16>, vector<8x128xf32> -> vector<8x128xf32>
    %374 = arith.addf %371, %373 : vector<8x128xf32>
    %375 = math.tanh %374 : vector<8x128xf32>
    %376 = arith.negf %374 : vector<8x128xf32>
    %377 = math.exp %376 : vector<8x128xf32>
    %cst_59 = arith.constant 1.000000e+00 : f32
    %378 = vector.broadcast %cst_59 : f32 to vector<8x128xf32>
    %379 = arith.addf %378, %377 : vector<8x128xf32>
    %380 = arith.divf %378, %379 : vector<8x128xf32>
    %381 = arith.select %5, %375, %380 : vector<8x128xi1>, vector<8x128xf32>
    %382 = vector.extract_strided_slice %381 {offsets = [0, 0], sizes = [8, 32], strides = [1, 1]} : vector<8x128xf32> to vector<8x32xf32>
    %383 = vector.extract_strided_slice %381 {offsets = [0, 32], sizes = [8, 32], strides = [1, 1]} : vector<8x128xf32> to vector<8x32xf32>
    %384 = vector.extract_strided_slice %381 {offsets = [0, 64], sizes = [8, 32], strides = [1, 1]} : vector<8x128xf32> to vector<8x32xf32>
    %385 = vector.extract_strided_slice %381 {offsets = [0, 96], sizes = [8, 32], strides = [1, 1]} : vector<8x128xf32> to vector<8x32xf32>
    %386 = arith.mulf %383, %368 : vector<8x32xf32>
    %387 = arith.mulf %382, %384 : vector<8x32xf32>
    %388 = arith.addf %386, %387 : vector<8x32xf32>
    %389 = math.tanh %388 : vector<8x32xf32>
    %390 = arith.mulf %385, %389 : vector<8x32xf32>
    %391 = vector.extract_strided_slice %350 {offsets = [16, 0], sizes = [8, 128], strides = [1, 1]} : vector<40x128xf32> to vector<8x128xf32>
    %392 = arith.truncf %390 : vector<8x32xf32> to vector<8x32xbf16>
    %cst_60 = arith.constant dense<0.000000e+00> : vector<8x128xf32>
    %393 = tpu.matmul %392, %345, %cst_60 {dimension_numbers = #tpu.dot_dimension_numbers<[1], [0], [0], [1], [0, 0, 1, 1], [], []>} : vector<8x32xbf16>, vector<32x128xbf16>, vector<8x128xf32> -> vector<8x128xf32>
    %394 = arith.addf %391, %393 : vector<8x128xf32>
    %395 = math.tanh %394 : vector<8x128xf32>
    %396 = arith.negf %394 : vector<8x128xf32>
    %397 = math.exp %396 : vector<8x128xf32>
    %cst_61 = arith.constant 1.000000e+00 : f32
    %398 = vector.broadcast %cst_61 : f32 to vector<8x128xf32>
    %399 = arith.addf %398, %397 : vector<8x128xf32>
    %400 = arith.divf %398, %399 : vector<8x128xf32>
    %401 = arith.select %5, %395, %400 : vector<8x128xi1>, vector<8x128xf32>
    %402 = vector.extract_strided_slice %401 {offsets = [0, 0], sizes = [8, 32], strides = [1, 1]} : vector<8x128xf32> to vector<8x32xf32>
    %403 = vector.extract_strided_slice %401 {offsets = [0, 32], sizes = [8, 32], strides = [1, 1]} : vector<8x128xf32> to vector<8x32xf32>
    %404 = vector.extract_strided_slice %401 {offsets = [0, 64], sizes = [8, 32], strides = [1, 1]} : vector<8x128xf32> to vector<8x32xf32>
    %405 = vector.extract_strided_slice %401 {offsets = [0, 96], sizes = [8, 32], strides = [1, 1]} : vector<8x128xf32> to vector<8x32xf32>
    %406 = arith.mulf %403, %388 : vector<8x32xf32>
    %407 = arith.mulf %402, %404 : vector<8x32xf32>
    %408 = arith.addf %406, %407 : vector<8x32xf32>
    %409 = math.tanh %408 : vector<8x32xf32>
    %410 = arith.mulf %405, %409 : vector<8x32xf32>
    %411 = vector.extract_strided_slice %350 {offsets = [24, 0], sizes = [8, 128], strides = [1, 1]} : vector<40x128xf32> to vector<8x128xf32>
    %412 = arith.truncf %410 : vector<8x32xf32> to vector<8x32xbf16>
    %cst_62 = arith.constant dense<0.000000e+00> : vector<8x128xf32>
    %413 = tpu.matmul %412, %345, %cst_62 {dimension_numbers = #tpu.dot_dimension_numbers<[1], [0], [0], [1], [0, 0, 1, 1], [], []>} : vector<8x32xbf16>, vector<32x128xbf16>, vector<8x128xf32> -> vector<8x128xf32>
    %414 = arith.addf %411, %413 : vector<8x128xf32>
    %415 = math.tanh %414 : vector<8x128xf32>
    %416 = arith.negf %414 : vector<8x128xf32>
    %417 = math.exp %416 : vector<8x128xf32>
    %cst_63 = arith.constant 1.000000e+00 : f32
    %418 = vector.broadcast %cst_63 : f32 to vector<8x128xf32>
    %419 = arith.addf %418, %417 : vector<8x128xf32>
    %420 = arith.divf %418, %419 : vector<8x128xf32>
    %421 = arith.select %5, %415, %420 : vector<8x128xi1>, vector<8x128xf32>
    %422 = vector.extract_strided_slice %421 {offsets = [0, 0], sizes = [8, 32], strides = [1, 1]} : vector<8x128xf32> to vector<8x32xf32>
    %423 = vector.extract_strided_slice %421 {offsets = [0, 32], sizes = [8, 32], strides = [1, 1]} : vector<8x128xf32> to vector<8x32xf32>
    %424 = vector.extract_strided_slice %421 {offsets = [0, 64], sizes = [8, 32], strides = [1, 1]} : vector<8x128xf32> to vector<8x32xf32>
    %425 = vector.extract_strided_slice %421 {offsets = [0, 96], sizes = [8, 32], strides = [1, 1]} : vector<8x128xf32> to vector<8x32xf32>
    %426 = arith.mulf %423, %408 : vector<8x32xf32>
    %427 = arith.mulf %422, %424 : vector<8x32xf32>
    %428 = arith.addf %426, %427 : vector<8x32xf32>
    %429 = math.tanh %428 : vector<8x32xf32>
    %430 = arith.mulf %425, %429 : vector<8x32xf32>
    %431 = vector.extract_strided_slice %350 {offsets = [32, 0], sizes = [8, 128], strides = [1, 1]} : vector<40x128xf32> to vector<8x128xf32>
    %432 = arith.truncf %430 : vector<8x32xf32> to vector<8x32xbf16>
    %cst_64 = arith.constant dense<0.000000e+00> : vector<8x128xf32>
    %433 = tpu.matmul %432, %345, %cst_64 {dimension_numbers = #tpu.dot_dimension_numbers<[1], [0], [0], [1], [0, 0, 1, 1], [], []>} : vector<8x32xbf16>, vector<32x128xbf16>, vector<8x128xf32> -> vector<8x128xf32>
    %434 = arith.addf %431, %433 : vector<8x128xf32>
    %435 = math.tanh %434 : vector<8x128xf32>
    %436 = arith.negf %434 : vector<8x128xf32>
    %437 = math.exp %436 : vector<8x128xf32>
    %cst_65 = arith.constant 1.000000e+00 : f32
    %438 = vector.broadcast %cst_65 : f32 to vector<8x128xf32>
    %439 = arith.addf %438, %437 : vector<8x128xf32>
    %440 = arith.divf %438, %439 : vector<8x128xf32>
    %441 = arith.select %5, %435, %440 : vector<8x128xi1>, vector<8x128xf32>
    %442 = vector.extract_strided_slice %441 {offsets = [0, 0], sizes = [8, 32], strides = [1, 1]} : vector<8x128xf32> to vector<8x32xf32>
    %443 = vector.extract_strided_slice %441 {offsets = [0, 32], sizes = [8, 32], strides = [1, 1]} : vector<8x128xf32> to vector<8x32xf32>
    %444 = vector.extract_strided_slice %441 {offsets = [0, 64], sizes = [8, 32], strides = [1, 1]} : vector<8x128xf32> to vector<8x32xf32>
    %445 = vector.extract_strided_slice %441 {offsets = [0, 96], sizes = [8, 32], strides = [1, 1]} : vector<8x128xf32> to vector<8x32xf32>
    %446 = arith.mulf %443, %428 : vector<8x32xf32>
    %447 = arith.mulf %442, %444 : vector<8x32xf32>
    %448 = arith.addf %446, %447 : vector<8x32xf32>
    %449 = math.tanh %448 : vector<8x32xf32>
    %450 = arith.mulf %445, %449 : vector<8x32xf32>
    %451 = tpu.concatenate %370, %390, %410, %430, %450 in 0 : vector<8x32xf32>, vector<8x32xf32>, vector<8x32xf32>, vector<8x32xf32>, vector<8x32xf32> -> vector<40x32xf32>
    %c0_66 = arith.constant 0 : index
    %c0_67 = arith.constant 0 : index
    %452 = vector.load %arg11[%c0_66, %c0_67] : memref<32x128xbf16, #tpu.memory_space<vmem>>, vector<32x128xbf16>
    %c0_68 = arith.constant 0 : index
    %c0_69 = arith.constant 0 : index
    %453 = vector.load %arg12[%c0_68, %c0_69] : memref<32x128xbf16, #tpu.memory_space<vmem>>, vector<32x128xbf16>
    %c0_70 = arith.constant 0 : index
    %c0_71 = arith.constant 0 : index
    %454 = vector.load %arg13[%c0_70, %c0_71] : memref<1x128xf32, #tpu.memory_space<vmem>>, vector<1x128xf32>
    %455 = arith.truncf %451 : vector<40x32xf32> to vector<40x32xbf16>
    %cst_72 = arith.constant dense<0.000000e+00> : vector<40x128xf32>
    %456 = tpu.matmul %455, %452, %cst_72 {dimension_numbers = #tpu.dot_dimension_numbers<[1], [0], [0], [1], [0, 0, 1, 1], [], []>} : vector<40x32xbf16>, vector<32x128xbf16>, vector<40x128xf32> -> vector<40x128xf32>
    %457 = vector.broadcast %454 : vector<1x128xf32> to vector<40x128xf32>
    %458 = arith.addf %456, %457 : vector<40x128xf32>
    %459 = vector.extract_strided_slice %458 {offsets = [0, 0], sizes = [8, 128], strides = [1, 1]} : vector<40x128xf32> to vector<8x128xf32>
    %460 = arith.truncf %342 : vector<8x32xf32> to vector<8x32xbf16>
    %cst_73 = arith.constant dense<0.000000e+00> : vector<8x128xf32>
    %461 = tpu.matmul %460, %453, %cst_73 {dimension_numbers = #tpu.dot_dimension_numbers<[1], [0], [0], [1], [0, 0, 1, 1], [], []>} : vector<8x32xbf16>, vector<32x128xbf16>, vector<8x128xf32> -> vector<8x128xf32>
    %462 = arith.addf %459, %461 : vector<8x128xf32>
    %463 = math.tanh %462 : vector<8x128xf32>
    %464 = arith.negf %462 : vector<8x128xf32>
    %465 = math.exp %464 : vector<8x128xf32>
    %cst_74 = arith.constant 1.000000e+00 : f32
    %466 = vector.broadcast %cst_74 : f32 to vector<8x128xf32>
    %467 = arith.addf %466, %465 : vector<8x128xf32>
    %468 = arith.divf %466, %467 : vector<8x128xf32>
    %469 = arith.select %5, %463, %468 : vector<8x128xi1>, vector<8x128xf32>
    %470 = vector.extract_strided_slice %469 {offsets = [0, 0], sizes = [8, 32], strides = [1, 1]} : vector<8x128xf32> to vector<8x32xf32>
    %471 = vector.extract_strided_slice %469 {offsets = [0, 32], sizes = [8, 32], strides = [1, 1]} : vector<8x128xf32> to vector<8x32xf32>
    %472 = vector.extract_strided_slice %469 {offsets = [0, 64], sizes = [8, 32], strides = [1, 1]} : vector<8x128xf32> to vector<8x32xf32>
    %473 = vector.extract_strided_slice %469 {offsets = [0, 96], sizes = [8, 32], strides = [1, 1]} : vector<8x128xf32> to vector<8x32xf32>
    %474 = arith.mulf %471, %340 : vector<8x32xf32>
    %475 = arith.mulf %470, %472 : vector<8x32xf32>
    %476 = arith.addf %474, %475 : vector<8x32xf32>
    %477 = math.tanh %476 : vector<8x32xf32>
    %478 = arith.mulf %473, %477 : vector<8x32xf32>
    %479 = vector.extract_strided_slice %458 {offsets = [8, 0], sizes = [8, 128], strides = [1, 1]} : vector<40x128xf32> to vector<8x128xf32>
    %480 = arith.truncf %478 : vector<8x32xf32> to vector<8x32xbf16>
    %cst_75 = arith.constant dense<0.000000e+00> : vector<8x128xf32>
    %481 = tpu.matmul %480, %453, %cst_75 {dimension_numbers = #tpu.dot_dimension_numbers<[1], [0], [0], [1], [0, 0, 1, 1], [], []>} : vector<8x32xbf16>, vector<32x128xbf16>, vector<8x128xf32> -> vector<8x128xf32>
    %482 = arith.addf %479, %481 : vector<8x128xf32>
    %483 = math.tanh %482 : vector<8x128xf32>
    %484 = arith.negf %482 : vector<8x128xf32>
    %485 = math.exp %484 : vector<8x128xf32>
    %cst_76 = arith.constant 1.000000e+00 : f32
    %486 = vector.broadcast %cst_76 : f32 to vector<8x128xf32>
    %487 = arith.addf %486, %485 : vector<8x128xf32>
    %488 = arith.divf %486, %487 : vector<8x128xf32>
    %489 = arith.select %5, %483, %488 : vector<8x128xi1>, vector<8x128xf32>
    %490 = vector.extract_strided_slice %489 {offsets = [0, 0], sizes = [8, 32], strides = [1, 1]} : vector<8x128xf32> to vector<8x32xf32>
    %491 = vector.extract_strided_slice %489 {offsets = [0, 32], sizes = [8, 32], strides = [1, 1]} : vector<8x128xf32> to vector<8x32xf32>
    %492 = vector.extract_strided_slice %489 {offsets = [0, 64], sizes = [8, 32], strides = [1, 1]} : vector<8x128xf32> to vector<8x32xf32>
    %493 = vector.extract_strided_slice %489 {offsets = [0, 96], sizes = [8, 32], strides = [1, 1]} : vector<8x128xf32> to vector<8x32xf32>
    %494 = arith.mulf %491, %476 : vector<8x32xf32>
    %495 = arith.mulf %490, %492 : vector<8x32xf32>
    %496 = arith.addf %494, %495 : vector<8x32xf32>
    %497 = math.tanh %496 : vector<8x32xf32>
    %498 = arith.mulf %493, %497 : vector<8x32xf32>
    %499 = vector.extract_strided_slice %458 {offsets = [16, 0], sizes = [8, 128], strides = [1, 1]} : vector<40x128xf32> to vector<8x128xf32>
    %500 = arith.truncf %498 : vector<8x32xf32> to vector<8x32xbf16>
    %cst_77 = arith.constant dense<0.000000e+00> : vector<8x128xf32>
    %501 = tpu.matmul %500, %453, %cst_77 {dimension_numbers = #tpu.dot_dimension_numbers<[1], [0], [0], [1], [0, 0, 1, 1], [], []>} : vector<8x32xbf16>, vector<32x128xbf16>, vector<8x128xf32> -> vector<8x128xf32>
    %502 = arith.addf %499, %501 : vector<8x128xf32>
    %503 = math.tanh %502 : vector<8x128xf32>
    %504 = arith.negf %502 : vector<8x128xf32>
    %505 = math.exp %504 : vector<8x128xf32>
    %cst_78 = arith.constant 1.000000e+00 : f32
    %506 = vector.broadcast %cst_78 : f32 to vector<8x128xf32>
    %507 = arith.addf %506, %505 : vector<8x128xf32>
    %508 = arith.divf %506, %507 : vector<8x128xf32>
    %509 = arith.select %5, %503, %508 : vector<8x128xi1>, vector<8x128xf32>
    %510 = vector.extract_strided_slice %509 {offsets = [0, 0], sizes = [8, 32], strides = [1, 1]} : vector<8x128xf32> to vector<8x32xf32>
    %511 = vector.extract_strided_slice %509 {offsets = [0, 32], sizes = [8, 32], strides = [1, 1]} : vector<8x128xf32> to vector<8x32xf32>
    %512 = vector.extract_strided_slice %509 {offsets = [0, 64], sizes = [8, 32], strides = [1, 1]} : vector<8x128xf32> to vector<8x32xf32>
    %513 = vector.extract_strided_slice %509 {offsets = [0, 96], sizes = [8, 32], strides = [1, 1]} : vector<8x128xf32> to vector<8x32xf32>
    %514 = arith.mulf %511, %496 : vector<8x32xf32>
    %515 = arith.mulf %510, %512 : vector<8x32xf32>
    %516 = arith.addf %514, %515 : vector<8x32xf32>
    %517 = math.tanh %516 : vector<8x32xf32>
    %518 = arith.mulf %513, %517 : vector<8x32xf32>
    %519 = vector.extract_strided_slice %458 {offsets = [24, 0], sizes = [8, 128], strides = [1, 1]} : vector<40x128xf32> to vector<8x128xf32>
    %520 = arith.truncf %518 : vector<8x32xf32> to vector<8x32xbf16>
    %cst_79 = arith.constant dense<0.000000e+00> : vector<8x128xf32>
    %521 = tpu.matmul %520, %453, %cst_79 {dimension_numbers = #tpu.dot_dimension_numbers<[1], [0], [0], [1], [0, 0, 1, 1], [], []>} : vector<8x32xbf16>, vector<32x128xbf16>, vector<8x128xf32> -> vector<8x128xf32>
    %522 = arith.addf %519, %521 : vector<8x128xf32>
    %523 = math.tanh %522 : vector<8x128xf32>
    %524 = arith.negf %522 : vector<8x128xf32>
    %525 = math.exp %524 : vector<8x128xf32>
    %cst_80 = arith.constant 1.000000e+00 : f32
    %526 = vector.broadcast %cst_80 : f32 to vector<8x128xf32>
    %527 = arith.addf %526, %525 : vector<8x128xf32>
    %528 = arith.divf %526, %527 : vector<8x128xf32>
    %529 = arith.select %5, %523, %528 : vector<8x128xi1>, vector<8x128xf32>
    %530 = vector.extract_strided_slice %529 {offsets = [0, 0], sizes = [8, 32], strides = [1, 1]} : vector<8x128xf32> to vector<8x32xf32>
    %531 = vector.extract_strided_slice %529 {offsets = [0, 32], sizes = [8, 32], strides = [1, 1]} : vector<8x128xf32> to vector<8x32xf32>
    %532 = vector.extract_strided_slice %529 {offsets = [0, 64], sizes = [8, 32], strides = [1, 1]} : vector<8x128xf32> to vector<8x32xf32>
    %533 = vector.extract_strided_slice %529 {offsets = [0, 96], sizes = [8, 32], strides = [1, 1]} : vector<8x128xf32> to vector<8x32xf32>
    %534 = arith.mulf %531, %516 : vector<8x32xf32>
    %535 = arith.mulf %530, %532 : vector<8x32xf32>
    %536 = arith.addf %534, %535 : vector<8x32xf32>
    %537 = math.tanh %536 : vector<8x32xf32>
    %538 = arith.mulf %533, %537 : vector<8x32xf32>
    %539 = vector.extract_strided_slice %458 {offsets = [32, 0], sizes = [8, 128], strides = [1, 1]} : vector<40x128xf32> to vector<8x128xf32>
    %540 = arith.truncf %538 : vector<8x32xf32> to vector<8x32xbf16>
    %cst_81 = arith.constant dense<0.000000e+00> : vector<8x128xf32>
    %541 = tpu.matmul %540, %453, %cst_81 {dimension_numbers = #tpu.dot_dimension_numbers<[1], [0], [0], [1], [0, 0, 1, 1], [], []>} : vector<8x32xbf16>, vector<32x128xbf16>, vector<8x128xf32> -> vector<8x128xf32>
    %542 = arith.addf %539, %541 : vector<8x128xf32>
    %543 = math.tanh %542 : vector<8x128xf32>
    %544 = arith.negf %542 : vector<8x128xf32>
    %545 = math.exp %544 : vector<8x128xf32>
    %cst_82 = arith.constant 1.000000e+00 : f32
    %546 = vector.broadcast %cst_82 : f32 to vector<8x128xf32>
    %547 = arith.addf %546, %545 : vector<8x128xf32>
    %548 = arith.divf %546, %547 : vector<8x128xf32>
    %549 = arith.select %5, %543, %548 : vector<8x128xi1>, vector<8x128xf32>
    %550 = vector.extract_strided_slice %549 {offsets = [0, 0], sizes = [8, 32], strides = [1, 1]} : vector<8x128xf32> to vector<8x32xf32>
    %551 = vector.extract_strided_slice %549 {offsets = [0, 32], sizes = [8, 32], strides = [1, 1]} : vector<8x128xf32> to vector<8x32xf32>
    %552 = vector.extract_strided_slice %549 {offsets = [0, 64], sizes = [8, 32], strides = [1, 1]} : vector<8x128xf32> to vector<8x32xf32>
    %553 = vector.extract_strided_slice %549 {offsets = [0, 96], sizes = [8, 32], strides = [1, 1]} : vector<8x128xf32> to vector<8x32xf32>
    %554 = arith.mulf %551, %536 : vector<8x32xf32>
    %555 = arith.mulf %550, %552 : vector<8x32xf32>
    %556 = arith.addf %554, %555 : vector<8x32xf32>
    %557 = math.tanh %556 : vector<8x32xf32>
    %558 = arith.mulf %553, %557 : vector<8x32xf32>
    %559 = arith.truncf %558 : vector<8x32xf32> to vector<8x32xbf16>
    %c0_83 = arith.constant 0 : index
    %c0_84 = arith.constant 0 : index
    %560 = vector.load %arg14[%c0_83, %c0_84] : memref<32x1xbf16, #tpu.memory_space<vmem>>, vector<32x1xbf16>
    %cst_85 = arith.constant dense<0.000000e+00> : vector<8x1xf32>
    %561 = tpu.matmul %559, %560, %cst_85 {dimension_numbers = #tpu.dot_dimension_numbers<[1], [0], [0], [1], [0, 0, 1, 1], [], []>} : vector<8x32xbf16>, vector<32x1xbf16>, vector<8x1xf32> -> vector<8x1xf32>
    %c0_86 = arith.constant 0 : index
    %c0_87 = arith.constant 0 : index
    %562 = vector.load %arg15[%c0_86, %c0_87] : memref<1x1xf32, #tpu.memory_space<vmem>>, vector<1x1xf32>
    %563 = vector.broadcast %562 : vector<1x1xf32> to vector<8x1xf32>
    %564 = arith.addf %561, %563 : vector<8x1xf32>
    %c0_88 = arith.constant 0 : index
    %c0_89 = arith.constant 0 : index
    %565 = vector.load %arg16[%c0_88, %c0_89] : memref<8x1xf32, #tpu.memory_space<vmem>>, vector<8x1xf32>
    tpu.vector_store %arg16[%c0_88, %c0_89], %564 {strides = array<i32>} : memref<8x1xf32, #tpu.memory_space<vmem>>, vector<8x1xf32>,
    return
  }
}

</mosaic_0001>

<llo_original>
// kernel: lstm_model_forward.1
$region0: #{lstm_model_forward.1}
  #allocation0 [shape = 'u32[]', space=smem, size = 0x4, offset = 0x4, fixed_abs, tag = 'smem constant byte address 0x4 - core index']
  #allocation1 [shape = 'u32[144,128]{1,0:T(1,128)}', space=vmem, size = 0x12000, scoped, tag = 'internal scratch']
  #allocation2 [shape = 'f32[1,1]{1,0:T(1,128)S(1)}', space=vmem, size = 0x200, scoped, tag = 'scoped memory for lstm_model_forward.1']
  %s0 = inlined_call_operand.vmem [shape: f32[64,4], index: 0, kind: input, shape index: {}]
  %s1 = inlined_call_operand.vmem [shape: f32[40,4], index: 1, kind: input, shape index: {}]
  %s2 = inlined_call_operand.vmem [shape: bf16[4,128], index: 2, kind: input, shape index: {}]
  %s3 = inlined_call_operand.vmem [shape: bf16[32,128], index: 3, kind: input, shape index: {}]
  %s4 = inlined_call_operand.vmem [shape: f32[1,128], index: 4, kind: input, shape index: {}]
  %s5 = inlined_call_operand.vmem [shape: bf16[32,128], index: 5, kind: input, shape index: {}]
  %s6 = inlined_call_operand.vmem [shape: bf16[32,128], index: 6, kind: input, shape index: {}]
  %s7 = inlined_call_operand.vmem [shape: f32[1,128], index: 7, kind: input, shape index: {}]
  %s8 = inlined_call_operand.vmem [shape: bf16[4,128], index: 8, kind: input, shape index: {}]
  %s9 = inlined_call_operand.vmem [shape: bf16[32,128], index: 9, kind: input, shape index: {}]
  %s10 = inlined_call_operand.vmem [shape: f32[1,128], index: 10, kind: input, shape index: {}]
  %s11 = inlined_call_operand.vmem [shape: bf16[32,128], index: 11, kind: input, shape index: {}]
  %s12 = inlined_call_operand.vmem [shape: bf16[32,128], index: 12, kind: input, shape index: {}]
  %s13 = inlined_call_operand.vmem [shape: f32[1,128], index: 13, kind: input, shape index: {}]
  %s14 = inlined_call_operand.vmem [shape: bf16[32,1], index: 14, kind: input, shape index: {}]
  %s15 = inlined_call_operand.<no memory space> [shape: f32[1,1], index: 15, kind: input, shape index: {}]
  %s16 = inlined_call_operand.vmem [shape: f32[8,1], index: 16, kind: output, shape index: {}]
  %s17 = sld [smem:[#allocation0]]
  $region74: #{lstm_model_forward.1} parent=0
    _
  %s19 = ssub.s32 1, %s17
  %s20 = scalar_select 0, %s19, %s17
  %v21 = vstv %s15
  %22 = vst [vmem:[#allocation2] sm:$0x1] %v21
  // Predicated region
  $region2: #{lstm_model_forward.1} parent=0 // pred_check
    _
  $region3: #{lstm_model_forward.1} parent=0 // pred_check_branch
    %24 = sbr.rel (0) target = $region5
  $region4: #{lstm_model_forward.1} parent=0 // pred_region
    _
  $region5: #{lstm_model_forward.1} parent=0 // pred_fallthru
    _
  // Predicated region
  $region6: #{lstm_model_forward.1} parent=0 // pred_check
    _
  $region7: #{lstm_model_forward.1} parent=0 // pred_check_branch
    %26 = sbr.rel (0) target = $region9
  $region8: #{lstm_model_forward.1} parent=0 // pred_region
    _
  $region9: #{lstm_model_forward.1} parent=0 // pred_fallthru
    _
  // Predicated region
  $region10: #{lstm_model_forward.1} parent=0 // pred_check
    _
  $region11: #{lstm_model_forward.1} parent=0 // pred_check_branch
    %28 = sbr.rel (0) target = $region13
  $region12: #{lstm_model_forward.1} parent=0 // pred_region
    _
  $region13: #{lstm_model_forward.1} parent=0 // pred_fallthru
    _
  // Predicated region
  $region14: #{lstm_model_forward.1} parent=0 // pred_check
    _
  $region15: #{lstm_model_forward.1} parent=0 // pred_check_branch
    %30 = sbr.rel (0) target = $region17
  $region16: #{lstm_model_forward.1} parent=0 // pred_region
    _
  $region17: #{lstm_model_forward.1} parent=0 // pred_fallthru
    _
  // Predicated region
  $region18: #{lstm_model_forward.1} parent=0 // pred_check
    _
  $region19: #{lstm_model_forward.1} parent=0 // pred_check_branch
    %32 = sbr.rel (0) target = $region21
  $region20: #{lstm_model_forward.1} parent=0 // pred_region
    _
  $region21: #{lstm_model_forward.1} parent=0 // pred_fallthru
    _
  // Predicated region
  $region22: #{lstm_model_forward.1} parent=0 // pred_check
    _
  $region23: #{lstm_model_forward.1} parent=0 // pred_check_branch
    %34 = sbr.rel (0) target = $region25
  $region24: #{lstm_model_forward.1} parent=0 // pred_region
    _
  $region25: #{lstm_model_forward.1} parent=0 // pred_fallthru
    _
  // Predicated region
  $region26: #{lstm_model_forward.1} parent=0 // pred_check
    _
  $region27: #{lstm_model_forward.1} parent=0 // pred_check_branch
    %36 = sbr.rel (0) target = $region29
  $region28: #{lstm_model_forward.1} parent=0 // pred_region
    _
  $region29: #{lstm_model_forward.1} parent=0 // pred_fallthru
    _
  // Predicated region
  $region30: #{lstm_model_forward.1} parent=0 // pred_check
    _
  $region31: #{lstm_model_forward.1} parent=0 // pred_check_branch
    %38 = sbr.rel (0) target = $region33
  $region32: #{lstm_model_forward.1} parent=0 // pred_region
    _
  $region33: #{lstm_model_forward.1} parent=0 // pred_fallthru
    _
  // Predicated region
  $region34: #{lstm_model_forward.1} parent=0 // pred_check
    _
  $region35: #{lstm_model_forward.1} parent=0 // pred_check_branch
    %40 = sbr.rel (0) target = $region37
  $region36: #{lstm_model_forward.1} parent=0 // pred_region
    _
  $region37: #{lstm_model_forward.1} parent=0 // pred_fallthru
    _
  // Predicated region
  $region38: #{lstm_model_forward.1} parent=0 // pred_check
    _
  $region39: #{lstm_model_forward.1} parent=0 // pred_check_branch
    %42 = sbr.rel (0) target = $region41
  $region40: #{lstm_model_forward.1} parent=0 // pred_region
    _
  $region41: #{lstm_model_forward.1} parent=0 // pred_fallthru
    _
  // Predicated region
  $region42: #{lstm_model_forward.1} parent=0 // pred_check
    _
  $region43: #{lstm_model_forward.1} parent=0 // pred_check_branch
    %44 = sbr.rel (0) target = $region45
  $region44: #{lstm_model_forward.1} parent=0 // pred_region
    _
  $region45: #{lstm_model_forward.1} parent=0 // pred_fallthru
    _
  // Predicated region
  $region46: #{lstm_model_forward.1} parent=0 // pred_check
    _
  $region47: #{lstm_model_forward.1} parent=0 // pred_check_branch
    %46 = sbr.rel (0) target = $region49
  $region48: #{lstm_model_forward.1} parent=0 // pred_region
    _
  $region49: #{lstm_model_forward.1} parent=0 // pred_fallthru
    _
  // Predicated region
  $region50: #{lstm_model_forward.1} parent=0 // pred_check
    _
  $region51: #{lstm_model_forward.1} parent=0 // pred_check_branch
    %48 = sbr.rel (0) target = $region53
  $region52: #{lstm_model_forward.1} parent=0 // pred_region
    _
  $region53: #{lstm_model_forward.1} parent=0 // pred_fallthru
    _
  // Predicated region
  $region54: #{lstm_model_forward.1} parent=0 // pred_check
    _
  $region55: #{lstm_model_forward.1} parent=0 // pred_check_branch
    %50 = sbr.rel (0) target = $region57
  $region56: #{lstm_model_forward.1} parent=0 // pred_region
    _
  $region57: #{lstm_model_forward.1} parent=0 // pred_fallthru
    _
  // Predicated region
  $region58: #{lstm_model_forward.1} parent=0 // pred_check
    _
  $region59: #{lstm_model_forward.1} parent=0 // pred_check_branch
    %52 = sbr.rel (0) target = $region61
  $region60: #{lstm_model_forward.1} parent=0 // pred_region
    _
  $region61: #{lstm_model_forward.1} parent=0 // pred_fallthru
    _
  // Predicated region
  $region62: #{lstm_model_forward.1} parent=0 // pred_check
    _
  $region63: #{lstm_model_forward.1} parent=0 // pred_check_branch
    %54 = sbr.rel (0) target = $region65
  $region64: #{lstm_model_forward.1} parent=0 // pred_region
    _
  $region65: #{lstm_model_forward.1} parent=0 // pred_fallthru
    _
  %v56 = vlaneseq
  %v57 = vand.u32 %v56, 127
  %vm58 = vcmp.ge.s32.totalorder %v57, 64
  %vm59 = vcmp.lt.s32.totalorder %v57, 96
  %vm60 = vmand %vm58, %vm59
  %v61 = vld [vmem:[%s0] sm:$0xff]
  %v62 = vld [vmem:[%s0 + $0x8] sm:$0xff]
  %v63 = vld [vmem:[%s0 + $0x10] sm:$0xff]
  %v64 = vld [vmem:[%s0 + $0x18] sm:$0xff]
  %v65 = vld [vmem:[%s0 + $0x20] sm:$0xff]
  %v66 = vld [vmem:[%s0 + $0x28] sm:$0xff]
  %v67 = vld [vmem:[%s0 + $0x30] sm:$0xff]
  %v68 = vld [vmem:[%s0 + $0x38] sm:$0xff]
  %v69 = vld [vmem:[%s2] sm:$0x3]
  %v70 = vld [vmem:[%s3] sm:$0xf]
  %v71 = vld [vmem:[%s3 + $0x4] sm:$0xf]
  %v72 = vld [vmem:[%s3 + $0x8] sm:$0xf]
  %v73 = vld [vmem:[%s3 + $0xc] sm:$0xf]
  %v74 = vld [vmem:[%s4] sm:$0x1]
  %v75 = vpack.c.bf16 %v62, %v61
  %v76 = vpack.c.bf16 %v64, %v63
  %v77 = vpack.c.bf16 %v66, %v65
  %v78 = vpack.c.bf16 %v68, %v67
  %v80 = vlaneseq
  %v81 = vshrl.u32 %v80, 7
  %v82 = vsub.s32 0, %v81
  %v83 = vrot.slane %v74, %v82
  %vm85 = vcmask 31744
  %v87 = vsel %vm85, %v75, 0
  %v90 = vsel %vm85, %v76, 0
  %v93 = vsel %vm85, %v77, 0
  %v96 = vsel %vm85, %v78, 0
  %vm98 = vcmask 1041408
  %v100 = vsel %vm98, %v69, 0
  %102 = vmatprep.subr.bf16.mxu0 0
  %103 = vmatpush1.bf16.msra.mxu0 0
  %104 = vmatprep.subr.bf16.mxu0 0
  %105 = vmatpush1.bf16.msra.mxu0 0
  %106 = vmatprep.subr.bf16.mxu0 0
  %107 = vmatpush1.bf16.msra.mxu0 0
  %108 = vmatprep.subr.bf16.mxu0 0
  %109 = vmatpush1.bf16.msra.mxu0 0
  %110 = vmatprep.subr.bf16.mxu0 0
  %111 = vmatpush1.bf16.msra.mxu0 0
  %112 = vmatprep.subr.bf16.mxu0 0
  %113 = vmatpush1.bf16.msra.mxu0 0
  %114 = vmatprep.subr.bf16.mxu0 0
  %115 = vmatpush1.bf16.msra.mxu0 0
  %116 = vmatprep.subr.bf16.mxu0 0
  %117 = vmatpush1.bf16.msra.mxu0 %v100
  %118 = vmatprep.subr.bf16.mxu0 0
  %119 = vmatpush2.bf16.msra.mxu0 0
  %120 = vmatprep.subr.bf16.mxu0 0
  %121 = vmatpush2.bf16.msra.mxu0 0
  %122 = vmatprep.subr.bf16.mxu0 0
  %123 = vmatpush2.bf16.msra.mxu0 0
  %124 = vmatprep.subr.bf16.mxu0 0
  %125 = vmatpush2.bf16.msra.mxu0 0
  %126 = vmatprep.subr.bf16.mxu0 0
  %127 = vmatpush2.bf16.msra.mxu0 0
  %128 = vmatprep.subr.bf16.mxu0 0
  %129 = vmatpush2.bf16.msra.mxu0 0
  %130 = vmatprep.subr.bf16.mxu0 0
  %131 = vmatpush2.bf16.msra.mxu0 0
  %132 = vmatprep.subr.bf16.mxu0 0
  %133 = vmatpush2.bf16.msra.mxu0 0
  %134 = vmatprep.mubr.bf16.mxu0 0
  %135 = vmatmul.mubr.bf16.gmra.mxu0 %v87
  %v136 = vpop.f32.mrf.mxu0
  %v137 = vadd.f32 %v83, %v136
  %v138 = vpop.f32.mrf.mxu0
  %v139 = vpop.f32.mrf.mxu0
  %v140 = vadd.f32 %v83, %v139
  %v141 = vpop.f32.mrf.mxu0
  %142 = vmatprep.mubr.bf16.mxu0 0
  %143 = vmatmul.mubr.bf16.gmra.mxu0 %v90
  %v144 = vpop.f32.mrf.mxu0
  %v145 = vadd.f32 %v83, %v144
  %v146 = vpop.f32.mrf.mxu0
  %v147 = vpop.f32.mrf.mxu0
  %v148 = vadd.f32 %v83, %v147
  %v149 = vpop.f32.mrf.mxu0
  %150 = vmatprep.mubr.bf16.mxu0 0
  %151 = vmatmul.mubr.bf16.gmra.mxu0 %v93
  %v152 = vpop.f32.mrf.mxu0
  %v153 = vadd.f32 %v83, %v152
  %v154 = vpop.f32.mrf.mxu0
  %v155 = vpop.f32.mrf.mxu0
  %v156 = vadd.f32 %v83, %v155
  %v157 = vpop.f32.mrf.mxu0
  %158 = vmatprep.mubr.bf16.mxu0 0
  %159 = vmatmul.mubr.bf16.gmra.mxu0 %v96
  %v160 = vpop.f32.mrf.mxu0
  %v161 = vadd.f32 %v83, %v160
  %v162 = vpop.f32.mrf.mxu0
  %v163 = vpop.f32.mrf.mxu0
  %v164 = vadd.f32 %v83, %v163
  %v165 = vpop.f32.mrf.mxu0
  %166 = vdwg.mxu0
  %v171 = vunpack.c.l.b16 %v70
  %v172 = vunpack.c.l.b16 %v71
  %v173 = vunpack.c.l.b16 %v72
  %v174 = vunpack.c.l.b16 %v73
  %v175 = vpack.c.b16 %v172, %v171
  %v176 = vpack.c.b16 %v174, %v173
  %vm179 = vcmask 261120
  %v181 = vsel %vm179, 0, 0
  %183 = vmatprep.subr.bf16.mxu0 0
  %184 = vmatpush1.bf16.msra.mxu0 0
  %185 = vmatprep.subr.bf16.mxu0 0
  %186 = vmatpush1.bf16.msra.mxu0 0
  %187 = vmatprep.subr.bf16.mxu0 0
  %188 = vmatpush1.bf16.msra.mxu0 0
  %189 = vmatprep.subr.bf16.mxu0 0
  %190 = vmatpush1.bf16.msra.mxu0 0
  %191 = vmatprep.subr.bf16.mxu0 0
  %192 = vmatpush1.bf16.msra.mxu0 0
  %193 = vmatprep.subr.bf16.mxu0 0
  %194 = vmatpush1.bf16.msra.mxu0 0
  %195 = vmatprep.subr.bf16.mxu0 0
  %196 = vmatpush1.bf16.msra.mxu0 %v176
  %197 = vmatprep.subr.bf16.mxu0 0
  %198 = vmatpush1.bf16.msra.mxu0 %v175
  %199 = vmatprep.subr.bf16.mxu0 0
  %200 = vmatpush2.bf16.msra.mxu0 0
  %201 = vmatprep.subr.bf16.mxu0 0
  %202 = vmatpush2.bf16.msra.mxu0 0
  %203 = vmatprep.subr.bf16.mxu0 0
  %204 = vmatpush2.bf16.msra.mxu0 0
  %205 = vmatprep.subr.bf16.mxu0 0
  %206 = vmatpush2.bf16.msra.mxu0 0
  %207 = vmatprep.subr.bf16.mxu0 0
  %208 = vmatpush2.bf16.msra.mxu0 0
  %209 = vmatprep.subr.bf16.mxu0 0
  %210 = vmatpush2.bf16.msra.mxu0 0
  %211 = vmatprep.subr.bf16.mxu0 0
  %212 = vmatpush2.bf16.msra.mxu0 0
  %213 = vmatprep.subr.bf16.mxu0 0
  %214 = vmatpush2.bf16.msra.mxu0 0
  %215 = vmatprep.mubr.bf16.mxu0 0
  %216 = vmatmul.mubr.bf16.gmra.mxu0 %v181
  %v217 = vpop.f32.mrf.mxu0
  %v218 = vadd.f32 0.0, %v217
  %v219 = vpop.f32.mrf.mxu0
  %v220 = vpop.f32.mrf.mxu0
  %v221 = vpop.f32.mrf.mxu0
  %222 = vdwg.mxu0
  %v223 = vadd.f32 %v137, %v218
  %v224 = vtanh.pop %v223
  %v225 = vxor.u32 %v223, 2147483648
  %v226 = vmul.f32 %v225, 1.442695
  %v227 = vpow.pop %v226
  %v228 = vadd.f32 %v227, 1.0
  %v229 = vrcp.pop %v228
  %v230 = vmul.f32 1.0, %v229
  %v231 = vsel %vm60, %v224, %v230
  %v232 = vmul.f32 %v231, 0.0
  %234 = vrot.lane.b32.xlu0 %v231, 64
  %v235 = vpop.permute.xlu0 %234
  %v237 = vmul.f32 %v231, %v235
  %239 = vrot.lane.b32.xlu0 %v237, 32
  %v240 = vpop.permute.xlu0 %239
  %v242 = vadd.f32 %v232, %v240
  %v243 = vtanh.pop %v242
  %245 = vrot.lane.b32.xlu0 %v243, 64
  %v246 = vpop.permute.xlu0 %245
  %v248 = vmul.f32 %v231, %v246
  %v249 = vpack.c.bf16 %v248, %v248
  %251 = vrot.lane.b32.xlu0 %v249, 32
  %v252 = vpop.permute.xlu0 %251
  %v254 = vsel %vm179, %v252, 0
  %256 = vmatprep.subr.bf16.mxu0 0
  %257 = vmatpush1.bf16.msra.mxu0 0
  %258 = vmatprep.subr.bf16.mxu0 0
  %259 = vmatpush1.bf16.msra.mxu0 0
  %260 = vmatprep.subr.bf16.mxu0 0
  %261 = vmatpush1.bf16.msra.mxu0 0
  %262 = vmatprep.subr.bf16.mxu0 0
  %263 = vmatpush1.bf16.msra.mxu0 0
  %264 = vmatprep.subr.bf16.mxu0 0
  %265 = vmatpush1.bf16.msra.mxu0 0
  %266 = vmatprep.subr.bf16.mxu0 0
  %267 = vmatpush1.bf16.msra.mxu0 0
  %268 = vmatprep.subr.bf16.mxu0 0
  %269 = vmatpush1.bf16.msra.mxu0 %v176
  %270 = vmatprep.subr.bf16.mxu0 0
  %271 = vmatpush1.bf16.msra.mxu0 %v175
  %272 = vmatprep.subr.bf16.mxu0 0
  %273 = vmatpush2.bf16.msra.mxu0 0
  %274 = vmatprep.subr.bf16.mxu0 0
  %275 = vmatpush2.bf16.msra.mxu0 0
  %276 = vmatprep.subr.bf16.mxu0 0
  %277 = vmatpush2.bf16.msra.mxu0 0
  %278 = vmatprep.subr.bf16.mxu0 0
  %279 = vmatpush2.bf16.msra.mxu0 0
  %280 = vmatprep.subr.bf16.mxu0 0
  %281 = vmatpush2.bf16.msra.mxu0 0
  %282 = vmatprep.subr.bf16.mxu0 0
  %283 = vmatpush2.bf16.msra.mxu0 0
  %284 = vmatprep.subr.bf16.mxu0 0
  %285 = vmatpush2.bf16.msra.mxu0 0
  %286 = vmatprep.subr.bf16.mxu0 0
  %287 = vmatpush2.bf16.msra.mxu0 0
  %288 = vmatprep.mubr.bf16.mxu0 0
  %289 = vmatmul.mubr.bf16.gmra.mxu0 %v254
  %v290 = vpop.f32.mrf.mxu0
  %v291 = vadd.f32 0.0, %v290
  %v292 = vpop.f32.mrf.mxu0
  %v293 = vpop.f32.mrf.mxu0
  %v294 = vpop.f32.mrf.mxu0
  %295 = vdwg.mxu0
  %v296 = vadd.f32 %v140, %v291
  %v297 = vtanh.pop %v296
  %v298 = vxor.u32 %v296, 2147483648
  %v299 = vmul.f32 %v298, 1.442695
  %v300 = vpow.pop %v299
  %v301 = vadd.f32 %v300, 1.0
  %v302 = vrcp.pop %v301
  %v303 = vmul.f32 1.0, %v302
  %v304 = vsel %vm60, %v297, %v303
  %v305 = vmul.f32 %v304, %v242
  %307 = vrot.lane.b32.xlu0 %v304, 64
  %v308 = vpop.permute.xlu0 %307
  %v310 = vmul.f32 %v304, %v308
  %312 = vrot.lane.b32.xlu0 %v310, 32
  %v313 = vpop.permute.xlu0 %312
  %v315 = vadd.f32 %v305, %v313
  %v316 = vtanh.pop %v315
  %318 = vrot.lane.b32.xlu0 %v316, 64
  %v319 = vpop.permute.xlu0 %318
  %v321 = vmul.f32 %v304, %v319
  %v322 = vpack.c.bf16 %v321, %v321
  %324 = vrot.lane.b32.xlu0 %v322, 32
  %v325 = vpop.permute.xlu0 %324
  %v327 = vsel %vm179, %v325, 0
  %329 = vmatprep.subr.bf16.mxu0 0
  %330 = vmatpush1.bf16.msra.mxu0 0
  %331 = vmatprep.subr.bf16.mxu0 0
  %332 = vmatpush1.bf16.msra.mxu0 0
  %333 = vmatprep.subr.bf16.mxu0 0
  %334 = vmatpush1.bf16.msra.mxu0 0
  %335 = vmatprep.subr.bf16.mxu0 0
  %336 = vmatpush1.bf16.msra.mxu0 0
  %337 = vmatprep.subr.bf16.mxu0 0
  %338 = vmatpush1.bf16.msra.mxu0 0
  %339 = vmatprep.subr.bf16.mxu0 0
  %340 = vmatpush1.bf16.msra.mxu0 0
  %341 = vmatprep.subr.bf16.mxu0 0
  %342 = vmatpush1.bf16.msra.mxu0 %v176
  %343 = vmatprep.subr.bf16.mxu0 0
  %344 = vmatpush1.bf16.msra.mxu0 %v175
  %345 = vmatprep.subr.bf16.mxu0 0
  %346 = vmatpush2.bf16.msra.mxu0 0
  %347 = vmatprep.subr.bf16.mxu0 0
  %348 = vmatpush2.bf16.msra.mxu0 0
  %349 = vmatprep.subr.bf16.mxu0 0
  %350 = vmatpush2.bf16.msra.mxu0 0
  %351 = vmatprep.subr.bf16.mxu0 0
  %352 = vmatpush2.bf16.msra.mxu0 0
  %353 = vmatprep.subr.bf16.mxu0 0
  %354 = vmatpush2.bf16.msra.mxu0 0
  %355 = vmatprep.subr.bf16.mxu0 0
  %356 = vmatpush2.bf16.msra.mxu0 0
  %357 = vmatprep.subr.bf16.mxu0 0
  %358 = vmatpush2.bf16.msra.mxu0 0
  %359 = vmatprep.subr.bf16.mxu0 0
  %360 = vmatpush2.bf16.msra.mxu0 0
  %361 = vmatprep.mubr.bf16.mxu0 0
  %362 = vmatmul.mubr.bf16.gmra.mxu0 %v327
  %v363 = vpop.f32.mrf.mxu0
  %v364 = vadd.f32 0.0, %v363
  %v365 = vpop.f32.mrf.mxu0
  %v366 = vpop.f32.mrf.mxu0
  %v367 = vpop.f32.mrf.mxu0
  %368 = vdwg.mxu0
  %v369 = vadd.f32 %v145, %v364
  %v370 = vtanh.pop %v369
  %v371 = vxor.u32 %v369, 2147483648
  %v372 = vmul.f32 %v371, 1.442695
  %v373 = vpow.pop %v372
  %v374 = vadd.f32 %v373, 1.0
  %v375 = vrcp.pop %v374
  %v376 = vmul.f32 1.0, %v375
  %v377 = vsel %vm60, %v370, %v376
  %v378 = vmul.f32 %v377, %v315
  %380 = vrot.lane.b32.xlu0 %v377, 64
  %v381 = vpop.permute.xlu0 %380
  %v383 = vmul.f32 %v377, %v381
  %385 = vrot.lane.b32.xlu0 %v383, 32
  %v386 = vpop.permute.xlu0 %385
  %v388 = vadd.f32 %v378, %v386
  %v389 = vtanh.pop %v388
  %391 = vrot.lane.b32.xlu0 %v389, 64
  %v392 = vpop.permute.xlu0 %391
  %v394 = vmul.f32 %v377, %v392
  %v395 = vpack.c.bf16 %v394, %v394
  %397 = vrot.lane.b32.xlu0 %v395, 32
  %v398 = vpop.permute.xlu0 %397
  %v400 = vsel %vm179, %v398, 0
  %402 = vmatprep.subr.bf16.mxu0 0
  %403 = vmatpush1.bf16.msra.mxu0 0
  %404 = vmatprep.subr.bf16.mxu0 0
  %405 = vmatpush1.bf16.msra.mxu0 0
  %406 = vmatprep.subr.bf16.mxu0 0
  %407 = vmatpush1.bf16.msra.mxu0 0
  %408 = vmatprep.subr.bf16.mxu0 0
  %409 = vmatpush1.bf16.msra.mxu0 0
  %410 = vmatprep.subr.bf16.mxu0 0
  %411 = vmatpush1.bf16.msra.mxu0 0
  %412 = vmatprep.subr.bf16.mxu0 0
  %413 = vmatpush1.bf16.msra.mxu0 0
  %414 = vmatprep.subr.bf16.mxu0 0
  %415 = vmatpush1.bf16.msra.mxu0 %v176
  %416 = vmatprep.subr.bf16.mxu0 0
  %417 = vmatpush1.bf16.msra.mxu0 %v175
  %418 = vmatprep.subr.bf16.mxu0 0
  %419 = vmatpush2.bf16.msra.mxu0 0
  %420 = vmatprep.subr.bf16.mxu0 0
  %421 = vmatpush2.bf16.msra.mxu0 0
  %422 = vmatprep.subr.bf16.mxu0 0
  %423 = vmatpush2.bf16.msra.mxu0 0
  %424 = vmatprep.subr.bf16.mxu0 0
  %425 = vmatpush2.bf16.msra.mxu0 0
  %426 = vmatprep.subr.bf16.mxu0 0
  %427 = vmatpush2.bf16.msra.mxu0 0
  %428 = vmatprep.subr.bf16.mxu0 0
  %429 = vmatpush2.bf16.msra.mxu0 0
  %430 = vmatprep.subr.bf16.mxu0 0
  %431 = vmatpush2.bf16.msra.mxu0 0
  %432 = vmatprep.subr.bf16.mxu0 0
  %433 = vmatpush2.bf16.msra.mxu0 0
  %434 = vmatprep.mubr.bf16.mxu0 0
  %435 = vmatmul.mubr.bf16.gmra.mxu0 %v400
  %v436 = vpop.f32.mrf.mxu0
  %v437 = vadd.f32 0.0, %v436
  %v438 = vpop.f32.mrf.mxu0
  %v439 = vpop.f32.mrf.mxu0
  %v440 = vpop.f32.mrf.mxu0
  %441 = vdwg.mxu0
  %v442 = vadd.f32 %v148, %v437
  %v443 = vtanh.pop %v442
  %v444 = vxor.u32 %v442, 2147483648
  %v445 = vmul.f32 %v444, 1.442695
  %v446 = vpow.pop %v445
  %v447 = vadd.f32 %v446, 1.0
  %v448 = vrcp.pop %v447
  %v449 = vmul.f32 1.0, %v448
  %v450 = vsel %vm60, %v443, %v449
  %v451 = vmul.f32 %v450, %v388
  %453 = vrot.lane.b32.xlu0 %v450, 64
  %v454 = vpop.permute.xlu0 %453
  %v456 = vmul.f32 %v450, %v454
  %458 = vrot.lane.b32.xlu0 %v456, 32
  %v459 = vpop.permute.xlu0 %458
  %v461 = vadd.f32 %v451, %v459
  %v462 = vtanh.pop %v461
  %464 = vrot.lane.b32.xlu0 %v462, 64
  %v465 = vpop.permute.xlu0 %464
  %v467 = vmul.f32 %v450, %v465
  %v468 = vpack.c.bf16 %v467, %v467
  %470 = vrot.lane.b32.xlu0 %v468, 32
  %v471 = vpop.permute.xlu0 %470
  %v473 = vsel %vm179, %v471, 0
  %475 = vmatprep.subr.bf16.mxu0 0
  %476 = vmatpush1.bf16.msra.mxu0 0
  %477 = vmatprep.subr.bf16.mxu0 0
  %478 = vmatpush1.bf16.msra.mxu0 0
  %479 = vmatprep.subr.bf16.mxu0 0
  %480 = vmatpush1.bf16.msra.mxu0 0
  %481 = vmatprep.subr.bf16.mxu0 0
  %482 = vmatpush1.bf16.msra.mxu0 0
  %483 = vmatprep.subr.bf16.mxu0 0
  %484 = vmatpush1.bf16.msra.mxu0 0
  %485 = vmatprep.subr.bf16.mxu0 0
  %486 = vmatpush1.bf16.msra.mxu0 0
  %487 = vmatprep.subr.bf16.mxu0 0
  %488 = vmatpush1.bf16.msra.mxu0 %v176
  %489 = vmatprep.subr.bf16.mxu0 0
  %490 = vmatpush1.bf16.msra.mxu0 %v175
  %491 = vmatprep.subr.bf16.mxu0 0
  %492 = vmatpush2.bf16.msra.mxu0 0
  %493 = vmatprep.subr.bf16.mxu0 0
  %494 = vmatpush2.bf16.msra.mxu0 0
  %495 = vmatprep.subr.bf16.mxu0 0
  %496 = vmatpush2.bf16.msra.mxu0 0
  %497 = vmatprep.subr.bf16.mxu0 0
  %498 = vmatpush2.bf16.msra.mxu0 0
  %499 = vmatprep.subr.bf16.mxu0 0
  %500 = vmatpush2.bf16.msra.mxu0 0
  %501 = vmatprep.subr.bf16.mxu0 0
  %502 = vmatpush2.bf16.msra.mxu0 0
  %503 = vmatprep.subr.bf16.mxu0 0
  %504 = vmatpush2.bf16.msra.mxu0 0
  %505 = vmatprep.subr.bf16.mxu0 0
  %506 = vmatpush2.bf16.msra.mxu0 0
  %507 = vmatprep.mubr.bf16.mxu0 0
  %508 = vmatmul.mubr.bf16.gmra.mxu0 %v473
  %v509 = vpop.f32.mrf.mxu0
  %v510 = vadd.f32 0.0, %v509
  %v511 = vpop.f32.mrf.mxu0
  %v512 = vpop.f32.mrf.mxu0
  %v513 = vpop.f32.mrf.mxu0
  %514 = vdwg.mxu0
  %v515 = vadd.f32 %v153, %v510
  %v516 = vtanh.pop %v515
  %v517 = vxor.u32 %v515, 2147483648
  %v518 = vmul.f32 %v517, 1.442695
  %v519 = vpow.pop %v518
  %v520 = vadd.f32 %v519, 1.0
  %v521 = vrcp.pop %v520
  %v522 = vmul.f32 1.0, %v521
  %v523 = vsel %vm60, %v516, %v522
  %v524 = vmul.f32 %v523, %v461
  %526 = vrot.lane.b32.xlu0 %v523, 64
  %v527 = vpop.permute.xlu0 %526
  %v529 = vmul.f32 %v523, %v527
  %531 = vrot.lane.b32.xlu0 %v529, 32
  %v532 = vpop.permute.xlu0 %531
  %v534 = vadd.f32 %v524, %v532
  %v535 = vtanh.pop %v534
  %537 = vrot.lane.b32.xlu0 %v535, 64
  %v538 = vpop.permute.xlu0 %537
  %v540 = vmul.f32 %v523, %v538
  %v541 = vpack.c.bf16 %v540, %v540
  %543 = vrot.lane.b32.xlu0 %v541, 32
  %v544 = vpop.permute.xlu0 %543
  %v546 = vsel %vm179, %v544, 0
  %548 = vmatprep.subr.bf16.mxu0 0
  %549 = vmatpush1.bf16.msra.mxu0 0
  %550 = vmatprep.subr.bf16.mxu0 0
  %551 = vmatpush1.bf16.msra.mxu0 0
  %552 = vmatprep.subr.bf16.mxu0 0
  %553 = vmatpush1.bf16.msra.mxu0 0
  %554 = vmatprep.subr.bf16.mxu0 0
  %555 = vmatpush1.bf16.msra.mxu0 0
  %556 = vmatprep.subr.bf16.mxu0 0
  %557 = vmatpush1.bf16.msra.mxu0 0
  %558 = vmatprep.subr.bf16.mxu0 0
  %559 = vmatpush1.bf16.msra.mxu0 0
  %560 = vmatprep.subr.bf16.mxu0 0
  %561 = vmatpush1.bf16.msra.mxu0 %v176
  %562 = vmatprep.subr.bf16.mxu0 0
  %563 = vmatpush1.bf16.msra.mxu0 %v175
  %564 = vmatprep.subr.bf16.mxu0 0
  %565 = vmatpush2.bf16.msra.mxu0 0
  %566 = vmatprep.subr.bf16.mxu0 0
  %567 = vmatpush2.bf16.msra.mxu0 0
  %568 = vmatprep.subr.bf16.mxu0 0
  %569 = vmatpush2.bf16.msra.mxu0 0
  %570 = vmatprep.subr.bf16.mxu0 0
  %571 = vmatpush2.bf16.msra.mxu0 0
  %572 = vmatprep.subr.bf16.mxu0 0
  %573 = vmatpush2.bf16.msra.mxu0 0
  %574 = vmatprep.subr.bf16.mxu0 0
  %575 = vmatpush2.bf16.msra.mxu0 0
  %576 = vmatprep.subr.bf16.mxu0 0
  %577 = vmatpush2.bf16.msra.mxu0 0
  %578 = vmatprep.subr.bf16.mxu0 0
  %579 = vmatpush2.bf16.msra.mxu0 0
  %580 = vmatprep.mubr.bf16.mxu0 0
  %581 = vmatmul.mubr.bf16.gmra.mxu0 %v546
  %v582 = vpop.f32.mrf.mxu0
  %v583 = vadd.f32 0.0, %v582
  %v584 = vpop.f32.mrf.mxu0
  %v585 = vpop.f32.mrf.mxu0
  %v586 = vpop.f32.mrf.mxu0
  %587 = vdwg.mxu0
  %v588 = vadd.f32 %v156, %v583
  %v589 = vtanh.pop %v588
  %v590 = vxor.u32 %v588, 2147483648
  %v591 = vmul.f32 %v590, 1.442695
  %v592 = vpow.pop %v591
  %v593 = vadd.f32 %v592, 1.0
  %v594 = vrcp.pop %v593
  %v595 = vmul.f32 1.0, %v594
  %v596 = vsel %vm60, %v589, %v595
  %v597 = vmul.f32 %v596, %v534
  %599 = vrot.lane.b32.xlu0 %v596, 64
  %v600 = vpop.permute.xlu0 %599
  %v602 = vmul.f32 %v596, %v600
  %604 = vrot.lane.b32.xlu0 %v602, 32
  %v605 = vpop.permute.xlu0 %604
  %v607 = vadd.f32 %v597, %v605
  %v608 = vtanh.pop %v607
  %610 = vrot.lane.b32.xlu0 %v608, 64
  %v611 = vpop.permute.xlu0 %610
  %v613 = vmul.f32 %v596, %v611
  %v614 = vpack.c.bf16 %v613, %v613
  %616 = vrot.lane.b32.xlu0 %v614, 32
  %v617 = vpop.permute.xlu0 %616
  %v619 = vsel %vm179, %v617, 0
  %621 = vmatprep.subr.bf16.mxu0 0
  %622 = vmatpush1.bf16.msra.mxu0 0
  %623 = vmatprep.subr.bf16.mxu0 0
  %624 = vmatpush1.bf16.msra.mxu0 0
  %625 = vmatprep.subr.bf16.mxu0 0
  %626 = vmatpush1.bf16.msra.mxu0 0
  %627 = vmatprep.subr.bf16.mxu0 0
  %628 = vmatpush1.bf16.msra.mxu0 0
  %629 = vmatprep.subr.bf16.mxu0 0
  %630 = vmatpush1.bf16.msra.mxu0 0
  %631 = vmatprep.subr.bf16.mxu0 0
  %632 = vmatpush1.bf16.msra.mxu0 0
  %633 = vmatprep.subr.bf16.mxu0 0
  %634 = vmatpush1.bf16.msra.mxu0 %v176
  %635 = vmatprep.subr.bf16.mxu0 0
  %636 = vmatpush1.bf16.msra.mxu0 %v175
  %637 = vmatprep.subr.bf16.mxu0 0
  %638 = vmatpush2.bf16.msra.mxu0 0
  %639 = vmatprep.subr.bf16.mxu0 0
  %640 = vmatpush2.bf16.msra.mxu0 0
  %641 = vmatprep.subr.bf16.mxu0 0
  %642 = vmatpush2.bf16.msra.mxu0 0
  %643 = vmatprep.subr.bf16.mxu0 0
  %644 = vmatpush2.bf16.msra.mxu0 0
  %645 = vmatprep.subr.bf16.mxu0 0
  %646 = vmatpush2.bf16.msra.mxu0 0
  %647 = vmatprep.subr.bf16.mxu0 0
  %648 = vmatpush2.bf16.msra.mxu0 0
  %649 = vmatprep.subr.bf16.mxu0 0
  %650 = vmatpush2.bf16.msra.mxu0 0
  %651 = vmatprep.subr.bf16.mxu0 0
  %652 = vmatpush2.bf16.msra.mxu0 0
  %653 = vmatprep.mubr.bf16.mxu0 0
  %654 = vmatmul.mubr.bf16.gmra.mxu0 %v619
  %v655 = vpop.f32.mrf.mxu0
  %v656 = vadd.f32 0.0, %v655
  %v657 = vpop.f32.mrf.mxu0
  %v658 = vpop.f32.mrf.mxu0
  %v659 = vpop.f32.mrf.mxu0
  %660 = vdwg.mxu0
  %v661 = vadd.f32 %v161, %v656
  %v662 = vtanh.pop %v661
  %v663 = vxor.u32 %v661, 2147483648
  %v664 = vmul.f32 %v663, 1.442695
  %v665 = vpow.pop %v664
  %v666 = vadd.f32 %v665, 1.0
  %v667 = vrcp.pop %v666
  %v668 = vmul.f32 1.0, %v667
  %v669 = vsel %vm60, %v662, %v668
  %v670 = vmul.f32 %v669, %v607
  %672 = vrot.lane.b32.xlu0 %v669, 64
  %v673 = vpop.permute.xlu0 %672
  %v675 = vmul.f32 %v669, %v673
  %677 = vrot.lane.b32.xlu0 %v675, 32
  %v678 = vpop.permute.xlu0 %677
  %v680 = vadd.f32 %v670, %v678
  %v681 = vtanh.pop %v680
  %683 = vrot.lane.b32.xlu0 %v681, 64
  %v684 = vpop.permute.xlu0 %683
  %v686 = vmul.f32 %v669, %v684
  %v687 = vpack.c.bf16 %v686, %v686
  %689 = vrot.lane.b32.xlu0 %v687, 32
  %v690 = vpop.permute.xlu0 %689
  %v692 = vsel %vm179, %v690, 0
  %694 = vmatprep.subr.bf16.mxu0 0
  %695 = vmatpush1.bf16.msra.mxu0 0
  %696 = vmatprep.subr.bf16.mxu0 0
  %697 = vmatpush1.bf16.msra.mxu0 0
  %698 = vmatprep.subr.bf16.mxu0 0
  %699 = vmatpush1.bf16.msra.mxu0 0
  %700 = vmatprep.subr.bf16.mxu0 0
  %701 = vmatpush1.bf16.msra.mxu0 0
  %702 = vmatprep.subr.bf16.mxu0 0
  %703 = vmatpush1.bf16.msra.mxu0 0
  %704 = vmatprep.subr.bf16.mxu0 0
  %705 = vmatpush1.bf16.msra.mxu0 0
  %706 = vmatprep.subr.bf16.mxu0 0
  %707 = vmatpush1.bf16.msra.mxu0 %v176
  %708 = vmatprep.subr.bf16.mxu0 0
  %709 = vmatpush1.bf16.msra.mxu0 %v175
  %710 = vmatprep.subr.bf16.mxu0 0
  %711 = vmatpush2.bf16.msra.mxu0 0
  %712 = vmatprep.subr.bf16.mxu0 0
  %713 = vmatpush2.bf16.msra.mxu0 0
  %714 = vmatprep.subr.bf16.mxu0 0
  %715 = vmatpush2.bf16.msra.mxu0 0
  %716 = vmatprep.subr.bf16.mxu0 0
  %717 = vmatpush2.bf16.msra.mxu0 0
  %718 = vmatprep.subr.bf16.mxu0 0
  %719 = vmatpush2.bf16.msra.mxu0 0
  %720 = vmatprep.subr.bf16.mxu0 0
  %721 = vmatpush2.bf16.msra.mxu0 0
  %722 = vmatprep.subr.bf16.mxu0 0
  %723 = vmatpush2.bf16.msra.mxu0 0
  %724 = vmatprep.subr.bf16.mxu0 0
  %725 = vmatpush2.bf16.msra.mxu0 0
  %726 = vmatprep.mubr.bf16.mxu0 0
  %727 = vmatmul.mubr.bf16.gmra.mxu0 %v692
  %v728 = vpop.f32.mrf.mxu0
  %v729 = vadd.f32 0.0, %v728
  %v730 = vpop.f32.mrf.mxu0
  %v731 = vpop.f32.mrf.mxu0
  %v732 = vpop.f32.mrf.mxu0
  %733 = vdwg.mxu0
  %v734 = vadd.f32 %v164, %v729
  %v735 = vtanh.pop %v734
  %v736 = vxor.u32 %v734, 2147483648
  %v737 = vmul.f32 %v736, 1.442695
  %v738 = vpow.pop %v737
  %v739 = vadd.f32 %v738, 1.0
  %v740 = vrcp.pop %v739
  %v741 = vmul.f32 1.0, %v740
  %v742 = vsel %vm60, %v735, %v741
  %v743 = vmul.f32 %v742, %v680
  %745 = vrot.lane.b32.xlu0 %v742, 64
  %v746 = vpop.permute.xlu0 %745
  %v748 = vmul.f32 %v742, %v746
  %750 = vrot.lane.b32.xlu0 %v748, 32
  %v751 = vpop.permute.xlu0 %750
  %v753 = vadd.f32 %v743, %v751
  %v754 = vtanh.pop %v753
  %756 = vrot.lane.b32.xlu0 %v754, 64
  %v757 = vpop.permute.xlu0 %756
  %v759 = vmul.f32 %v742, %v757
  %v760 = vld [vmem:[%s5] sm:$0xf]
  %v761 = vld [vmem:[%s5 + $0x4] sm:$0xf]
  %v762 = vld [vmem:[%s5 + $0x8] sm:$0xf]
  %v763 = vld [vmem:[%s5 + $0xc] sm:$0xf]
  %v764 = vld [vmem:[%s6] sm:$0xf]
  %v765 = vld [vmem:[%s6 + $0x4] sm:$0xf]
  %v766 = vld [vmem:[%s6 + $0x8] sm:$0xf]
  %v767 = vld [vmem:[%s6 + $0xc] sm:$0xf]
  %v768 = vld [vmem:[%s7] sm:$0x1]
  %v769 = vpack.c.bf16 %v321, %v248
  %v770 = vpack.c.bf16 %v467, %v394
  %v771 = vpack.c.bf16 %v613, %v540
  %v772 = vpack.c.bf16 %v759, %v686
  %v774 = vlaneseq
  %v775 = vshrl.u32 %v774, 7
  %v776 = vsub.s32 0, %v775
  %v777 = vrot.slane %v768, %v776
  %783 = vrot.lane.b32.xlu0 %v769, 32
  %v784 = vpop.permute.xlu0 %783
  %785 = vrot.lane.b32.xlu0 %v770, 32
  %v786 = vpop.permute.xlu0 %785
  %787 = vrot.lane.b32.xlu0 %v771, 32
  %v788 = vpop.permute.xlu0 %787
  %789 = vrot.lane.b32.xlu0 %v772, 32
  %v790 = vpop.permute.xlu0 %789
  %v795 = vunpack.c.l.b16 %v760
  %v796 = vunpack.c.l.b16 %v761
  %v797 = vunpack.c.l.b16 %v762
  %v798 = vunpack.c.l.b16 %v763
  %v799 = vpack.c.b16 %v796, %v795
  %v800 = vpack.c.b16 %v798, %v797
  %v804 = vsel %vm179, %v784, 0
  %v807 = vsel %vm179, %v786, 0
  %v810 = vsel %vm179, %v788, 0
  %v813 = vsel %vm179, %v790, 0
  %815 = vmatprep.subr.bf16.mxu0 0
  %816 = vmatpush1.bf16.msra.mxu0 0
  %817 = vmatprep.subr.bf16.mxu0 0
  %818 = vmatpush1.bf16.msra.mxu0 0
  %819 = vmatprep.subr.bf16.mxu0 0
  %820 = vmatpush1.bf16.msra.mxu0 0
  %821 = vmatprep.subr.bf16.mxu0 0
  %822 = vmatpush1.bf16.msra.mxu0 0
  %823 = vmatprep.subr.bf16.mxu0 0
  %824 = vmatpush1.bf16.msra.mxu0 0
  %825 = vmatprep.subr.bf16.mxu0 0
  %826 = vmatpush1.bf16.msra.mxu0 0
  %827 = vmatprep.subr.bf16.mxu0 0
  %828 = vmatpush1.bf16.msra.mxu0 %v800
  %829 = vmatprep.subr.bf16.mxu0 0
  %830 = vmatpush1.bf16.msra.mxu0 %v799
  %831 = vmatprep.subr.bf16.mxu0 0
  %832 = vmatpush2.bf16.msra.mxu0 0
  %833 = vmatprep.subr.bf16.mxu0 0
  %834 = vmatpush2.bf16.msra.mxu0 0
  %835 = vmatprep.subr.bf16.mxu0 0
  %836 = vmatpush2.bf16.msra.mxu0 0
  %837 = vmatprep.subr.bf16.mxu0 0
  %838 = vmatpush2.bf16.msra.mxu0 0
  %839 = vmatprep.subr.bf16.mxu0 0
  %840 = vmatpush2.bf16.msra.mxu0 0
  %841 = vmatprep.subr.bf16.mxu0 0
  %842 = vmatpush2.bf16.msra.mxu0 0
  %843 = vmatprep.subr.bf16.mxu0 0
  %844 = vmatpush2.bf16.msra.mxu0 0
  %845 = vmatprep.subr.bf16.mxu0 0
  %846 = vmatpush2.bf16.msra.mxu0 0
  %847 = vmatprep.mubr.bf16.mxu0 0
  %848 = vmatmul.mubr.bf16.gmra.mxu0 %v804
  %v849 = vpop.f32.mrf.mxu0
  %v850 = vadd.f32 %v777, %v849
  %v851 = vpop.f32.mrf.mxu0
  %v852 = vpop.f32.mrf.mxu0
  %v853 = vadd.f32 %v777, %v852
  %v854 = vpop.f32.mrf.mxu0
  %855 = vmatprep.mubr.bf16.mxu0 0
  %856 = vmatmul.mubr.bf16.gmra.mxu0 %v807
  %v857 = vpop.f32.mrf.mxu0
  %v858 = vadd.f32 %v777, %v857
  %v859 = vpop.f32.mrf.mxu0
  %v860 = vpop.f32.mrf.mxu0
  %v861 = vadd.f32 %v777, %v860
  %v862 = vpop.f32.mrf.mxu0
  %863 = vmatprep.mubr.bf16.mxu0 0
  %864 = vmatmul.mubr.bf16.gmra.mxu0 %v810
  %v865 = vpop.f32.mrf.mxu0
  %v866 = vadd.f32 %v777, %v865
  %v867 = vpop.f32.mrf.mxu0
  %v868 = vpop.f32.mrf.mxu0
  %v869 = vadd.f32 %v777, %v868
  %v870 = vpop.f32.mrf.mxu0
  %871 = vmatprep.mubr.bf16.mxu0 0
  %872 = vmatmul.mubr.bf16.gmra.mxu0 %v813
  %v873 = vpop.f32.mrf.mxu0
  %v874 = vadd.f32 %v777, %v873
  %v875 = vpop.f32.mrf.mxu0
  %v876 = vpop.f32.mrf.mxu0
  %v877 = vadd.f32 %v777, %v876
  %v878 = vpop.f32.mrf.mxu0
  %879 = vdwg.mxu0
  %v884 = vunpack.c.l.b16 %v764
  %v885 = vunpack.c.l.b16 %v765
  %v886 = vunpack.c.l.b16 %v766
  %v887 = vunpack.c.l.b16 %v767
  %v888 = vpack.c.b16 %v885, %v884
  %v889 = vpack.c.b16 %v887, %v886
  %892 = vmatprep.subr.bf16.mxu0 0
  %893 = vmatpush1.bf16.msra.mxu0 0
  %894 = vmatprep.subr.bf16.mxu0 0
  %895 = vmatpush1.bf16.msra.mxu0 0
  %896 = vmatprep.subr.bf16.mxu0 0
  %897 = vmatpush1.bf16.msra.mxu0 0
  %898 = vmatprep.subr.bf16.mxu0 0
  %899 = vmatpush1.bf16.msra.mxu0 0
  %900 = vmatprep.subr.bf16.mxu0 0
  %901 = vmatpush1.bf16.msra.mxu0 0
  %902 = vmatprep.subr.bf16.mxu0 0
  %903 = vmatpush1.bf16.msra.mxu0 0
  %904 = vmatprep.subr.bf16.mxu0 0
  %905 = vmatpush1.bf16.msra.mxu0 %v889
  %906 = vmatprep.subr.bf16.mxu0 0
  %907 = vmatpush1.bf16.msra.mxu0 %v888
  %908 = vmatprep.subr.bf16.mxu0 0
  %909 = vmatpush2.bf16.msra.mxu0 0
  %910 = vmatprep.subr.bf16.mxu0 0
  %911 = vmatpush2.bf16.msra.mxu0 0
  %912 = vmatprep.subr.bf16.mxu0 0
  %913 = vmatpush2.bf16.msra.mxu0 0
  %914 = vmatprep.subr.bf16.mxu0 0
  %915 = vmatpush2.bf16.msra.mxu0 0
  %916 = vmatprep.subr.bf16.mxu0 0
  %917 = vmatpush2.bf16.msra.mxu0 0
  %918 = vmatprep.subr.bf16.mxu0 0
  %919 = vmatpush2.bf16.msra.mxu0 0
  %920 = vmatprep.subr.bf16.mxu0 0
  %921 = vmatpush2.bf16.msra.mxu0 0
  %922 = vmatprep.subr.bf16.mxu0 0
  %923 = vmatpush2.bf16.msra.mxu0 0
  %924 = vmatprep.mubr.bf16.mxu0 0
  %925 = vmatmul.mubr.bf16.gmra.mxu0 %v181
  %v926 = vpop.f32.mrf.mxu0
  %v927 = vadd.f32 0.0, %v926
  %v928 = vpop.f32.mrf.mxu0
  %v929 = vpop.f32.mrf.mxu0
  %v930 = vpop.f32.mrf.mxu0
  %931 = vdwg.mxu0
  %v932 = vadd.f32 %v850, %v927
  %v933 = vtanh.pop %v932
  %v934 = vxor.u32 %v932, 2147483648
  %v935 = vmul.f32 %v934, 1.442695
  %v936 = vpow.pop %v935
  %v937 = vadd.f32 %v936, 1.0
  %v938 = vrcp.pop %v937
  %v939 = vmul.f32 1.0, %v938
  %v940 = vsel %vm60, %v933, %v939
  %v941 = vmul.f32 %v940, 0.0
  %943 = vrot.lane.b32.xlu0 %v940, 64
  %v944 = vpop.permute.xlu0 %943
  %v946 = vmul.f32 %v940, %v944
  %948 = vrot.lane.b32.xlu0 %v946, 32
  %v949 = vpop.permute.xlu0 %948
  %v951 = vadd.f32 %v941, %v949
  %v952 = vtanh.pop %v951
  %954 = vrot.lane.b32.xlu0 %v952, 64
  %v955 = vpop.permute.xlu0 %954
  %v957 = vmul.f32 %v940, %v955
  %v958 = vpack.c.bf16 %v957, %v957
  %960 = vrot.lane.b32.xlu0 %v958, 32
  %v961 = vpop.permute.xlu0 %960
  %v963 = vsel %vm179, %v961, 0
  %965 = vmatprep.subr.bf16.mxu0 0
  %966 = vmatpush1.bf16.msra.mxu0 0
  %967 = vmatprep.subr.bf16.mxu0 0
  %968 = vmatpush1.bf16.msra.mxu0 0
  %969 = vmatprep.subr.bf16.mxu0 0
  %970 = vmatpush1.bf16.msra.mxu0 0
  %971 = vmatprep.subr.bf16.mxu0 0
  %972 = vmatpush1.bf16.msra.mxu0 0
  %973 = vmatprep.subr.bf16.mxu0 0
  %974 = vmatpush1.bf16.msra.mxu0 0
  %975 = vmatprep.subr.bf16.mxu0 0
  %976 = vmatpush1.bf16.msra.mxu0 0
  %977 = vmatprep.subr.bf16.mxu0 0
  %978 = vmatpush1.bf16.msra.mxu0 %v889
  %979 = vmatprep.subr.bf16.mxu0 0
  %980 = vmatpush1.bf16.msra.mxu0 %v888
  %981 = vmatprep.subr.bf16.mxu0 0
  %982 = vmatpush2.bf16.msra.mxu0 0
  %983 = vmatprep.subr.bf16.mxu0 0
  %984 = vmatpush2.bf16.msra.mxu0 0
  %985 = vmatprep.subr.bf16.mxu0 0
  %986 = vmatpush2.bf16.msra.mxu0 0
  %987 = vmatprep.subr.bf16.mxu0 0
  %988 = vmatpush2.bf16.msra.mxu0 0
  %989 = vmatprep.subr.bf16.mxu0 0
  %990 = vmatpush2.bf16.msra.mxu0 0
  %991 = vmatprep.subr.bf16.mxu0 0
  %992 = vmatpush2.bf16.msra.mxu0 0
  %993 = vmatprep.subr.bf16.mxu0 0
  %994 = vmatpush2.bf16.msra.mxu0 0
  %995 = vmatprep.subr.bf16.mxu0 0
  %996 = vmatpush2.bf16.msra.mxu0 0
  %997 = vmatprep.mubr.bf16.mxu0 0
  %998 = vmatmul.mubr.bf16.gmra.mxu0 %v963
  %v999 = vpop.f32.mrf.mxu0
  %v1000 = vadd.f32 0.0, %v999
  %v1001 = vpop.f32.mrf.mxu0
  %v1002 = vpop.f32.mrf.mxu0
  %v1003 = vpop.f32.mrf.mxu0
  %1004 = vdwg.mxu0
  %v1005 = vadd.f32 %v853, %v1000
  %v1006 = vtanh.pop %v1005
  %v1007 = vxor.u32 %v1005, 2147483648
  %v1008 = vmul.f32 %v1007, 1.442695
  %v1009 = vpow.pop %v1008
  %v1010 = vadd.f32 %v1009, 1.0
  %v1011 = vrcp.pop %v1010
  %v1012 = vmul.f32 1.0, %v1011
  %v1013 = vsel %vm60, %v1006, %v1012
  %v1014 = vmul.f32 %v1013, %v951
  %1016 = vrot.lane.b32.xlu0 %v1013, 64
  %v1017 = vpop.permute.xlu0 %1016
  %v1019 = vmul.f32 %v1013, %v1017
  %1021 = vrot.lane.b32.xlu0 %v1019, 32
  %v1022 = vpop.permute.xlu0 %1021
  %v1024 = vadd.f32 %v1014, %v1022
  %v1025 = vtanh.pop %v1024
  %1027 = vrot.lane.b32.xlu0 %v1025, 64
  %v1028 = vpop.permute.xlu0 %1027
  %v1030 = vmul.f32 %v1013, %v1028
  %v1031 = vpack.c.bf16 %v1030, %v1030
  %1033 = vrot.lane.b32.xlu0 %v1031, 32
  %v1034 = vpop.permute.xlu0 %1033
  %v1036 = vsel %vm179, %v1034, 0
  %1038 = vmatprep.subr.bf16.mxu0 0
  %1039 = vmatpush1.bf16.msra.mxu0 0
  %1040 = vmatprep.subr.bf16.mxu0 0
  %1041 = vmatpush1.bf16.msra.mxu0 0
  %1042 = vmatprep.subr.bf16.mxu0 0
  %1043 = vmatpush1.bf16.msra.mxu0 0
  %1044 = vmatprep.subr.bf16.mxu0 0
  %1045 = vmatpush1.bf16.msra.mxu0 0
  %1046 = vmatprep.subr.bf16.mxu0 0
  %1047 = vmatpush1.bf16.msra.mxu0 0
  %1048 = vmatprep.subr.bf16.mxu0 0
  %1049 = vmatpush1.bf16.msra.mxu0 0
  %1050 = vmatprep.subr.bf16.mxu0 0
  %1051 = vmatpush1.bf16.msra.mxu0 %v889
  %1052 = vmatprep.subr.bf16.mxu0 0
  %1053 = vmatpush1.bf16.msra.mxu0 %v888
  %1054 = vmatprep.subr.bf16.mxu0 0
  %1055 = vmatpush2.bf16.msra.mxu0 0
  %1056 = vmatprep.subr.bf16.mxu0 0
  %1057 = vmatpush2.bf16.msra.mxu0 0
  %1058 = vmatprep.subr.bf16.mxu0 0
  %1059 = vmatpush2.bf16.msra.mxu0 0
  %1060 = vmatprep.subr.bf16.mxu0 0
  %1061 = vmatpush2.bf16.msra.mxu0 0
  %1062 = vmatprep.subr.bf16.mxu0 0
  %1063 = vmatpush2.bf16.msra.mxu0 0
  %1064 = vmatprep.subr.bf16.mxu0 0
  %1065 = vmatpush2.bf16.msra.mxu0 0
  %1066 = vmatprep.subr.bf16.mxu0 0
  %1067 = vmatpush2.bf16.msra.mxu0 0
  %1068 = vmatprep.subr.bf16.mxu0 0
  %1069 = vmatpush2.bf16.msra.mxu0 0
  %1070 = vmatprep.mubr.bf16.mxu0 0
  %1071 = vmatmul.mubr.bf16.gmra.mxu0 %v1036
  %v1072 = vpop.f32.mrf.mxu0
  %v1073 = vadd.f32 0.0, %v1072
  %v1074 = vpop.f32.mrf.mxu0
  %v1075 = vpop.f32.mrf.mxu0
  %v1076 = vpop.f32.mrf.mxu0
  %1077 = vdwg.mxu0
  %v1078 = vadd.f32 %v858, %v1073
  %v1079 = vtanh.pop %v1078
  %v1080 = vxor.u32 %v1078, 2147483648
  %v1081 = vmul.f32 %v1080, 1.442695
  %v1082 = vpow.pop %v1081
  %v1083 = vadd.f32 %v1082, 1.0
  %v1084 = vrcp.pop %v1083
  %v1085 = vmul.f32 1.0, %v1084
  %v1086 = vsel %vm60, %v1079, %v1085
  %v1087 = vmul.f32 %v1086, %v1024
  %1089 = vrot.lane.b32.xlu0 %v1086, 64
  %v1090 = vpop.permute.xlu0 %1089
  %v1092 = vmul.f32 %v1086, %v1090
  %1094 = vrot.lane.b32.xlu0 %v1092, 32
  %v1095 = vpop.permute.xlu0 %1094
  %v1097 = vadd.f32 %v1087, %v1095
  %v1098 = vtanh.pop %v1097
  %1100 = vrot.lane.b32.xlu0 %v1098, 64
  %v1101 = vpop.permute.xlu0 %1100
  %v1103 = vmul.f32 %v1086, %v1101
  %v1104 = vpack.c.bf16 %v1103, %v1103
  %1106 = vrot.lane.b32.xlu0 %v1104, 32
  %v1107 = vpop.permute.xlu0 %1106
  %v1109 = vsel %vm179, %v1107, 0
  %1111 = vmatprep.subr.bf16.mxu0 0
  %1112 = vmatpush1.bf16.msra.mxu0 0
  %1113 = vmatprep.subr.bf16.mxu0 0
  %1114 = vmatpush1.bf16.msra.mxu0 0
  %1115 = vmatprep.subr.bf16.mxu0 0
  %1116 = vmatpush1.bf16.msra.mxu0 0
  %1117 = vmatprep.subr.bf16.mxu0 0
  %1118 = vmatpush1.bf16.msra.mxu0 0
  %1119 = vmatprep.subr.bf16.mxu0 0
  %1120 = vmatpush1.bf16.msra.mxu0 0
  %1121 = vmatprep.subr.bf16.mxu0 0
  %1122 = vmatpush1.bf16.msra.mxu0 0
  %1123 = vmatprep.subr.bf16.mxu0 0
  %1124 = vmatpush1.bf16.msra.mxu0 %v889
  %1125 = vmatprep.subr.bf16.mxu0 0
  %1126 = vmatpush1.bf16.msra.mxu0 %v888
  %1127 = vmatprep.subr.bf16.mxu0 0
  %1128 = vmatpush2.bf16.msra.mxu0 0
  %1129 = vmatprep.subr.bf16.mxu0 0
  %1130 = vmatpush2.bf16.msra.mxu0 0
  %1131 = vmatprep.subr.bf16.mxu0 0
  %1132 = vmatpush2.bf16.msra.mxu0 0
  %1133 = vmatprep.subr.bf16.mxu0 0
  %1134 = vmatpush2.bf16.msra.mxu0 0
  %1135 = vmatprep.subr.bf16.mxu0 0
  %1136 = vmatpush2.bf16.msra.mxu0 0
  %1137 = vmatprep.subr.bf16.mxu0 0
  %1138 = vmatpush2.bf16.msra.mxu0 0
  %1139 = vmatprep.subr.bf16.mxu0 0
  %1140 = vmatpush2.bf16.msra.mxu0 0
  %1141 = vmatprep.subr.bf16.mxu0 0
  %1142 = vmatpush2.bf16.msra.mxu0 0
  %1143 = vmatprep.mubr.bf16.mxu0 0
  %1144 = vmatmul.mubr.bf16.gmra.mxu0 %v1109
  %v1145 = vpop.f32.mrf.mxu0
  %v1146 = vadd.f32 0.0, %v1145
  %v1147 = vpop.f32.mrf.mxu0
  %v1148 = vpop.f32.mrf.mxu0
  %v1149 = vpop.f32.mrf.mxu0
  %1150 = vdwg.mxu0
  %v1151 = vadd.f32 %v861, %v1146
  %v1152 = vtanh.pop %v1151
  %v1153 = vxor.u32 %v1151, 2147483648
  %v1154 = vmul.f32 %v1153, 1.442695
  %v1155 = vpow.pop %v1154
  %v1156 = vadd.f32 %v1155, 1.0
  %v1157 = vrcp.pop %v1156
  %v1158 = vmul.f32 1.0, %v1157
  %v1159 = vsel %vm60, %v1152, %v1158
  %v1160 = vmul.f32 %v1159, %v1097
  %1162 = vrot.lane.b32.xlu0 %v1159, 64
  %v1163 = vpop.permute.xlu0 %1162
  %v1165 = vmul.f32 %v1159, %v1163
  %1167 = vrot.lane.b32.xlu0 %v1165, 32
  %v1168 = vpop.permute.xlu0 %1167
  %v1170 = vadd.f32 %v1160, %v1168
  %v1171 = vtanh.pop %v1170
  %1173 = vrot.lane.b32.xlu0 %v1171, 64
  %v1174 = vpop.permute.xlu0 %1173
  %v1176 = vmul.f32 %v1159, %v1174
  %v1177 = vpack.c.bf16 %v1176, %v1176
  %1179 = vrot.lane.b32.xlu0 %v1177, 32
  %v1180 = vpop.permute.xlu0 %1179
  %v1182 = vsel %vm179, %v1180, 0
  %1184 = vmatprep.subr.bf16.mxu0 0
  %1185 = vmatpush1.bf16.msra.mxu0 0
  %1186 = vmatprep.subr.bf16.mxu0 0
  %1187 = vmatpush1.bf16.msra.mxu0 0
  %1188 = vmatprep.subr.bf16.mxu0 0
  %1189 = vmatpush1.bf16.msra.mxu0 0
  %1190 = vmatprep.subr.bf16.mxu0 0
  %1191 = vmatpush1.bf16.msra.mxu0 0
  %1192 = vmatprep.subr.bf16.mxu0 0
  %1193 = vmatpush1.bf16.msra.mxu0 0
  %1194 = vmatprep.subr.bf16.mxu0 0
  %1195 = vmatpush1.bf16.msra.mxu0 0
  %1196 = vmatprep.subr.bf16.mxu0 0
  %1197 = vmatpush1.bf16.msra.mxu0 %v889
  %1198 = vmatprep.subr.bf16.mxu0 0
  %1199 = vmatpush1.bf16.msra.mxu0 %v888
  %1200 = vmatprep.subr.bf16.mxu0 0
  %1201 = vmatpush2.bf16.msra.mxu0 0
  %1202 = vmatprep.subr.bf16.mxu0 0
  %1203 = vmatpush2.bf16.msra.mxu0 0
  %1204 = vmatprep.subr.bf16.mxu0 0
  %1205 = vmatpush2.bf16.msra.mxu0 0
  %1206 = vmatprep.subr.bf16.mxu0 0
  %1207 = vmatpush2.bf16.msra.mxu0 0
  %1208 = vmatprep.subr.bf16.mxu0 0
  %1209 = vmatpush2.bf16.msra.mxu0 0
  %1210 = vmatprep.subr.bf16.mxu0 0
  %1211 = vmatpush2.bf16.msra.mxu0 0
  %1212 = vmatprep.subr.bf16.mxu0 0
  %1213 = vmatpush2.bf16.msra.mxu0 0
  %1214 = vmatprep.subr.bf16.mxu0 0
  %1215 = vmatpush2.bf16.msra.mxu0 0
  %1216 = vmatprep.mubr.bf16.mxu0 0
  %1217 = vmatmul.mubr.bf16.gmra.mxu0 %v1182
  %v1218 = vpop.f32.mrf.mxu0
  %v1219 = vadd.f32 0.0, %v1218
  %v1220 = vpop.f32.mrf.mxu0
  %v1221 = vpop.f32.mrf.mxu0
  %v1222 = vpop.f32.mrf.mxu0
  %1223 = vdwg.mxu0
  %v1224 = vadd.f32 %v866, %v1219
  %v1225 = vtanh.pop %v1224
  %v1226 = vxor.u32 %v1224, 2147483648
  %v1227 = vmul.f32 %v1226, 1.442695
  %v1228 = vpow.pop %v1227
  %v1229 = vadd.f32 %v1228, 1.0
  %v1230 = vrcp.pop %v1229
  %v1231 = vmul.f32 1.0, %v1230
  %v1232 = vsel %vm60, %v1225, %v1231
  %v1233 = vmul.f32 %v1232, %v1170
  %1235 = vrot.lane.b32.xlu0 %v1232, 64
  %v1236 = vpop.permute.xlu0 %1235
  %v1238 = vmul.f32 %v1232, %v1236
  %1240 = vrot.lane.b32.xlu0 %v1238, 32
  %v1241 = vpop.permute.xlu0 %1240
  %v1243 = vadd.f32 %v1233, %v1241
  %v1244 = vtanh.pop %v1243
  %1246 = vrot.lane.b32.xlu0 %v1244, 64
  %v1247 = vpop.permute.xlu0 %1246
  %v1249 = vmul.f32 %v1232, %v1247
  %v1250 = vpack.c.bf16 %v1249, %v1249
  %1252 = vrot.lane.b32.xlu0 %v1250, 32
  %v1253 = vpop.permute.xlu0 %1252
  %v1255 = vsel %vm179, %v1253, 0
  %1257 = vmatprep.subr.bf16.mxu0 0
  %1258 = vmatpush1.bf16.msra.mxu0 0
  %1259 = vmatprep.subr.bf16.mxu0 0
  %1260 = vmatpush1.bf16.msra.mxu0 0
  %1261 = vmatprep.subr.bf16.mxu0 0
  %1262 = vmatpush1.bf16.msra.mxu0 0
  %1263 = vmatprep.subr.bf16.mxu0 0
  %1264 = vmatpush1.bf16.msra.mxu0 0
  %1265 = vmatprep.subr.bf16.mxu0 0
  %1266 = vmatpush1.bf16.msra.mxu0 0
  %1267 = vmatprep.subr.bf16.mxu0 0
  %1268 = vmatpush1.bf16.msra.mxu0 0
  %1269 = vmatprep.subr.bf16.mxu0 0
  %1270 = vmatpush1.bf16.msra.mxu0 %v889
  %1271 = vmatprep.subr.bf16.mxu0 0
  %1272 = vmatpush1.bf16.msra.mxu0 %v888
  %1273 = vmatprep.subr.bf16.mxu0 0
  %1274 = vmatpush2.bf16.msra.mxu0 0
  %1275 = vmatprep.subr.bf16.mxu0 0
  %1276 = vmatpush2.bf16.msra.mxu0 0
  %1277 = vmatprep.subr.bf16.mxu0 0
  %1278 = vmatpush2.bf16.msra.mxu0 0
  %1279 = vmatprep.subr.bf16.mxu0 0
  %1280 = vmatpush2.bf16.msra.mxu0 0
  %1281 = vmatprep.subr.bf16.mxu0 0
  %1282 = vmatpush2.bf16.msra.mxu0 0
  %1283 = vmatprep.subr.bf16.mxu0 0
  %1284 = vmatpush2.bf16.msra.mxu0 0
  %1285 = vmatprep.subr.bf16.mxu0 0
  %1286 = vmatpush2.bf16.msra.mxu0 0
  %1287 = vmatprep.subr.bf16.mxu0 0
  %1288 = vmatpush2.bf16.msra.mxu0 0
  %1289 = vmatprep.mubr.bf16.mxu0 0
  %1290 = vmatmul.mubr.bf16.gmra.mxu0 %v1255
  %v1291 = vpop.f32.mrf.mxu0
  %v1292 = vadd.f32 0.0, %v1291
  %v1293 = vpop.f32.mrf.mxu0
  %v1294 = vpop.f32.mrf.mxu0
  %v1295 = vpop.f32.mrf.mxu0
  %1296 = vdwg.mxu0
  %v1297 = vadd.f32 %v869, %v1292
  %v1298 = vtanh.pop %v1297
  %v1299 = vxor.u32 %v1297, 2147483648
  %v1300 = vmul.f32 %v1299, 1.442695
  %v1301 = vpow.pop %v1300
  %v1302 = vadd.f32 %v1301, 1.0
  %v1303 = vrcp.pop %v1302
  %v1304 = vmul.f32 1.0, %v1303
  %v1305 = vsel %vm60, %v1298, %v1304
  %v1306 = vmul.f32 %v1305, %v1243
  %1308 = vrot.lane.b32.xlu0 %v1305, 64
  %v1309 = vpop.permute.xlu0 %1308
  %v1311 = vmul.f32 %v1305, %v1309
  %1313 = vrot.lane.b32.xlu0 %v1311, 32
  %v1314 = vpop.permute.xlu0 %1313
  %v1316 = vadd.f32 %v1306, %v1314
  %v1317 = vtanh.pop %v1316
  %1319 = vrot.lane.b32.xlu0 %v1317, 64
  %v1320 = vpop.permute.xlu0 %1319
  %v1322 = vmul.f32 %v1305, %v1320
  %v1323 = vpack.c.bf16 %v1322, %v1322
  %1325 = vrot.lane.b32.xlu0 %v1323, 32
  %v1326 = vpop.permute.xlu0 %1325
  %v1328 = vsel %vm179, %v1326, 0
  %1330 = vmatprep.subr.bf16.mxu0 0
  %1331 = vmatpush1.bf16.msra.mxu0 0
  %1332 = vmatprep.subr.bf16.mxu0 0
  %1333 = vmatpush1.bf16.msra.mxu0 0
  %1334 = vmatprep.subr.bf16.mxu0 0
  %1335 = vmatpush1.bf16.msra.mxu0 0
  %1336 = vmatprep.subr.bf16.mxu0 0
  %1337 = vmatpush1.bf16.msra.mxu0 0
  %1338 = vmatprep.subr.bf16.mxu0 0
  %1339 = vmatpush1.bf16.msra.mxu0 0
  %1340 = vmatprep.subr.bf16.mxu0 0
  %1341 = vmatpush1.bf16.msra.mxu0 0
  %1342 = vmatprep.subr.bf16.mxu0 0
  %1343 = vmatpush1.bf16.msra.mxu0 %v889
  %1344 = vmatprep.subr.bf16.mxu0 0
  %1345 = vmatpush1.bf16.msra.mxu0 %v888
  %1346 = vmatprep.subr.bf16.mxu0 0
  %1347 = vmatpush2.bf16.msra.mxu0 0
  %1348 = vmatprep.subr.bf16.mxu0 0
  %1349 = vmatpush2.bf16.msra.mxu0 0
  %1350 = vmatprep.subr.bf16.mxu0 0
  %1351 = vmatpush2.bf16.msra.mxu0 0
  %1352 = vmatprep.subr.bf16.mxu0 0
  %1353 = vmatpush2.bf16.msra.mxu0 0
  %1354 = vmatprep.subr.bf16.mxu0 0
  %1355 = vmatpush2.bf16.msra.mxu0 0
  %1356 = vmatprep.subr.bf16.mxu0 0
  %1357 = vmatpush2.bf16.msra.mxu0 0
  %1358 = vmatprep.subr.bf16.mxu0 0
  %1359 = vmatpush2.bf16.msra.mxu0 0
  %1360 = vmatprep.subr.bf16.mxu0 0
  %1361 = vmatpush2.bf16.msra.mxu0 0
  %1362 = vmatprep.mubr.bf16.mxu0 0
  %1363 = vmatmul.mubr.bf16.gmra.mxu0 %v1328
  %v1364 = vpop.f32.mrf.mxu0
  %v1365 = vadd.f32 0.0, %v1364
  %v1366 = vpop.f32.mrf.mxu0
  %v1367 = vpop.f32.mrf.mxu0
  %v1368 = vpop.f32.mrf.mxu0
  %1369 = vdwg.mxu0
  %v1370 = vadd.f32 %v874, %v1365
  %v1371 = vtanh.pop %v1370
  %v1372 = vxor.u32 %v1370, 2147483648
  %v1373 = vmul.f32 %v1372, 1.442695
  %v1374 = vpow.pop %v1373
  %v1375 = vadd.f32 %v1374, 1.0
  %v1376 = vrcp.pop %v1375
  %v1377 = vmul.f32 1.0, %v1376
  %v1378 = vsel %vm60, %v1371, %v1377
  %v1379 = vmul.f32 %v1378, %v1316
  %1381 = vrot.lane.b32.xlu0 %v1378, 64
  %v1382 = vpop.permute.xlu0 %1381
  %v1384 = vmul.f32 %v1378, %v1382
  %1386 = vrot.lane.b32.xlu0 %v1384, 32
  %v1387 = vpop.permute.xlu0 %1386
  %v1389 = vadd.f32 %v1379, %v1387
  %v1390 = vtanh.pop %v1389
  %1392 = vrot.lane.b32.xlu0 %v1390, 64
  %v1393 = vpop.permute.xlu0 %1392
  %v1395 = vmul.f32 %v1378, %v1393
  %v1396 = vpack.c.bf16 %v1395, %v1395
  %1398 = vrot.lane.b32.xlu0 %v1396, 32
  %v1399 = vpop.permute.xlu0 %1398
  %v1401 = vsel %vm179, %v1399, 0
  %1403 = vmatprep.subr.bf16.mxu0 0
  %1404 = vmatpush1.bf16.msra.mxu0 0
  %1405 = vmatprep.subr.bf16.mxu0 0
  %1406 = vmatpush1.bf16.msra.mxu0 0
  %1407 = vmatprep.subr.bf16.mxu0 0
  %1408 = vmatpush1.bf16.msra.mxu0 0
  %1409 = vmatprep.subr.bf16.mxu0 0
  %1410 = vmatpush1.bf16.msra.mxu0 0
  %1411 = vmatprep.subr.bf16.mxu0 0
  %1412 = vmatpush1.bf16.msra.mxu0 0
  %1413 = vmatprep.subr.bf16.mxu0 0
  %1414 = vmatpush1.bf16.msra.mxu0 0
  %1415 = vmatprep.subr.bf16.mxu0 0
  %1416 = vmatpush1.bf16.msra.mxu0 %v889
  %1417 = vmatprep.subr.bf16.mxu0 0
  %1418 = vmatpush1.bf16.msra.mxu0 %v888
  %1419 = vmatprep.subr.bf16.mxu0 0
  %1420 = vmatpush2.bf16.msra.mxu0 0
  %1421 = vmatprep.subr.bf16.mxu0 0
  %1422 = vmatpush2.bf16.msra.mxu0 0
  %1423 = vmatprep.subr.bf16.mxu0 0
  %1424 = vmatpush2.bf16.msra.mxu0 0
  %1425 = vmatprep.subr.bf16.mxu0 0
  %1426 = vmatpush2.bf16.msra.mxu0 0
  %1427 = vmatprep.subr.bf16.mxu0 0
  %1428 = vmatpush2.bf16.msra.mxu0 0
  %1429 = vmatprep.subr.bf16.mxu0 0
  %1430 = vmatpush2.bf16.msra.mxu0 0
  %1431 = vmatprep.subr.bf16.mxu0 0
  %1432 = vmatpush2.bf16.msra.mxu0 0
  %1433 = vmatprep.subr.bf16.mxu0 0
  %1434 = vmatpush2.bf16.msra.mxu0 0
  %1435 = vmatprep.mubr.bf16.mxu0 0
  %1436 = vmatmul.mubr.bf16.gmra.mxu0 %v1401
  %v1437 = vpop.f32.mrf.mxu0
  %v1438 = vadd.f32 0.0, %v1437
  %v1439 = vpop.f32.mrf.mxu0
  %v1440 = vpop.f32.mrf.mxu0
  %v1441 = vpop.f32.mrf.mxu0
  %1442 = vdwg.mxu0
  %v1443 = vadd.f32 %v877, %v1438
  %v1444 = vtanh.pop %v1443
  %v1445 = vxor.u32 %v1443, 2147483648
  %v1446 = vmul.f32 %v1445, 1.442695
  %v1447 = vpow.pop %v1446
  %v1448 = vadd.f32 %v1447, 1.0
  %v1449 = vrcp.pop %v1448
  %v1450 = vmul.f32 1.0, %v1449
  %v1451 = vsel %vm60, %v1444, %v1450
  %v1452 = vmul.f32 %v1451, %v1389
  %1454 = vrot.lane.b32.xlu0 %v1451, 64
  %v1455 = vpop.permute.xlu0 %1454
  %v1457 = vmul.f32 %v1451, %v1455
  %1459 = vrot.lane.b32.xlu0 %v1457, 32
  %v1460 = vpop.permute.xlu0 %1459
  %v1462 = vadd.f32 %v1452, %v1460
  %v1463 = vtanh.pop %v1462
  %1465 = vrot.lane.b32.xlu0 %v1463, 64
  %v1466 = vpop.permute.xlu0 %1465
  %v1468 = vmul.f32 %v1451, %v1466
  %v1469 = vld [vmem:[%s1] sm:$0xff]
  %v1470 = vld [vmem:[%s1 + $0x8] sm:$0xff]
  %v1471 = vld [vmem:[%s1 + $0x10] sm:$0xff]
  %v1472 = vld [vmem:[%s1 + $0x18] sm:$0xff]
  %v1473 = vld [vmem:[%s1 + $0x20] sm:$0xff]
  %v1474 = vld [vmem:[%s8] sm:$0x3]
  %v1475 = vld [vmem:[%s9] sm:$0xf]
  %v1476 = vld [vmem:[%s9 + $0x4] sm:$0xf]
  %v1477 = vld [vmem:[%s9 + $0x8] sm:$0xf]
  %v1478 = vld [vmem:[%s9 + $0xc] sm:$0xf]
  %v1479 = vld [vmem:[%s10] sm:$0x1]
  %v1480 = vpack.c.bf16 %v1470, %v1469
  %v1481 = vpack.c.bf16 %v1472, %v1471
  %v1482 = vpack.c.bf16 %v1473, %v1473
  %v1484 = vlaneseq
  %v1485 = vshrl.u32 %v1484, 7
  %v1486 = vsub.s32 0, %v1485
  %v1487 = vrot.slane %v1479, %v1486
  %v1490 = vsel %vm85, %v1480, 0
  %v1493 = vsel %vm85, %v1481, 0
  %v1496 = vsel %vm85, %v1482, 0
  %v1499 = vsel %vm98, %v1474, 0
  %1501 = vmatprep.subr.bf16.mxu0 0
  %1502 = vmatpush1.bf16.msra.mxu0 0
  %1503 = vmatprep.subr.bf16.mxu0 0
  %1504 = vmatpush1.bf16.msra.mxu0 0
  %1505 = vmatprep.subr.bf16.mxu0 0
  %1506 = vmatpush1.bf16.msra.mxu0 0
  %1507 = vmatprep.subr.bf16.mxu0 0
  %1508 = vmatpush1.bf16.msra.mxu0 0
  %1509 = vmatprep.subr.bf16.mxu0 0
  %1510 = vmatpush1.bf16.msra.mxu0 0
  %1511 = vmatprep.subr.bf16.mxu0 0
  %1512 = vmatpush1.bf16.msra.mxu0 0
  %1513 = vmatprep.subr.bf16.mxu0 0
  %1514 = vmatpush1.bf16.msra.mxu0 0
  %1515 = vmatprep.subr.bf16.mxu0 0
  %1516 = vmatpush1.bf16.msra.mxu0 %v1499
  %1517 = vmatprep.subr.bf16.mxu0 0
  %1518 = vmatpush2.bf16.msra.mxu0 0
  %1519 = vmatprep.subr.bf16.mxu0 0
  %1520 = vmatpush2.bf16.msra.mxu0 0
  %1521 = vmatprep.subr.bf16.mxu0 0
  %1522 = vmatpush2.bf16.msra.mxu0 0
  %1523 = vmatprep.subr.bf16.mxu0 0
  %1524 = vmatpush2.bf16.msra.mxu0 0
  %1525 = vmatprep.subr.bf16.mxu0 0
  %1526 = vmatpush2.bf16.msra.mxu0 0
  %1527 = vmatprep.subr.bf16.mxu0 0
  %1528 = vmatpush2.bf16.msra.mxu0 0
  %1529 = vmatprep.subr.bf16.mxu0 0
  %1530 = vmatpush2.bf16.msra.mxu0 0
  %1531 = vmatprep.subr.bf16.mxu0 0
  %1532 = vmatpush2.bf16.msra.mxu0 0
  %1533 = vmatprep.mubr.bf16.mxu0 0
  %1534 = vmatmul.mubr.bf16.gmra.mxu0 %v1490
  %v1535 = vpop.f32.mrf.mxu0
  %v1536 = vadd.f32 %v1487, %v1535
  %v1537 = vpop.f32.mrf.mxu0
  %v1538 = vpop.f32.mrf.mxu0
  %v1539 = vadd.f32 %v1487, %v1538
  %v1540 = vpop.f32.mrf.mxu0
  %1541 = vmatprep.mubr.bf16.mxu0 0
  %1542 = vmatmul.mubr.bf16.gmra.mxu0 %v1493
  %v1543 = vpop.f32.mrf.mxu0
  %v1544 = vadd.f32 %v1487, %v1543
  %v1545 = vpop.f32.mrf.mxu0
  %v1546 = vpop.f32.mrf.mxu0
  %v1547 = vadd.f32 %v1487, %v1546
  %v1548 = vpop.f32.mrf.mxu0
  %1549 = vmatprep.mubr.bf16.mxu0 0
  %1550 = vmatmul.mubr.bf16.gmra.mxu0 %v1496
  %v1551 = vpop.f32.mrf.mxu0
  %v1552 = vadd.f32 %v1487, %v1551
  %v1553 = vpop.f32.mrf.mxu0
  %v1554 = vpop.f32.mrf.mxu0
  %v1555 = vpop.f32.mrf.mxu0
  %1556 = vdwg.mxu0
  %v1557 = vpack.c.bf16 %v759, %v759
  %1559 = vrot.lane.b32.xlu0 %v1557, 32
  %v1560 = vpop.permute.xlu0 %1559
  %v1565 = vunpack.c.l.b16 %v1475
  %v1566 = vunpack.c.l.b16 %v1476
  %v1567 = vunpack.c.l.b16 %v1477
  %v1568 = vunpack.c.l.b16 %v1478
  %v1569 = vpack.c.b16 %v1566, %v1565
  %v1570 = vpack.c.b16 %v1568, %v1567
  %v1574 = vsel %vm179, %v1560, 0
  %1576 = vmatprep.subr.bf16.mxu0 0
  %1577 = vmatpush1.bf16.msra.mxu0 0
  %1578 = vmatprep.subr.bf16.mxu0 0
  %1579 = vmatpush1.bf16.msra.mxu0 0
  %1580 = vmatprep.subr.bf16.mxu0 0
  %1581 = vmatpush1.bf16.msra.mxu0 0
  %1582 = vmatprep.subr.bf16.mxu0 0
  %1583 = vmatpush1.bf16.msra.mxu0 0
  %1584 = vmatprep.subr.bf16.mxu0 0
  %1585 = vmatpush1.bf16.msra.mxu0 0
  %1586 = vmatprep.subr.bf16.mxu0 0
  %1587 = vmatpush1.bf16.msra.mxu0 0
  %1588 = vmatprep.subr.bf16.mxu0 0
  %1589 = vmatpush1.bf16.msra.mxu0 %v1570
  %1590 = vmatprep.subr.bf16.mxu0 0
  %1591 = vmatpush1.bf16.msra.mxu0 %v1569
  %1592 = vmatprep.subr.bf16.mxu0 0
  %1593 = vmatpush2.bf16.msra.mxu0 0
  %1594 = vmatprep.subr.bf16.mxu0 0
  %1595 = vmatpush2.bf16.msra.mxu0 0
  %1596 = vmatprep.subr.bf16.mxu0 0
  %1597 = vmatpush2.bf16.msra.mxu0 0
  %1598 = vmatprep.subr.bf16.mxu0 0
  %1599 = vmatpush2.bf16.msra.mxu0 0
  %1600 = vmatprep.subr.bf16.mxu0 0
  %1601 = vmatpush2.bf16.msra.mxu0 0
  %1602 = vmatprep.subr.bf16.mxu0 0
  %1603 = vmatpush2.bf16.msra.mxu0 0
  %1604 = vmatprep.subr.bf16.mxu0 0
  %1605 = vmatpush2.bf16.msra.mxu0 0
  %1606 = vmatprep.subr.bf16.mxu0 0
  %1607 = vmatpush2.bf16.msra.mxu0 0
  %1608 = vmatprep.mubr.bf16.mxu0 0
  %1609 = vmatmul.mubr.bf16.gmra.mxu0 %v1574
  %v1610 = vpop.f32.mrf.mxu0
  %v1611 = vadd.f32 0.0, %v1610
  %v1612 = vpop.f32.mrf.mxu0
  %v1613 = vpop.f32.mrf.mxu0
  %v1614 = vpop.f32.mrf.mxu0
  %1615 = vdwg.mxu0
  %v1616 = vadd.f32 %v1536, %v1611
  %v1617 = vtanh.pop %v1616
  %v1618 = vxor.u32 %v1616, 2147483648
  %v1619 = vmul.f32 %v1618, 1.442695
  %v1620 = vpow.pop %v1619
  %v1621 = vadd.f32 %v1620, 1.0
  %v1622 = vrcp.pop %v1621
  %v1623 = vmul.f32 1.0, %v1622
  %v1624 = vsel %vm60, %v1617, %v1623
  %v1625 = vmul.f32 %v1624, %v753
  %1627 = vrot.lane.b32.xlu0 %v1624, 64
  %v1628 = vpop.permute.xlu0 %1627
  %v1630 = vmul.f32 %v1624, %v1628
  %1632 = vrot.lane.b32.xlu0 %v1630, 32
  %v1633 = vpop.permute.xlu0 %1632
  %v1635 = vadd.f32 %v1625, %v1633
  %v1636 = vtanh.pop %v1635
  %1638 = vrot.lane.b32.xlu0 %v1636, 64
  %v1639 = vpop.permute.xlu0 %1638
  %v1641 = vmul.f32 %v1624, %v1639
  %v1642 = vpack.c.bf16 %v1641, %v1641
  %1644 = vrot.lane.b32.xlu0 %v1642, 32
  %v1645 = vpop.permute.xlu0 %1644
  %v1647 = vsel %vm179, %v1645, 0
  %1649 = vmatprep.subr.bf16.mxu0 0
  %1650 = vmatpush1.bf16.msra.mxu0 0
  %1651 = vmatprep.subr.bf16.mxu0 0
  %1652 = vmatpush1.bf16.msra.mxu0 0
  %1653 = vmatprep.subr.bf16.mxu0 0
  %1654 = vmatpush1.bf16.msra.mxu0 0
  %1655 = vmatprep.subr.bf16.mxu0 0
  %1656 = vmatpush1.bf16.msra.mxu0 0
  %1657 = vmatprep.subr.bf16.mxu0 0
  %1658 = vmatpush1.bf16.msra.mxu0 0
  %1659 = vmatprep.subr.bf16.mxu0 0
  %1660 = vmatpush1.bf16.msra.mxu0 0
  %1661 = vmatprep.subr.bf16.mxu0 0
  %1662 = vmatpush1.bf16.msra.mxu0 %v1570
  %1663 = vmatprep.subr.bf16.mxu0 0
  %1664 = vmatpush1.bf16.msra.mxu0 %v1569
  %1665 = vmatprep.subr.bf16.mxu0 0
  %1666 = vmatpush2.bf16.msra.mxu0 0
  %1667 = vmatprep.subr.bf16.mxu0 0
  %1668 = vmatpush2.bf16.msra.mxu0 0
  %1669 = vmatprep.subr.bf16.mxu0 0
  %1670 = vmatpush2.bf16.msra.mxu0 0
  %1671 = vmatprep.subr.bf16.mxu0 0
  %1672 = vmatpush2.bf16.msra.mxu0 0
  %1673 = vmatprep.subr.bf16.mxu0 0
  %1674 = vmatpush2.bf16.msra.mxu0 0
  %1675 = vmatprep.subr.bf16.mxu0 0
  %1676 = vmatpush2.bf16.msra.mxu0 0
  %1677 = vmatprep.subr.bf16.mxu0 0
  %1678 = vmatpush2.bf16.msra.mxu0 0
  %1679 = vmatprep.subr.bf16.mxu0 0
  %1680 = vmatpush2.bf16.msra.mxu0 0
  %1681 = vmatprep.mubr.bf16.mxu0 0
  %1682 = vmatmul.mubr.bf16.gmra.mxu0 %v1647
  %v1683 = vpop.f32.mrf.mxu0
  %v1684 = vadd.f32 0.0, %v1683
  %v1685 = vpop.f32.mrf.mxu0
  %v1686 = vpop.f32.mrf.mxu0
  %v1687 = vpop.f32.mrf.mxu0
  %1688 = vdwg.mxu0
  %v1689 = vadd.f32 %v1539, %v1684
  %v1690 = vtanh.pop %v1689
  %v1691 = vxor.u32 %v1689, 2147483648
  %v1692 = vmul.f32 %v1691, 1.442695
  %v1693 = vpow.pop %v1692
  %v1694 = vadd.f32 %v1693, 1.0
  %v1695 = vrcp.pop %v1694
  %v1696 = vmul.f32 1.0, %v1695
  %v1697 = vsel %vm60, %v1690, %v1696
  %v1698 = vmul.f32 %v1697, %v1635
  %1700 = vrot.lane.b32.xlu0 %v1697, 64
  %v1701 = vpop.permute.xlu0 %1700
  %v1703 = vmul.f32 %v1697, %v1701
  %1705 = vrot.lane.b32.xlu0 %v1703, 32
  %v1706 = vpop.permute.xlu0 %1705
  %v1708 = vadd.f32 %v1698, %v1706
  %v1709 = vtanh.pop %v1708
  %1711 = vrot.lane.b32.xlu0 %v1709, 64
  %v1712 = vpop.permute.xlu0 %1711
  %v1714 = vmul.f32 %v1697, %v1712
  %v1715 = vpack.c.bf16 %v1714, %v1714
  %1717 = vrot.lane.b32.xlu0 %v1715, 32
  %v1718 = vpop.permute.xlu0 %1717
  %v1720 = vsel %vm179, %v1718, 0
  %1722 = vmatprep.subr.bf16.mxu0 0
  %1723 = vmatpush1.bf16.msra.mxu0 0
  %1724 = vmatprep.subr.bf16.mxu0 0
  %1725 = vmatpush1.bf16.msra.mxu0 0
  %1726 = vmatprep.subr.bf16.mxu0 0
  %1727 = vmatpush1.bf16.msra.mxu0 0
  %1728 = vmatprep.subr.bf16.mxu0 0
  %1729 = vmatpush1.bf16.msra.mxu0 0
  %1730 = vmatprep.subr.bf16.mxu0 0
  %1731 = vmatpush1.bf16.msra.mxu0 0
  %1732 = vmatprep.subr.bf16.mxu0 0
  %1733 = vmatpush1.bf16.msra.mxu0 0
  %1734 = vmatprep.subr.bf16.mxu0 0
  %1735 = vmatpush1.bf16.msra.mxu0 %v1570
  %1736 = vmatprep.subr.bf16.mxu0 0
  %1737 = vmatpush1.bf16.msra.mxu0 %v1569
  %1738 = vmatprep.subr.bf16.mxu0 0
  %1739 = vmatpush2.bf16.msra.mxu0 0
  %1740 = vmatprep.subr.bf16.mxu0 0
  %1741 = vmatpush2.bf16.msra.mxu0 0
  %1742 = vmatprep.subr.bf16.mxu0 0
  %1743 = vmatpush2.bf16.msra.mxu0 0
  %1744 = vmatprep.subr.bf16.mxu0 0
  %1745 = vmatpush2.bf16.msra.mxu0 0
  %1746 = vmatprep.subr.bf16.mxu0 0
  %1747 = vmatpush2.bf16.msra.mxu0 0
  %1748 = vmatprep.subr.bf16.mxu0 0
  %1749 = vmatpush2.bf16.msra.mxu0 0
  %1750 = vmatprep.subr.bf16.mxu0 0
  %1751 = vmatpush2.bf16.msra.mxu0 0
  %1752 = vmatprep.subr.bf16.mxu0 0
  %1753 = vmatpush2.bf16.msra.mxu0 0
  %1754 = vmatprep.mubr.bf16.mxu0 0
  %1755 = vmatmul.mubr.bf16.gmra.mxu0 %v1720
  %v1756 = vpop.f32.mrf.mxu0
  %v1757 = vadd.f32 0.0, %v1756
  %v1758 = vpop.f32.mrf.mxu0
  %v1759 = vpop.f32.mrf.mxu0
  %v1760 = vpop.f32.mrf.mxu0
  %1761 = vdwg.mxu0
  %v1762 = vadd.f32 %v1544, %v1757
  %v1763 = vtanh.pop %v1762
  %v1764 = vxor.u32 %v1762, 2147483648
  %v1765 = vmul.f32 %v1764, 1.442695
  %v1766 = vpow.pop %v1765
  %v1767 = vadd.f32 %v1766, 1.0
  %v1768 = vrcp.pop %v1767
  %v1769 = vmul.f32 1.0, %v1768
  %v1770 = vsel %vm60, %v1763, %v1769
  %v1771 = vmul.f32 %v1770, %v1708
  %1773 = vrot.lane.b32.xlu0 %v1770, 64
  %v1774 = vpop.permute.xlu0 %1773
  %v1776 = vmul.f32 %v1770, %v1774
  %1778 = vrot.lane.b32.xlu0 %v1776, 32
  %v1779 = vpop.permute.xlu0 %1778
  %v1781 = vadd.f32 %v1771, %v1779
  %v1782 = vtanh.pop %v1781
  %1784 = vrot.lane.b32.xlu0 %v1782, 64
  %v1785 = vpop.permute.xlu0 %1784
  %v1787 = vmul.f32 %v1770, %v1785
  %v1788 = vpack.c.bf16 %v1787, %v1787
  %1790 = vrot.lane.b32.xlu0 %v1788, 32
  %v1791 = vpop.permute.xlu0 %1790
  %v1793 = vsel %vm179, %v1791, 0
  %1795 = vmatprep.subr.bf16.mxu0 0
  %1796 = vmatpush1.bf16.msra.mxu0 0
  %1797 = vmatprep.subr.bf16.mxu0 0
  %1798 = vmatpush1.bf16.msra.mxu0 0
  %1799 = vmatprep.subr.bf16.mxu0 0
  %1800 = vmatpush1.bf16.msra.mxu0 0
  %1801 = vmatprep.subr.bf16.mxu0 0
  %1802 = vmatpush1.bf16.msra.mxu0 0
  %1803 = vmatprep.subr.bf16.mxu0 0
  %1804 = vmatpush1.bf16.msra.mxu0 0
  %1805 = vmatprep.subr.bf16.mxu0 0
  %1806 = vmatpush1.bf16.msra.mxu0 0
  %1807 = vmatprep.subr.bf16.mxu0 0
  %1808 = vmatpush1.bf16.msra.mxu0 %v1570
  %1809 = vmatprep.subr.bf16.mxu0 0
  %1810 = vmatpush1.bf16.msra.mxu0 %v1569
  %1811 = vmatprep.subr.bf16.mxu0 0
  %1812 = vmatpush2.bf16.msra.mxu0 0
  %1813 = vmatprep.subr.bf16.mxu0 0
  %1814 = vmatpush2.bf16.msra.mxu0 0
  %1815 = vmatprep.subr.bf16.mxu0 0
  %1816 = vmatpush2.bf16.msra.mxu0 0
  %1817 = vmatprep.subr.bf16.mxu0 0
  %1818 = vmatpush2.bf16.msra.mxu0 0
  %1819 = vmatprep.subr.bf16.mxu0 0
  %1820 = vmatpush2.bf16.msra.mxu0 0
  %1821 = vmatprep.subr.bf16.mxu0 0
  %1822 = vmatpush2.bf16.msra.mxu0 0
  %1823 = vmatprep.subr.bf16.mxu0 0
  %1824 = vmatpush2.bf16.msra.mxu0 0
  %1825 = vmatprep.subr.bf16.mxu0 0
  %1826 = vmatpush2.bf16.msra.mxu0 0
  %1827 = vmatprep.mubr.bf16.mxu0 0
  %1828 = vmatmul.mubr.bf16.gmra.mxu0 %v1793
  %v1829 = vpop.f32.mrf.mxu0
  %v1830 = vadd.f32 0.0, %v1829
  %v1831 = vpop.f32.mrf.mxu0
  %v1832 = vpop.f32.mrf.mxu0
  %v1833 = vpop.f32.mrf.mxu0
  %1834 = vdwg.mxu0
  %v1835 = vadd.f32 %v1547, %v1830
  %v1836 = vtanh.pop %v1835
  %v1837 = vxor.u32 %v1835, 2147483648
  %v1838 = vmul.f32 %v1837, 1.442695
  %v1839 = vpow.pop %v1838
  %v1840 = vadd.f32 %v1839, 1.0
  %v1841 = vrcp.pop %v1840
  %v1842 = vmul.f32 1.0, %v1841
  %v1843 = vsel %vm60, %v1836, %v1842
  %v1844 = vmul.f32 %v1843, %v1781
  %1846 = vrot.lane.b32.xlu0 %v1843, 64
  %v1847 = vpop.permute.xlu0 %1846
  %v1849 = vmul.f32 %v1843, %v1847
  %1851 = vrot.lane.b32.xlu0 %v1849, 32
  %v1852 = vpop.permute.xlu0 %1851
  %v1854 = vadd.f32 %v1844, %v1852
  %v1855 = vtanh.pop %v1854
  %1857 = vrot.lane.b32.xlu0 %v1855, 64
  %v1858 = vpop.permute.xlu0 %1857
  %v1860 = vmul.f32 %v1843, %v1858
  %v1861 = vpack.c.bf16 %v1860, %v1860
  %1863 = vrot.lane.b32.xlu0 %v1861, 32
  %v1864 = vpop.permute.xlu0 %1863
  %v1866 = vsel %vm179, %v1864, 0
  %1868 = vmatprep.subr.bf16.mxu0 0
  %1869 = vmatpush1.bf16.msra.mxu0 0
  %1870 = vmatprep.subr.bf16.mxu0 0
  %1871 = vmatpush1.bf16.msra.mxu0 0
  %1872 = vmatprep.subr.bf16.mxu0 0
  %1873 = vmatpush1.bf16.msra.mxu0 0
  %1874 = vmatprep.subr.bf16.mxu0 0
  %1875 = vmatpush1.bf16.msra.mxu0 0
  %1876 = vmatprep.subr.bf16.mxu0 0
  %1877 = vmatpush1.bf16.msra.mxu0 0
  %1878 = vmatprep.subr.bf16.mxu0 0
  %1879 = vmatpush1.bf16.msra.mxu0 0
  %1880 = vmatprep.subr.bf16.mxu0 0
  %1881 = vmatpush1.bf16.msra.mxu0 %v1570
  %1882 = vmatprep.subr.bf16.mxu0 0
  %1883 = vmatpush1.bf16.msra.mxu0 %v1569
  %1884 = vmatprep.subr.bf16.mxu0 0
  %1885 = vmatpush2.bf16.msra.mxu0 0
  %1886 = vmatprep.subr.bf16.mxu0 0
  %1887 = vmatpush2.bf16.msra.mxu0 0
  %1888 = vmatprep.subr.bf16.mxu0 0
  %1889 = vmatpush2.bf16.msra.mxu0 0
  %1890 = vmatprep.subr.bf16.mxu0 0
  %1891 = vmatpush2.bf16.msra.mxu0 0
  %1892 = vmatprep.subr.bf16.mxu0 0
  %1893 = vmatpush2.bf16.msra.mxu0 0
  %1894 = vmatprep.subr.bf16.mxu0 0
  %1895 = vmatpush2.bf16.msra.mxu0 0
  %1896 = vmatprep.subr.bf16.mxu0 0
  %1897 = vmatpush2.bf16.msra.mxu0 0
  %1898 = vmatprep.subr.bf16.mxu0 0
  %1899 = vmatpush2.bf16.msra.mxu0 0
  %1900 = vmatprep.mubr.bf16.mxu0 0
  %1901 = vmatmul.mubr.bf16.gmra.mxu0 %v1866
  %v1902 = vpop.f32.mrf.mxu0
  %v1903 = vadd.f32 0.0, %v1902
  %v1904 = vpop.f32.mrf.mxu0
  %v1905 = vpop.f32.mrf.mxu0
  %v1906 = vpop.f32.mrf.mxu0
  %1907 = vdwg.mxu0
  %v1908 = vadd.f32 %v1552, %v1903
  %v1909 = vtanh.pop %v1908
  %v1910 = vxor.u32 %v1908, 2147483648
  %v1911 = vmul.f32 %v1910, 1.442695
  %v1912 = vpow.pop %v1911
  %v1913 = vadd.f32 %v1912, 1.0
  %v1914 = vrcp.pop %v1913
  %v1915 = vmul.f32 1.0, %v1914
  %v1916 = vsel %vm60, %v1909, %v1915
  %v1917 = vmul.f32 %v1916, %v1854
  %1919 = vrot.lane.b32.xlu0 %v1916, 64
  %v1920 = vpop.permute.xlu0 %1919
  %v1922 = vmul.f32 %v1916, %v1920
  %1924 = vrot.lane.b32.xlu0 %v1922, 32
  %v1925 = vpop.permute.xlu0 %1924
  %v1927 = vadd.f32 %v1917, %v1925
  %v1928 = vtanh.pop %v1927
  %1930 = vrot.lane.b32.xlu0 %v1928, 64
  %v1931 = vpop.permute.xlu0 %1930
  %v1933 = vmul.f32 %v1916, %v1931
  %v1934 = vld [vmem:[%s11] sm:$0xf]
  %v1935 = vld [vmem:[%s11 + $0x4] sm:$0xf]
  %v1936 = vld [vmem:[%s11 + $0x8] sm:$0xf]
  %v1937 = vld [vmem:[%s11 + $0xc] sm:$0xf]
  %v1938 = vld [vmem:[%s12] sm:$0xf]
  %v1939 = vld [vmem:[%s12 + $0x4] sm:$0xf]
  %v1940 = vld [vmem:[%s12 + $0x8] sm:$0xf]
  %v1941 = vld [vmem:[%s12 + $0xc] sm:$0xf]
  %v1942 = vld [vmem:[%s13] sm:$0x1]
  %v1943 = vpack.c.bf16 %v1714, %v1641
  %v1944 = vpack.c.bf16 %v1860, %v1787
  %v1945 = vpack.c.bf16 %v1933, %v1933
  %v1947 = vlaneseq
  %v1948 = vshrl.u32 %v1947, 7
  %v1949 = vsub.s32 0, %v1948
  %v1950 = vrot.slane %v1942, %v1949
  %1955 = vrot.lane.b32.xlu0 %v1943, 32
  %v1956 = vpop.permute.xlu0 %1955
  %1957 = vrot.lane.b32.xlu0 %v1944, 32
  %v1958 = vpop.permute.xlu0 %1957
  %1959 = vrot.lane.b32.xlu0 %v1945, 32
  %v1960 = vpop.permute.xlu0 %1959
  %v1965 = vunpack.c.l.b16 %v1934
  %v1966 = vunpack.c.l.b16 %v1935
  %v1967 = vunpack.c.l.b16 %v1936
  %v1968 = vunpack.c.l.b16 %v1937
  %v1969 = vpack.c.b16 %v1966, %v1965
  %v1970 = vpack.c.b16 %v1968, %v1967
  %v1974 = vsel %vm179, %v1956, 0
  %v1977 = vsel %vm179, %v1958, 0
  %v1980 = vsel %vm179, %v1960, 0
  %1982 = vmatprep.subr.bf16.mxu0 0
  %1983 = vmatpush1.bf16.msra.mxu0 0
  %1984 = vmatprep.subr.bf16.mxu0 0
  %1985 = vmatpush1.bf16.msra.mxu0 0
  %1986 = vmatprep.subr.bf16.mxu0 0
  %1987 = vmatpush1.bf16.msra.mxu0 0
  %1988 = vmatprep.subr.bf16.mxu0 0
  %1989 = vmatpush1.bf16.msra.mxu0 0
  %1990 = vmatprep.subr.bf16.mxu0 0
  %1991 = vmatpush1.bf16.msra.mxu0 0
  %1992 = vmatprep.subr.bf16.mxu0 0
  %1993 = vmatpush1.bf16.msra.mxu0 0
  %1994 = vmatprep.subr.bf16.mxu0 0
  %1995 = vmatpush1.bf16.msra.mxu0 %v1970
  %1996 = vmatprep.subr.bf16.mxu0 0
  %1997 = vmatpush1.bf16.msra.mxu0 %v1969
  %1998 = vmatprep.subr.bf16.mxu0 0
  %1999 = vmatpush2.bf16.msra.mxu0 0
  %2000 = vmatprep.subr.bf16.mxu0 0
  %2001 = vmatpush2.bf16.msra.mxu0 0
  %2002 = vmatprep.subr.bf16.mxu0 0
  %2003 = vmatpush2.bf16.msra.mxu0 0
  %2004 = vmatprep.subr.bf16.mxu0 0
  %2005 = vmatpush2.bf16.msra.mxu0 0
  %2006 = vmatprep.subr.bf16.mxu0 0
  %2007 = vmatpush2.bf16.msra.mxu0 0
  %2008 = vmatprep.subr.bf16.mxu0 0
  %2009 = vmatpush2.bf16.msra.mxu0 0
  %2010 = vmatprep.subr.bf16.mxu0 0
  %2011 = vmatpush2.bf16.msra.mxu0 0
  %2012 = vmatprep.subr.bf16.mxu0 0
  %2013 = vmatpush2.bf16.msra.mxu0 0
  %2014 = vmatprep.mubr.bf16.mxu0 0
  %2015 = vmatmul.mubr.bf16.gmra.mxu0 %v1974
  %v2016 = vpop.f32.mrf.mxu0
  %v2017 = vadd.f32 %v1950, %v2016
  %v2018 = vpop.f32.mrf.mxu0
  %v2019 = vpop.f32.mrf.mxu0
  %v2020 = vadd.f32 %v1950, %v2019
  %v2021 = vpop.f32.mrf.mxu0
  %2022 = vmatprep.mubr.bf16.mxu0 0
  %2023 = vmatmul.mubr.bf16.gmra.mxu0 %v1977
  %v2024 = vpop.f32.mrf.mxu0
  %v2025 = vadd.f32 %v1950, %v2024
  %v2026 = vpop.f32.mrf.mxu0
  %v2027 = vpop.f32.mrf.mxu0
  %v2028 = vadd.f32 %v1950, %v2027
  %v2029 = vpop.f32.mrf.mxu0
  %2030 = vmatprep.mubr.bf16.mxu0 0
  %2031 = vmatmul.mubr.bf16.gmra.mxu0 %v1980
  %v2032 = vpop.f32.mrf.mxu0
  %v2033 = vadd.f32 %v1950, %v2032
  %v2034 = vpop.f32.mrf.mxu0
  %v2035 = vpop.f32.mrf.mxu0
  %v2036 = vpop.f32.mrf.mxu0
  %2037 = vdwg.mxu0
  %v2038 = vpack.c.bf16 %v1468, %v1468
  %2040 = vrot.lane.b32.xlu0 %v2038, 32
  %v2041 = vpop.permute.xlu0 %2040
  %v2046 = vunpack.c.l.b16 %v1938
  %v2047 = vunpack.c.l.b16 %v1939
  %v2048 = vunpack.c.l.b16 %v1940
  %v2049 = vunpack.c.l.b16 %v1941
  %v2050 = vpack.c.b16 %v2047, %v2046
  %v2051 = vpack.c.b16 %v2049, %v2048
  %v2055 = vsel %vm179, %v2041, 0
  %2057 = vmatprep.subr.bf16.mxu0 0
  %2058 = vmatpush1.bf16.msra.mxu0 0
  %2059 = vmatprep.subr.bf16.mxu0 0
  %2060 = vmatpush1.bf16.msra.mxu0 0
  %2061 = vmatprep.subr.bf16.mxu0 0
  %2062 = vmatpush1.bf16.msra.mxu0 0
  %2063 = vmatprep.subr.bf16.mxu0 0
  %2064 = vmatpush1.bf16.msra.mxu0 0
  %2065 = vmatprep.subr.bf16.mxu0 0
  %2066 = vmatpush1.bf16.msra.mxu0 0
  %2067 = vmatprep.subr.bf16.mxu0 0
  %2068 = vmatpush1.bf16.msra.mxu0 0
  %2069 = vmatprep.subr.bf16.mxu0 0
  %2070 = vmatpush1.bf16.msra.mxu0 %v2051
  %2071 = vmatprep.subr.bf16.mxu0 0
  %2072 = vmatpush1.bf16.msra.mxu0 %v2050
  %2073 = vmatprep.subr.bf16.mxu0 0
  %2074 = vmatpush2.bf16.msra.mxu0 0
  %2075 = vmatprep.subr.bf16.mxu0 0
  %2076 = vmatpush2.bf16.msra.mxu0 0
  %2077 = vmatprep.subr.bf16.mxu0 0
  %2078 = vmatpush2.bf16.msra.mxu0 0
  %2079 = vmatprep.subr.bf16.mxu0 0
  %2080 = vmatpush2.bf16.msra.mxu0 0
  %2081 = vmatprep.subr.bf16.mxu0 0
  %2082 = vmatpush2.bf16.msra.mxu0 0
  %2083 = vmatprep.subr.bf16.mxu0 0
  %2084 = vmatpush2.bf16.msra.mxu0 0
  %2085 = vmatprep.subr.bf16.mxu0 0
  %2086 = vmatpush2.bf16.msra.mxu0 0
  %2087 = vmatprep.subr.bf16.mxu0 0
  %2088 = vmatpush2.bf16.msra.mxu0 0
  %2089 = vmatprep.mubr.bf16.mxu0 0
  %2090 = vmatmul.mubr.bf16.gmra.mxu0 %v2055
  %v2091 = vpop.f32.mrf.mxu0
  %v2092 = vadd.f32 0.0, %v2091
  %v2093 = vpop.f32.mrf.mxu0
  %v2094 = vpop.f32.mrf.mxu0
  %v2095 = vpop.f32.mrf.mxu0
  %2096 = vdwg.mxu0
  %v2097 = vadd.f32 %v2017, %v2092
  %v2098 = vtanh.pop %v2097
  %v2099 = vxor.u32 %v2097, 2147483648
  %v2100 = vmul.f32 %v2099, 1.442695
  %v2101 = vpow.pop %v2100
  %v2102 = vadd.f32 %v2101, 1.0
  %v2103 = vrcp.pop %v2102
  %v2104 = vmul.f32 1.0, %v2103
  %v2105 = vsel %vm60, %v2098, %v2104
  %v2106 = vmul.f32 %v2105, %v1462
  %2108 = vrot.lane.b32.xlu0 %v2105, 64
  %v2109 = vpop.permute.xlu0 %2108
  %v2111 = vmul.f32 %v2105, %v2109
  %2113 = vrot.lane.b32.xlu0 %v2111, 32
  %v2114 = vpop.permute.xlu0 %2113
  %v2116 = vadd.f32 %v2106, %v2114
  %v2117 = vtanh.pop %v2116
  %2119 = vrot.lane.b32.xlu0 %v2117, 64
  %v2120 = vpop.permute.xlu0 %2119
  %v2122 = vmul.f32 %v2105, %v2120
  %v2123 = vpack.c.bf16 %v2122, %v2122
  %2125 = vrot.lane.b32.xlu0 %v2123, 32
  %v2126 = vpop.permute.xlu0 %2125
  %v2128 = vsel %vm179, %v2126, 0
  %2130 = vmatprep.subr.bf16.mxu0 0
  %2131 = vmatpush1.bf16.msra.mxu0 0
  %2132 = vmatprep.subr.bf16.mxu0 0
  %2133 = vmatpush1.bf16.msra.mxu0 0
  %2134 = vmatprep.subr.bf16.mxu0 0
  %2135 = vmatpush1.bf16.msra.mxu0 0
  %2136 = vmatprep.subr.bf16.mxu0 0
  %2137 = vmatpush1.bf16.msra.mxu0 0
  %2138 = vmatprep.subr.bf16.mxu0 0
  %2139 = vmatpush1.bf16.msra.mxu0 0
  %2140 = vmatprep.subr.bf16.mxu0 0
  %2141 = vmatpush1.bf16.msra.mxu0 0
  %2142 = vmatprep.subr.bf16.mxu0 0
  %2143 = vmatpush1.bf16.msra.mxu0 %v2051
  %2144 = vmatprep.subr.bf16.mxu0 0
  %2145 = vmatpush1.bf16.msra.mxu0 %v2050
  %2146 = vmatprep.subr.bf16.mxu0 0
  %2147 = vmatpush2.bf16.msra.mxu0 0
  %2148 = vmatprep.subr.bf16.mxu0 0
  %2149 = vmatpush2.bf16.msra.mxu0 0
  %2150 = vmatprep.subr.bf16.mxu0 0
  %2151 = vmatpush2.bf16.msra.mxu0 0
  %2152 = vmatprep.subr.bf16.mxu0 0
  %2153 = vmatpush2.bf16.msra.mxu0 0
  %2154 = vmatprep.subr.bf16.mxu0 0
  %2155 = vmatpush2.bf16.msra.mxu0 0
  %2156 = vmatprep.subr.bf16.mxu0 0
  %2157 = vmatpush2.bf16.msra.mxu0 0
  %2158 = vmatprep.subr.bf16.mxu0 0
  %2159 = vmatpush2.bf16.msra.mxu0 0
  %2160 = vmatprep.subr.bf16.mxu0 0
  %2161 = vmatpush2.bf16.msra.mxu0 0
  %2162 = vmatprep.mubr.bf16.mxu0 0
  %2163 = vmatmul.mubr.bf16.gmra.mxu0 %v2128
  %v2164 = vpop.f32.mrf.mxu0
  %v2165 = vadd.f32 0.0, %v2164
  %v2166 = vpop.f32.mrf.mxu0
  %v2167 = vpop.f32.mrf.mxu0
  %v2168 = vpop.f32.mrf.mxu0
  %2169 = vdwg.mxu0
  %v2170 = vadd.f32 %v2020, %v2165
  %v2171 = vtanh.pop %v2170
  %v2172 = vxor.u32 %v2170, 2147483648
  %v2173 = vmul.f32 %v2172, 1.442695
  %v2174 = vpow.pop %v2173
  %v2175 = vadd.f32 %v2174, 1.0
  %v2176 = vrcp.pop %v2175
  %v2177 = vmul.f32 1.0, %v2176
  %v2178 = vsel %vm60, %v2171, %v2177
  %v2179 = vmul.f32 %v2178, %v2116
  %2181 = vrot.lane.b32.xlu0 %v2178, 64
  %v2182 = vpop.permute.xlu0 %2181
  %v2184 = vmul.f32 %v2178, %v2182
  %2186 = vrot.lane.b32.xlu0 %v2184, 32
  %v2187 = vpop.permute.xlu0 %2186
  %v2189 = vadd.f32 %v2179, %v2187
  %v2190 = vtanh.pop %v2189
  %2192 = vrot.lane.b32.xlu0 %v2190, 64
  %v2193 = vpop.permute.xlu0 %2192
  %v2195 = vmul.f32 %v2178, %v2193
  %v2196 = vpack.c.bf16 %v2195, %v2195
  %2198 = vrot.lane.b32.xlu0 %v2196, 32
  %v2199 = vpop.permute.xlu0 %2198
  %v2201 = vsel %vm179, %v2199, 0
  %2203 = vmatprep.subr.bf16.mxu0 0
  %2204 = vmatpush1.bf16.msra.mxu0 0
  %2205 = vmatprep.subr.bf16.mxu0 0
  %2206 = vmatpush1.bf16.msra.mxu0 0
  %2207 = vmatprep.subr.bf16.mxu0 0
  %2208 = vmatpush1.bf16.msra.mxu0 0
  %2209 = vmatprep.subr.bf16.mxu0 0
  %2210 = vmatpush1.bf16.msra.mxu0 0
  %2211 = vmatprep.subr.bf16.mxu0 0
  %2212 = vmatpush1.bf16.msra.mxu0 0
  %2213 = vmatprep.subr.bf16.mxu0 0
  %2214 = vmatpush1.bf16.msra.mxu0 0
  %2215 = vmatprep.subr.bf16.mxu0 0
  %2216 = vmatpush1.bf16.msra.mxu0 %v2051
  %2217 = vmatprep.subr.bf16.mxu0 0
  %2218 = vmatpush1.bf16.msra.mxu0 %v2050
  %2219 = vmatprep.subr.bf16.mxu0 0
  %2220 = vmatpush2.bf16.msra.mxu0 0
  %2221 = vmatprep.subr.bf16.mxu0 0
  %2222 = vmatpush2.bf16.msra.mxu0 0
  %2223 = vmatprep.subr.bf16.mxu0 0
  %2224 = vmatpush2.bf16.msra.mxu0 0
  %2225 = vmatprep.subr.bf16.mxu0 0
  %2226 = vmatpush2.bf16.msra.mxu0 0
  %2227 = vmatprep.subr.bf16.mxu0 0
  %2228 = vmatpush2.bf16.msra.mxu0 0
  %2229 = vmatprep.subr.bf16.mxu0 0
  %2230 = vmatpush2.bf16.msra.mxu0 0
  %2231 = vmatprep.subr.bf16.mxu0 0
  %2232 = vmatpush2.bf16.msra.mxu0 0
  %2233 = vmatprep.subr.bf16.mxu0 0
  %2234 = vmatpush2.bf16.msra.mxu0 0
  %2235 = vmatprep.mubr.bf16.mxu0 0
  %2236 = vmatmul.mubr.bf16.gmra.mxu0 %v2201
  %v2237 = vpop.f32.mrf.mxu0
  %v2238 = vadd.f32 0.0, %v2237
  %v2239 = vpop.f32.mrf.mxu0
  %v2240 = vpop.f32.mrf.mxu0
  %v2241 = vpop.f32.mrf.mxu0
  %2242 = vdwg.mxu0
  %v2243 = vadd.f32 %v2025, %v2238
  %v2244 = vtanh.pop %v2243
  %v2245 = vxor.u32 %v2243, 2147483648
  %v2246 = vmul.f32 %v2245, 1.442695
  %v2247 = vpow.pop %v2246
  %v2248 = vadd.f32 %v2247, 1.0
  %v2249 = vrcp.pop %v2248
  %v2250 = vmul.f32 1.0, %v2249
  %v2251 = vsel %vm60, %v2244, %v2250
  %v2252 = vmul.f32 %v2251, %v2189
  %2254 = vrot.lane.b32.xlu0 %v2251, 64
  %v2255 = vpop.permute.xlu0 %2254
  %v2257 = vmul.f32 %v2251, %v2255
  %2259 = vrot.lane.b32.xlu0 %v2257, 32
  %v2260 = vpop.permute.xlu0 %2259
  %v2262 = vadd.f32 %v2252, %v2260
  %v2263 = vtanh.pop %v2262
  %2265 = vrot.lane.b32.xlu0 %v2263, 64
  %v2266 = vpop.permute.xlu0 %2265
  %v2268 = vmul.f32 %v2251, %v2266
  %v2269 = vpack.c.bf16 %v2268, %v2268
  %2271 = vrot.lane.b32.xlu0 %v2269, 32
  %v2272 = vpop.permute.xlu0 %2271
  %v2274 = vsel %vm179, %v2272, 0
  %2276 = vmatprep.subr.bf16.mxu0 0
  %2277 = vmatpush1.bf16.msra.mxu0 0
  %2278 = vmatprep.subr.bf16.mxu0 0
  %2279 = vmatpush1.bf16.msra.mxu0 0
  %2280 = vmatprep.subr.bf16.mxu0 0
  %2281 = vmatpush1.bf16.msra.mxu0 0
  %2282 = vmatprep.subr.bf16.mxu0 0
  %2283 = vmatpush1.bf16.msra.mxu0 0
  %2284 = vmatprep.subr.bf16.mxu0 0
  %2285 = vmatpush1.bf16.msra.mxu0 0
  %2286 = vmatprep.subr.bf16.mxu0 0
  %2287 = vmatpush1.bf16.msra.mxu0 0
  %2288 = vmatprep.subr.bf16.mxu0 0
  %2289 = vmatpush1.bf16.msra.mxu0 %v2051
  %2290 = vmatprep.subr.bf16.mxu0 0
  %2291 = vmatpush1.bf16.msra.mxu0 %v2050
  %2292 = vmatprep.subr.bf16.mxu0 0
  %2293 = vmatpush2.bf16.msra.mxu0 0
  %2294 = vmatprep.subr.bf16.mxu0 0
  %2295 = vmatpush2.bf16.msra.mxu0 0
  %2296 = vmatprep.subr.bf16.mxu0 0
  %2297 = vmatpush2.bf16.msra.mxu0 0
  %2298 = vmatprep.subr.bf16.mxu0 0
  %2299 = vmatpush2.bf16.msra.mxu0 0
  %2300 = vmatprep.subr.bf16.mxu0 0
  %2301 = vmatpush2.bf16.msra.mxu0 0
  %2302 = vmatprep.subr.bf16.mxu0 0
  %2303 = vmatpush2.bf16.msra.mxu0 0
  %2304 = vmatprep.subr.bf16.mxu0 0
  %2305 = vmatpush2.bf16.msra.mxu0 0
  %2306 = vmatprep.subr.bf16.mxu0 0
  %2307 = vmatpush2.bf16.msra.mxu0 0
  %2308 = vmatprep.mubr.bf16.mxu0 0
  %2309 = vmatmul.mubr.bf16.gmra.mxu0 %v2274
  %v2310 = vpop.f32.mrf.mxu0
  %v2311 = vadd.f32 0.0, %v2310
  %v2312 = vpop.f32.mrf.mxu0
  %v2313 = vpop.f32.mrf.mxu0
  %v2314 = vpop.f32.mrf.mxu0
  %2315 = vdwg.mxu0
  %v2316 = vadd.f32 %v2028, %v2311
  %v2317 = vtanh.pop %v2316
  %v2318 = vxor.u32 %v2316, 2147483648
  %v2319 = vmul.f32 %v2318, 1.442695
  %v2320 = vpow.pop %v2319
  %v2321 = vadd.f32 %v2320, 1.0
  %v2322 = vrcp.pop %v2321
  %v2323 = vmul.f32 1.0, %v2322
  %v2324 = vsel %vm60, %v2317, %v2323
  %v2325 = vmul.f32 %v2324, %v2262
  %2327 = vrot.lane.b32.xlu0 %v2324, 64
  %v2328 = vpop.permute.xlu0 %2327
  %v2330 = vmul.f32 %v2324, %v2328
  %2332 = vrot.lane.b32.xlu0 %v2330, 32
  %v2333 = vpop.permute.xlu0 %2332
  %v2335 = vadd.f32 %v2325, %v2333
  %v2336 = vtanh.pop %v2335
  %2338 = vrot.lane.b32.xlu0 %v2336, 64
  %v2339 = vpop.permute.xlu0 %2338
  %v2341 = vmul.f32 %v2324, %v2339
  %v2342 = vpack.c.bf16 %v2341, %v2341
  %2344 = vrot.lane.b32.xlu0 %v2342, 32
  %v2345 = vpop.permute.xlu0 %2344
  %v2347 = vsel %vm179, %v2345, 0
  %2349 = vmatprep.subr.bf16.mxu0 0
  %2350 = vmatpush1.bf16.msra.mxu0 0
  %2351 = vmatprep.subr.bf16.mxu0 0
  %2352 = vmatpush1.bf16.msra.mxu0 0
  %2353 = vmatprep.subr.bf16.mxu0 0
  %2354 = vmatpush1.bf16.msra.mxu0 0
  %2355 = vmatprep.subr.bf16.mxu0 0
  %2356 = vmatpush1.bf16.msra.mxu0 0
  %2357 = vmatprep.subr.bf16.mxu0 0
  %2358 = vmatpush1.bf16.msra.mxu0 0
  %2359 = vmatprep.subr.bf16.mxu0 0
  %2360 = vmatpush1.bf16.msra.mxu0 0
  %2361 = vmatprep.subr.bf16.mxu0 0
  %2362 = vmatpush1.bf16.msra.mxu0 %v2051
  %2363 = vmatprep.subr.bf16.mxu0 0
  %2364 = vmatpush1.bf16.msra.mxu0 %v2050
  %2365 = vmatprep.subr.bf16.mxu0 0
  %2366 = vmatpush2.bf16.msra.mxu0 0
  %2367 = vmatprep.subr.bf16.mxu0 0
  %2368 = vmatpush2.bf16.msra.mxu0 0
  %2369 = vmatprep.subr.bf16.mxu0 0
  %2370 = vmatpush2.bf16.msra.mxu0 0
  %2371 = vmatprep.subr.bf16.mxu0 0
  %2372 = vmatpush2.bf16.msra.mxu0 0
  %2373 = vmatprep.subr.bf16.mxu0 0
  %2374 = vmatpush2.bf16.msra.mxu0 0
  %2375 = vmatprep.subr.bf16.mxu0 0
  %2376 = vmatpush2.bf16.msra.mxu0 0
  %2377 = vmatprep.subr.bf16.mxu0 0
  %2378 = vmatpush2.bf16.msra.mxu0 0
  %2379 = vmatprep.subr.bf16.mxu0 0
  %2380 = vmatpush2.bf16.msra.mxu0 0
  %2381 = vmatprep.mubr.bf16.mxu0 0
  %2382 = vmatmul.mubr.bf16.gmra.mxu0 %v2347
  %v2383 = vpop.f32.mrf.mxu0
  %v2384 = vadd.f32 0.0, %v2383
  %v2385 = vpop.f32.mrf.mxu0
  %v2386 = vpop.f32.mrf.mxu0
  %v2387 = vpop.f32.mrf.mxu0
  %2388 = vdwg.mxu0
  %v2389 = vadd.f32 %v2033, %v2384
  %v2390 = vtanh.pop %v2389
  %v2391 = vxor.u32 %v2389, 2147483648
  %v2392 = vmul.f32 %v2391, 1.442695
  %v2393 = vpow.pop %v2392
  %v2394 = vadd.f32 %v2393, 1.0
  %v2395 = vrcp.pop %v2394
  %v2396 = vmul.f32 1.0, %v2395
  %v2397 = vsel %vm60, %v2390, %v2396
  %v2398 = vmul.f32 %v2397, %v2335
  %2400 = vrot.lane.b32.xlu0 %v2397, 64
  %v2401 = vpop.permute.xlu0 %2400
  %v2403 = vmul.f32 %v2397, %v2401
  %2405 = vrot.lane.b32.xlu0 %v2403, 32
  %v2406 = vpop.permute.xlu0 %2405
  %v2408 = vadd.f32 %v2398, %v2406
  %v2409 = vtanh.pop %v2408
  %2411 = vrot.lane.b32.xlu0 %v2409, 64
  %v2412 = vpop.permute.xlu0 %2411
  %v2414 = vmul.f32 %v2397, %v2412
  %v2415 = vpack.c.bf16 %v2414, %v2414
  %v2416 = vld [vmem:[%s14] sm:$0xf]
  %v2417 = vld [vmem:[%s14 + $0x4] sm:$0xf]
  %v2418 = vld [vmem:[%s14 + $0x8] sm:$0xf]
  %v2419 = vld [vmem:[%s14 + $0xc] sm:$0xf]
  %v2420 = vld [vmem:[#allocation2] sm:$0x1]
  %v2422 = vlaneseq
  %v2423 = vshrl.u32 %v2422, 7
  %v2424 = vsub.s32 0, %v2423
  %v2425 = vrot.slane %v2420, %v2424
  %2428 = vrot.lane.b32.xlu0 %v2415, 32
  %v2429 = vpop.permute.xlu0 %2428
  %v2434 = vunpack.c.l.b16 %v2416
  %v2435 = vunpack.c.l.b16 %v2417
  %v2436 = vunpack.c.l.b16 %v2418
  %v2437 = vunpack.c.l.b16 %v2419
  %v2438 = vpack.c.b16 %v2435, %v2434
  %v2439 = vpack.c.b16 %v2437, %v2436
  %v2443 = vsel %vm179, %v2429, 0
  %2445 = vmatprep.subr.bf16.mxu0 0
  %2446 = vmatpush1.bf16.msra.mxu0 0
  %2447 = vmatprep.subr.bf16.mxu0 0
  %2448 = vmatpush1.bf16.msra.mxu0 0
  %2449 = vmatprep.subr.bf16.mxu0 0
  %2450 = vmatpush1.bf16.msra.mxu0 0
  %2451 = vmatprep.subr.bf16.mxu0 0
  %2452 = vmatpush1.bf16.msra.mxu0 0
  %2453 = vmatprep.subr.bf16.mxu0 0
  %2454 = vmatpush1.bf16.msra.mxu0 0
  %2455 = vmatprep.subr.bf16.mxu0 0
  %2456 = vmatpush1.bf16.msra.mxu0 0
  %2457 = vmatprep.subr.bf16.mxu0 0
  %2458 = vmatpush1.bf16.msra.mxu0 %v2439
  %2459 = vmatprep.subr.bf16.mxu0 0
  %2460 = vmatpush1.bf16.msra.mxu0 %v2438
  %2461 = vmatprep.subr.bf16.mxu0 0
  %2462 = vmatpush2.bf16.msra.mxu0 0
  %2463 = vmatprep.subr.bf16.mxu0 0
  %2464 = vmatpush2.bf16.msra.mxu0 0
  %2465 = vmatprep.subr.bf16.mxu0 0
  %2466 = vmatpush2.bf16.msra.mxu0 0
  %2467 = vmatprep.subr.bf16.mxu0 0
  %2468 = vmatpush2.bf16.msra.mxu0 0
  %2469 = vmatprep.subr.bf16.mxu0 0
  %2470 = vmatpush2.bf16.msra.mxu0 0
  %2471 = vmatprep.subr.bf16.mxu0 0
  %2472 = vmatpush2.bf16.msra.mxu0 0
  %2473 = vmatprep.subr.bf16.mxu0 0
  %2474 = vmatpush2.bf16.msra.mxu0 0
  %2475 = vmatprep.subr.bf16.mxu0 0
  %2476 = vmatpush2.bf16.msra.mxu0 0
  %2477 = vmatprep.mubr.bf16.mxu0 0
  %2478 = vmatmul.mubr.bf16.gmra.mxu0 %v2443
  %v2479 = vpop.f32.mrf.mxu0
  %v2480 = vadd.f32 %v2425, %v2479
  %v2481 = vpop.f32.mrf.mxu0
  %v2482 = vpop.f32.mrf.mxu0
  %v2483 = vpop.f32.mrf.mxu0
  %2484 = vdwg.mxu0
  %vm2485 = vcmask 7168
  %2486 = vst.msk [vmem:[%s16] sm:$0xff] %vm2485, %v2480
  // Predicated region
  $region66: #{lstm_model_forward.1} parent=0 // pred_check
    _
  $region67: #{lstm_model_forward.1} parent=0 // pred_check_branch
    %2488 = sbr.rel (0) target = $region69
  $region68: #{lstm_model_forward.1} parent=0 // pred_region
    _
  $region69: #{lstm_model_forward.1} parent=0 // pred_fallthru
    _
  // Predicated region
  $region70: #{lstm_model_forward.1} parent=0 // pred_check
    _
  $region71: #{lstm_model_forward.1} parent=0 // pred_check_branch
    %2490 = sbr.rel (0) target = $region73
  $region72: #{lstm_model_forward.1} parent=0 // pred_region
    _
  $region73: #{lstm_model_forward.1} parent=0 // pred_fallthru
    _

</llo_original>
